<compile_context>
chip_gen: v5e
topology: v5e:2x2
jax: 0.10.0
libtpu: 0.0.40
codegen_flags: <defaults>
</compile_context>

<pallas_src>
import jax
import jax.numpy as jnp
from jax.experimental import pallas as pl
from jax.experimental.pallas import tpu as pltpu

LANE = 128
NEG_INF = -1e30   # keep finite: -inf would give inf-inf = NaN in the online-softmax correction


def _round_up(v, m):
    return (v + m - 1) // m * m


# --------------------------- Stage 1: H = X @ W1 ------------------------------
def linear_kernel(x_ref, w_ref, o_ref):
    o_ref[...] = jnp.dot(
        x_ref[...], w_ref[...], preferred_element_type=jnp.float32
    ).astype(o_ref.dtype)


# ------------------ Stage 2: fused SuperGAT attention + head ------------------
def supergat_attn_kernel(tmask_ref, cnt_ref, hi_ref, hk_ref, al_ref, ar_ref,
                         b1_ref, w2_ref, b2_ref, o_ref,
                         m_sc, l_sc, acc_sc):
    i = pl.program_id(0)
    k = pl.program_id(1)
    nk = pl.num_programs(1)

    @pl.when(k == 0)
    def _():
        m_sc[...] = jnp.full_like(m_sc, NEG_INF)
        l_sc[...] = jnp.zeros_like(l_sc)
        acc_sc[...] = jnp.zeros_like(acc_sc)

    # Skip compute entirely for (row-tile, source-tile) pairs with no edges.
    @pl.when(tmask_ref[i * nk + k] != 0)
    def _():
        hi = hi_ref[...]                              # [bm, C] bf16 (targets i)
        hk = hk_ref[...]                              # [bk, C] bf16 (sources j)
        counts = cnt_ref[...].astype(jnp.float32)     # [bm, bk] edge multiplicity

        # MX attention logits: e[i, j] = h_i . h_j  (contract feature dim, no
        # explicit transpose of hk).
        logits = jax.lax.dot_general(
            hi, hk, (((1,), (1,)), ((), ())),
            preferred_element_type=jnp.float32)
        sig = jax.nn.sigmoid(logits)                  # single EUP logistic

        # (h_j.att_l + h_i.att_r) * sigmoid(e), leaky_relu(0.2), edge masking.
        a = (ar_ref[...] + al_ref[...]) * sig         # [bm,1] + [1,bk] broadcast
        a = jnp.maximum(a, 0.2 * a)                   # leaky_relu(0.2)
        a = jnp.where(counts > 0, a, NEG_INF)         # softmax only over real edges

        # Online (flash-style) softmax weighted by edge multiplicity — matches
        # PyG scatter softmax with duplicate edges counted.
        m_new = jnp.maximum(m_sc[...], jnp.max(a, axis=-1, keepdims=True))
        corr = jnp.exp(m_sc[...] - m_new)
        p = jnp.exp(a - m_new) * counts
        l_sc[...] = corr * l_sc[...] + jnp.sum(p, axis=-1, keepdims=True)
        acc_sc[...] = corr * acc_sc[...] + jnp.dot(
            p.astype(hk.dtype), hk, preferred_element_type=jnp.float32)
        m_sc[...] = m_new

    @pl.when(k == nk - 1)
    def _():
        # Padded / isolated rows have l == 0; route them through 1.0 so no NaN
        # ever forms (their output rows are sliced off by the wrapper).
        l_safe = jnp.where(l_sc[...] > 0, l_sc[...], 1.0)
        h = acc_sc[...] * pl.reciprocal(l_safe, approx=True) + b1_ref[...]
        h = jnp.where(h > 0, h, jnp.exp(h) - 1.0)     # ELU (alpha=1)
        y = jnp.dot(h.astype(w2_ref.dtype), w2_ref[...],
                    preferred_element_type=jnp.float32) + b2_ref[...]
        o_ref[...] = y.astype(o_ref.dtype)


# --------------------------- plain-JAX glue ------------------------------------
def build_edge_counts(edge_index, num_nodes, padded_nodes):
    """Dense edge-multiplicity matrix M[dst, src] (int8) with SuperGATConv's
    self-loop handling (remove existing self-loops, add exactly one per node)."""
    # TODO(synk): int8 is exact only for multiplicities <= 127; heavy multigraphs
    # need a wider dtype.  For huge sparse graphs replace the dense O(N^2) matrix
    # with a CSR neighbor-gather kernel using PrefetchScalarGridSpec.
    src, dst = edge_index[0], edge_index[1]
    keep = (src != dst).astype(jnp.int32)
    m = jnp.zeros((padded_nodes, padded_nodes), jnp.int32).at[dst, src].add(keep)
    diag = jnp.arange(num_nodes)
    m = m.at[diag, diag].add(1)
    return m.astype(jnp.int8)


def supergat_forward(x, edge_index, params):
    n, f = x.shape
    c = params["w1"].shape[1]
    o = params["w2"].shape[1]

    f_p, c_p, o_p = _round_up(f, LANE), _round_up(c, LANE), _round_up(o, LANE)
    n_p = _round_up(n, 256)

    bk = 256                                   # source tile: matches 256x256 MXU (v6e/v7x)
    bm = 128 if (n_p // 256) < 2 else 256      # keep >= 2 row tiles so dual-TC v7x is busy
    bm1 = next(t for t in (1024, 512, 256, 128) if n_p % t == 0)   # stage-1 row tile

    bf16, f32 = jnp.bfloat16, jnp.float32

    # Zero-pad everything to lane-dense (128) widths; padded bias/weight entries
    # are zero so padded output columns are exactly b2-pad = 0 and are sliced off.
    x_p = jnp.zeros((n_p, f_p), bf16).at[:n, :f].set(x.astype(bf16))
    w1_p = jnp.zeros((f_p, c_p), bf16).at[:f, :c].set(params["w1"].astype(bf16))
    attl_f = jnp.zeros((c_p,), f32).at[:c].set(
        params["att_l"].astype(bf16).astype(f32))
    attr_f = jnp.zeros((c_p,), f32).at[:c].set(
        params["att_r"].astype(bf16).astype(f32))
    b1_p = jnp.zeros((1, c_p), f32).at[0, :c].set(params["b1"])
    w2_p = jnp.zeros((c_p, o_p), bf16).at[:c, :o].set(params["w2"].astype(bf16))
    b2_p = jnp.zeros((1, o_p), f32).at[0, :o].set(params["b2"])

    # ---- Stage 1: H = X @ W1 (hoisted; large row tiles, lane-dense bf16 out) --
    h = pl.pallas_call(
        linear_kernel,
        out_shape=jax.ShapeDtypeStruct((n_p, c_p), bf16),
        grid=(n_p // bm1,),
        in_specs=[
            pl.BlockSpec((bm1, f_p), lambda i: (i, 0)),
            pl.BlockSpec((f_p, c_p), lambda i: (0, 0)),
        ],
        out_specs=pl.BlockSpec((bm1, c_p), lambda i: (i, 0)),
        compiler_params=pltpu.CompilerParams(dimension_semantics=("parallel",)),
    )(x_p, w1_p)

    # Hoisted attention-vector terms (tiny matvecs, done once instead of ni*nk
    # times inside the attention loop).
    h_f32 = h.astype(f32)
    al = (h_f32 @ attl_f).reshape(1, n_p)      # per source j
    ar = (h_f32 @ attr_f).reshape(n_p, 1)      # per target i

    # Edge multiplicities (int8) + per-tile "has any edge" mask for block skipping.
    counts = build_edge_counts(edge_index, n, n_p)
    ni, nk = n_p // bm, n_p // bk
    tile_mask = jnp.any((counts != 0).reshape(ni, bm, nk, bk), axis=(1, 3))
    tile_mask = tile_mask.astype(jnp.int32).reshape(-1)   # flat 1D for SMEM

    cost = pl.CostEstimate(
        flops=int(4 * n_p * n_p * c_p + 2 * n_p * c_p * o_p + 12 * n_p * n_p),
        transcendentals=int(2 * n_p * n_p + n_p * c_p),
        bytes_accessed=int(counts.size                       # int8 counts
                           + nk * n_p * c_p * 2 + n_p * c_p * 2   # hk + hi streams
                           + n_p * o_p * 4),
    )

    # ---- Stage 2: fused attention + aggregation + bias + ELU + Linear --------
    # TODO(synk): on v5e, if profiling shows exposed DMA on the counts/hk
    # streams, add pipeline_mode=pl.Buffered(3) to those two BlockSpecs.
    y = pl.pallas_call(
        supergat_attn_kernel,
        out_shape=jax.ShapeDtypeStruct((n_p, o_p), f32),
        grid_spec=pltpu.PrefetchScalarGridSpec(
            num_scalar_prefetch=1,
            grid=(ni, nk),
            in_specs=[
                pl.BlockSpec((bm, bk), lambda i, k, tm: (i, k)),    # edge counts (int8)
                pl.BlockSpec((bm, c_p), lambda i, k, tm: (i, 0)),   # H rows (targets)
                pl.BlockSpec((bk, c_p), lambda i, k, tm: (k, 0)),   # H cols (sources)
                pl.BlockSpec((1, bk), lambda i, k, tm: (0, k)),     # al row (per source)
                pl.BlockSpec((bm, 1), lambda i, k, tm: (i, 0)),     # ar col (per target)
                pl.BlockSpec((1, c_p), lambda i, k, tm: (0, 0)),    # conv bias (resident)
                pl.BlockSpec((c_p, o_p), lambda i, k, tm: (0, 0)),  # linear weight bf16
                pl.BlockSpec((1, o_p), lambda i, k, tm: (0, 0)),    # linear bias
            ],
            out_specs=pl.BlockSpec((bm, o_p), lambda i, k, tm: (i, 0)),
            scratch_shapes=[
                pltpu.VMEM((bm, 1), f32),      # running max
                pltpu.VMEM((bm, 1), f32),      # running softmax denom
                pltpu.VMEM((bm, c_p), f32),    # f32 accumulator
            ],
        ),
        compiler_params=pltpu.CompilerParams(
            dimension_semantics=("parallel", "arbitrary"),
        ),
        cost_estimate=cost,
    )(tile_mask, counts, h, h, al, ar, b1_p, w2_p, b2_p)

    return y[:n, :o]


def init_params(key, in_channels, hidden_channels, out_channels, heads=1):
    # TODO(synk): heads > 1 (concat over heads) would add a head axis; the
    # module's default heads=1 is what is implemented here.
    assert heads == 1
    c = hidden_channels * heads
    k1, k2, k3, k4, k5 = jax.random.split(key, 5)
    return {
        "w1": jax.random.normal(k1, (in_channels, c), jnp.float32)
              / jnp.sqrt(in_channels),
        "att_l": jax.random.normal(k2, (c,), jnp.float32) / jnp.sqrt(c),
        "att_r": jax.random.normal(k3, (c,), jnp.float32) / jnp.sqrt(c),
        "b1": jnp.zeros((c,), jnp.float32),
        "w2": jax.random.normal(k4, (c, out_channels), jnp.float32) / jnp.sqrt(c),
        "b2": jax.random.uniform(k5, (out_channels,), jnp.float32, -1.0, 1.0)
              / jnp.sqrt(c),
    }


def supergat_reference(x, edge_index, params):
    """Plain-JAX SuperGATConv(MX) -> ELU -> Linear with the same bf16
    quantization of the large operands as the kernel path."""
    n = x.shape[0]
    bf = lambda v: v.astype(jnp.bfloat16).astype(jnp.float32)
    h = bf(bf(x) @ bf(params["w1"]))
    src, dst = edge_index[0], edge_index[1]
    keep = (src != dst).astype(jnp.float32)
    counts = jnp.zeros((n, n), jnp.float32).at[dst, src].add(keep)
    counts = counts + jnp.eye(n, dtype=jnp.float32)
    logits = h @ h.T                               # [target i, source j]
    sig = jax.nn.sigmoid(logits)
    al = h @ bf(params["att_l"])                   # per source j
    ar = h @ bf(params["att_r"])                   # per target i
    a = (ar[:, None] + al[None, :]) * sig
    a = jnp.where(a > 0, a, 0.2 * a)
    a = jnp.where(counts > 0, a, NEG_INF)
    a = a - jnp.max(a, axis=-1, keepdims=True)
    p = jnp.exp(a) * counts
    p = p / jnp.sum(p, axis=-1, keepdims=True)
    out = p @ h + params["b1"][None, :]
    out = jnp.where(out > 0, out, jnp.exp(out) - 1.0)
    return bf(out) @ bf(params["w2"]) + params["b2"][None, :]


# ------------------------------- main ------------------------------------------
if __name__ == "__main__":
    # TODO(synk): attention dropout (p=0.2) and the SuperGAT self-supervised
    # attention loss are training-only and not part of the eval forward pass.
    key = jax.random.PRNGKey(0)
    N, E = 200, 800
    IN_CH, HID_CH, OUT_CH, HEADS = 16, 32, 8, 1

    kx, ke, kp = jax.random.split(key, 3)
    x = jax.random.normal(kx, (N, IN_CH), jnp.float32)
    edge_index = jax.random.randint(ke, (2, E), 0, N, dtype=jnp.int32)

    params = init_params(kp, IN_CH, HID_CH, OUT_CH, HEADS)

    fwd = jax.jit(supergat_forward)
    out = jax.block_until_ready(fwd(x, edge_index, params))

    ref = supergat_reference(x, edge_index, params)
    assert out.shape == (N, OUT_CH)
    max_err = float(jnp.max(jnp.abs(out - ref)))
    assert jnp.allclose(out, ref, atol=2e-2, rtol=2e-2), f"max abs err = {max_err}"
    print("KERNEL_OK")
</pallas_src>

<mosaic_0001>
module attributes {stable_mosaic.version = 11 : i64} {
  func.func @linear_kernel(%arg0: i32, %arg1: memref<256x128xbf16, #tpu.memory_space<vmem>>, %arg2: memref<128x128xbf16, #tpu.memory_space<vmem>>, %arg3: memref<256x128xbf16, #tpu.memory_space<vmem>>) attributes {dimension_semantics = [#tpu.dimension_semantics<parallel>], iteration_bounds = array<i64: 1>, scalar_prefetch = 0 : i64, scratch_operands = 0 : i64, tpu.core_type = #tpu.core_type<tc>, window_params = [{transform_indices = @transform_0, window_bounds = array<i64: 256, 128>}, {pipeline_mode = #tpu.pipeline_mode<synchronous>, transform_indices = @transform_1, window_bounds = array<i64: 128, 128>}, {transform_indices = @transform_2, window_bounds = array<i64: 256, 128>}]} {
    %c0 = arith.constant 0 : index
    %c0_0 = arith.constant 0 : index
    %0 = vector.load %arg1[%c0, %c0_0] : memref<256x128xbf16, #tpu.memory_space<vmem>>, vector<256x128xbf16>
    %c0_1 = arith.constant 0 : index
    %c0_2 = arith.constant 0 : index
    %1 = vector.load %arg2[%c0_1, %c0_2] : memref<128x128xbf16, #tpu.memory_space<vmem>>, vector<128x128xbf16>
    %cst = arith.constant dense<0.000000e+00> : vector<256x128xf32>
    %2 = tpu.matmul %0, %1, %cst {dimension_numbers = #tpu.dot_dimension_numbers<[1], [0], [0], [1], [0, 0, 1, 1], [], []>} : vector<256x128xbf16>, vector<128x128xbf16>, vector<256x128xf32> -> vector<256x128xf32>
    %3 = arith.truncf %2 : vector<256x128xf32> to vector<256x128xbf16>
    %c0_3 = arith.constant 0 : index
    %c0_4 = arith.constant 0 : index
    %4 = vector.load %arg3[%c0_3, %c0_4] : memref<256x128xbf16, #tpu.memory_space<vmem>>, vector<256x128xbf16>
    tpu.vector_store %arg3[%c0_3, %c0_4], %3 {strides = array<i32>} : memref<256x128xbf16, #tpu.memory_space<vmem>>, vector<256x128xbf16>,
    return
  }
  func.func @transform_0(%arg0: i32) -> (i32, i32) {
    %c0_i32 = arith.constant 0 : i32
    %c0_i32_0 = arith.constant 0 : i32
    return %arg0, %c0_i32 : i32, i32
  }
  func.func @transform_1(%arg0: i32) -> (i32, i32) {
    %c0_i32 = arith.constant 0 : i32
    %c0_i32_0 = arith.constant 0 : i32
    %c0_i32_1 = arith.constant 0 : i32
    return %c0_i32, %c0_i32_0 : i32, i32
  }
  func.func @transform_2(%arg0: i32) -> (i32, i32) {
    %c0_i32 = arith.constant 0 : i32
    %c0_i32_0 = arith.constant 0 : i32
    return %arg0, %c0_i32 : i32, i32
  }
}

module attributes {stable_mosaic.version = 11 : i64} {
  func.func @supergat_attn_kernel(%arg0: i32, %arg1: i32, %arg2: memref<2xi32, #tpu.memory_space<smem>>, %arg3: memref<128x256xi8, #tpu.memory_space<vmem>>, %arg4: memref<128x128xbf16, #tpu.memory_space<vmem>>, %arg5: memref<256x128xbf16, #tpu.memory_space<vmem>>, %arg6: memref<1x256xf32, #tpu.memory_space<vmem>>, %arg7: memref<128x1xf32, #tpu.memory_space<vmem>>, %arg8: memref<1x128xf32, #tpu.memory_space<vmem>>, %arg9: memref<128x128xbf16, #tpu.memory_space<vmem>>, %arg10: memref<1x128xf32, #tpu.memory_space<vmem>>, %arg11: memref<128x128xf32, #tpu.memory_space<vmem>>, %arg12: memref<128x1xf32, #tpu.memory_space<vmem>>, %arg13: memref<128x1xf32, #tpu.memory_space<vmem>>, %arg14: memref<128x128xf32, #tpu.memory_space<vmem>>) attributes {dimension_semantics = [#tpu.dimension_semantics<parallel>, #tpu.dimension_semantics<arbitrary>], iteration_bounds = array<i64: 2, 1>, scalar_prefetch = 1 : i64, scratch_operands = 3 : i64, tpu.core_type = #tpu.core_type<tc>, window_params = [{transform_indices = @transform_0, window_bounds = array<i64: 128, 256>}, {transform_indices = @transform_1, window_bounds = array<i64: 128, 128>}, {transform_indices = @transform_2, window_bounds = array<i64: 256, 128>}, {transform_indices = @transform_3, window_bounds = array<i64: 1, 256>}, {transform_indices = @transform_4, window_bounds = array<i64: 128, 1>}, {pipeline_mode = #tpu.pipeline_mode<synchronous>, transform_indices = @transform_5, window_bounds = array<i64: 1, 128>}, {pipeline_mode = #tpu.pipeline_mode<synchronous>, transform_indices = @transform_6, window_bounds = array<i64: 128, 128>}, {pipeline_mode = #tpu.pipeline_mode<synchronous>, transform_indices = @transform_7, window_bounds = array<i64: 1, 128>}, {transform_indices = @transform_8, window_bounds = array<i64: 128, 128>}]} {
    %c0_i32 = arith.constant 0 : i32
    %0 = arith.cmpi eq, %arg1, %c0_i32 : i32
    %1 = arith.extui %0 : i1 to i32
    %c0_i32_0 = arith.constant 0 : i32
    %2 = arith.cmpi ne, %1, %c0_i32_0 : i32
    scf.if %2 {
      %cst = arith.constant -1.000000e+30 : f32
      %13 = vector.broadcast %cst : f32 to vector<128x1xf32>
      %c0 = arith.constant 0 : index
      %c0_5 = arith.constant 0 : index
      %14 = vector.load %arg12[%c0, %c0_5] : memref<128x1xf32, #tpu.memory_space<vmem>>, vector<128x1xf32>
      tpu.vector_store %arg12[%c0, %c0_5], %13 {strides = array<i32>} : memref<128x1xf32, #tpu.memory_space<vmem>>, vector<128x1xf32>,
      %cst_6 = arith.constant 0.000000e+00 : f32
      %15 = vector.broadcast %cst_6 : f32 to vector<128x1xf32>
      %c0_7 = arith.constant 0 : index
      %c0_8 = arith.constant 0 : index
      %16 = vector.load %arg13[%c0_7, %c0_8] : memref<128x1xf32, #tpu.memory_space<vmem>>, vector<128x1xf32>
      tpu.vector_store %arg13[%c0_7, %c0_8], %15 {strides = array<i32>} : memref<128x1xf32, #tpu.memory_space<vmem>>, vector<128x1xf32>,
      %cst_9 = arith.constant 0.000000e+00 : f32
      %17 = vector.broadcast %cst_9 : f32 to vector<128x128xf32>
      %c0_10 = arith.constant 0 : index
      %c0_11 = arith.constant 0 : index
      %18 = vector.load %arg14[%c0_10, %c0_11] : memref<128x128xf32, #tpu.memory_space<vmem>>, vector<128x128xf32>
      tpu.vector_store %arg14[%c0_10, %c0_11], %17 {strides = array<i32>} : memref<128x128xf32, #tpu.memory_space<vmem>>, vector<128x128xf32>,
    } else {
    }
    %c1_i32 = arith.constant 1 : i32
    %3 = arith.muli %arg0, %c1_i32 : i32
    %4 = arith.addi %3, %arg1 : i32
    %5 = arith.index_cast %4 : i32 to index
    %6 = memref.load %arg2[%5] : memref<2xi32, #tpu.memory_space<smem>>
    %c0_i32_1 = arith.constant 0 : i32
    %7 = arith.cmpi ne, %6, %c0_i32_1 : i32
    %8 = arith.extui %7 : i1 to i32
    %c0_i32_2 = arith.constant 0 : i32
    %9 = arith.cmpi ne, %8, %c0_i32_2 : i32
    scf.if %9 {
      %c0 = arith.constant 0 : index
      %c0_5 = arith.constant 0 : index
      %13 = vector.load %arg4[%c0, %c0_5] : memref<128x128xbf16, #tpu.memory_space<vmem>>, vector<128x128xbf16>
      %c0_6 = arith.constant 0 : index
      %c0_7 = arith.constant 0 : index
      %14 = vector.load %arg5[%c0_6, %c0_7] : memref<256x128xbf16, #tpu.memory_space<vmem>>, vector<256x128xbf16>
      %c0_8 = arith.constant 0 : index
      %c0_9 = arith.constant 0 : index
      %15 = vector.load %arg3[%c0_8, %c0_9] : memref<128x256xi8, #tpu.memory_space<vmem>>, vector<128x256xi8>
      %16 = arith.sitofp %15 : vector<128x256xi8> to vector<128x256xf32>
      %cst = arith.constant dense<0.000000e+00> : vector<128x256xf32>
      %17 = tpu.matmul %13, %14, %cst {dimension_numbers = #tpu.dot_dimension_numbers<[1], [1], [0], [0], [0, 0, 1, 0], [], []>} : vector<128x128xbf16>, vector<256x128xbf16>, vector<128x256xf32> -> vector<128x256xf32>
      %18 = arith.negf %17 : vector<128x256xf32>
      %19 = math.exp %18 : vector<128x256xf32>
      %cst_10 = arith.constant 1.000000e+00 : f32
      %20 = vector.broadcast %cst_10 : f32 to vector<128x256xf32>
      %21 = arith.addf %20, %19 : vector<128x256xf32>
      %22 = arith.divf %20, %21 : vector<128x256xf32>
      %c0_11 = arith.constant 0 : index
      %c0_12 = arith.constant 0 : index
      %23 = vector.load %arg7[%c0_11, %c0_12] : memref<128x1xf32, #tpu.memory_space<vmem>>, vector<128x1xf32>
      %c0_13 = arith.constant 0 : index
      %c0_14 = arith.constant 0 : index
      %24 = vector.load %arg6[%c0_13, %c0_14] : memref<1x256xf32, #tpu.memory_space<vmem>>, vector<1x256xf32>
      %25 = vector.broadcast %23 : vector<128x1xf32> to vector<128x256xf32>
      %26 = vector.broadcast %24 : vector<1x256xf32> to vector<128x256xf32>
      %27 = arith.addf %25, %26 : vector<128x256xf32>
      %28 = arith.mulf %27, %22 : vector<128x256xf32>
      %cst_15 = arith.constant 2.000000e-01 : f32
      %29 = vector.broadcast %cst_15 : f32 to vector<128x256xf32>
      %30 = arith.mulf %29, %28 : vector<128x256xf32>
      %31 = arith.maximumf %28, %30 : vector<128x256xf32>
      %cst_16 = arith.constant 0.000000e+00 : f32
      %32 = vector.broadcast %cst_16 : f32 to vector<128x256xf32>
      %33 = arith.cmpf ogt, %16, %32 : vector<128x256xf32>
      %cst_17 = arith.constant -1.000000e+30 : f32
      %34 = vector.broadcast %cst_17 : f32 to vector<128x256xf32>
      %35 = arith.select %33, %31, %34 : vector<128x256xi1>, vector<128x256xf32>
      %c0_18 = arith.constant 0 : index
      %c0_19 = arith.constant 0 : index
      %36 = vector.load %arg12[%c0_18, %c0_19] : memref<128x1xf32, #tpu.memory_space<vmem>>, vector<128x1xf32>
      %cst_20 = arith.constant dense<0xFF800000> : vector<128xf32>
      %37 = vector.multi_reduction <maximumf>, %35, %cst_20 [1] : vector<128x256xf32> to vector<128xf32>
      %38 = vector.shape_cast %37 : vector<128xf32> to vector<128x1xf32>
      %39 = arith.maximumf %36, %38 : vector<128x1xf32>
      %c0_21 = arith.constant 0 : index
      %c0_22 = arith.constant 0 : index
      %40 = vector.load %arg12[%c0_21, %c0_22] : memref<128x1xf32, #tpu.memory_space<vmem>>, vector<128x1xf32>
      %41 = arith.subf %40, %39 : vector<128x1xf32>
      %42 = math.exp %41 : vector<128x1xf32>
      %43 = vector.broadcast %39 : vector<128x1xf32> to vector<128x256xf32>
      %44 = arith.subf %35, %43 : vector<128x256xf32>
      %45 = math.exp %44 : vector<128x256xf32>
      %46 = arith.mulf %45, %16 : vector<128x256xf32>
      %c0_23 = arith.constant 0 : index
      %c0_24 = arith.constant 0 : index
      %47 = vector.load %arg13[%c0_23, %c0_24] : memref<128x1xf32, #tpu.memory_space<vmem>>, vector<128x1xf32>
      %48 = arith.mulf %42, %47 : vector<128x1xf32>
      %cst_25 = arith.constant dense<0.000000e+00> : vector<128xf32>
      %49 = vector.multi_reduction <add>, %46, %cst_25 [1] : vector<128x256xf32> to vector<128xf32>
      %50 = vector.shape_cast %49 : vector<128xf32> to vector<128x1xf32>
      %51 = arith.addf %48, %50 : vector<128x1xf32>
      %c0_26 = arith.constant 0 : index
      %c0_27 = arith.constant 0 : index
      %52 = vector.load %arg13[%c0_26, %c0_27] : memref<128x1xf32, #tpu.memory_space<vmem>>, vector<128x1xf32>
      tpu.vector_store %arg13[%c0_26, %c0_27], %51 {strides = array<i32>} : memref<128x1xf32, #tpu.memory_space<vmem>>, vector<128x1xf32>,
      %c0_28 = arith.constant 0 : index
      %c0_29 = arith.constant 0 : index
      %53 = vector.load %arg14[%c0_28, %c0_29] : memref<128x128xf32, #tpu.memory_space<vmem>>, vector<128x128xf32>
      %54 = vector.broadcast %42 : vector<128x1xf32> to vector<128x128xf32>
      %55 = arith.mulf %54, %53 : vector<128x128xf32>
      %56 = arith.truncf %46 : vector<128x256xf32> to vector<128x256xbf16>
      %cst_30 = arith.constant dense<0.000000e+00> : vector<128x128xf32>
      %57 = tpu.matmul %56, %14, %cst_30 {dimension_numbers = #tpu.dot_dimension_numbers<[1], [0], [0], [1], [0, 0, 1, 1], [], []>} : vector<128x256xbf16>, vector<256x128xbf16>, vector<128x128xf32> -> vector<128x128xf32>
      %58 = arith.addf %55, %57 : vector<128x128xf32>
      %c0_31 = arith.constant 0 : index
      %c0_32 = arith.constant 0 : index
      %59 = vector.load %arg14[%c0_31, %c0_32] : memref<128x128xf32, #tpu.memory_space<vmem>>, vector<128x128xf32>
      tpu.vector_store %arg14[%c0_31, %c0_32], %58 {strides = array<i32>} : memref<128x128xf32, #tpu.memory_space<vmem>>, vector<128x128xf32>,
      %c0_33 = arith.constant 0 : index
      %c0_34 = arith.constant 0 : index
      %60 = vector.load %arg12[%c0_33, %c0_34] : memref<128x1xf32, #tpu.memory_space<vmem>>, vector<128x1xf32>
      tpu.vector_store %arg12[%c0_33, %c0_34], %39 {strides = array<i32>} : memref<128x1xf32, #tpu.memory_space<vmem>>, vector<128x1xf32>,
    } else {
    }
    %c0_i32_3 = arith.constant 0 : i32
    %10 = arith.cmpi eq, %arg1, %c0_i32_3 : i32
    %11 = arith.extui %10 : i1 to i32
    %c0_i32_4 = arith.constant 0 : i32
    %12 = arith.cmpi ne, %11, %c0_i32_4 : i32
    scf.if %12 {
      %c0 = arith.constant 0 : index
      %c0_5 = arith.constant 0 : index
      %13 = vector.load %arg13[%c0, %c0_5] : memref<128x1xf32, #tpu.memory_space<vmem>>, vector<128x1xf32>
      %cst = arith.constant 0.000000e+00 : f32
      %14 = vector.broadcast %cst : f32 to vector<128x1xf32>
      %15 = arith.cmpf ogt, %13, %14 : vector<128x1xf32>
      %c0_6 = arith.constant 0 : index
      %c0_7 = arith.constant 0 : index
      %16 = vector.load %arg13[%c0_6, %c0_7] : memref<128x1xf32, #tpu.memory_space<vmem>>, vector<128x1xf32>
      %cst_8 = arith.constant 1.000000e+00 : f32
      %17 = vector.broadcast %cst_8 : f32 to vector<128x1xf32>
      %18 = arith.select %15, %16, %17 : vector<128x1xi1>, vector<128x1xf32>
      %c0_9 = arith.constant 0 : index
      %c0_10 = arith.constant 0 : index
      %19 = vector.load %arg14[%c0_9, %c0_10] : memref<128x128xf32, #tpu.memory_space<vmem>>, vector<128x128xf32>
      %20 = tpu.reciprocal %18 {approx = true} : vector<128x1xf32> -> vector<128x1xf32>
      %21 = vector.broadcast %20 : vector<128x1xf32> to vector<128x128xf32>
      %22 = arith.mulf %19, %21 : vector<128x128xf32>
      %c0_11 = arith.constant 0 : index
      %c0_12 = arith.constant 0 : index
      %23 = vector.load %arg8[%c0_11, %c0_12] : memref<1x128xf32, #tpu.memory_space<vmem>>, vector<1x128xf32>
      %24 = vector.broadcast %23 : vector<1x128xf32> to vector<128x128xf32>
      %25 = arith.addf %22, %24 : vector<128x128xf32>
      %cst_13 = arith.constant 0.000000e+00 : f32
      %26 = vector.broadcast %cst_13 : f32 to vector<128x128xf32>
      %27 = arith.cmpf ogt, %25, %26 : vector<128x128xf32>
      %28 = math.exp %25 : vector<128x128xf32>
      %cst_14 = arith.constant 1.000000e+00 : f32
      %29 = vector.broadcast %cst_14 : f32 to vector<128x128xf32>
      %30 = arith.subf %28, %29 : vector<128x128xf32>
      %31 = arith.select %27, %25, %30 : vector<128x128xi1>, vector<128x128xf32>
      %32 = arith.truncf %31 : vector<128x128xf32> to vector<128x128xbf16>
      %c0_15 = arith.constant 0 : index
      %c0_16 = arith.constant 0 : index
      %33 = vector.load %arg9[%c0_15, %c0_16] : memref<128x128xbf16, #tpu.memory_space<vmem>>, vector<128x128xbf16>
      %cst_17 = arith.constant dense<0.000000e+00> : vector<128x128xf32>
      %34 = tpu.matmul %32, %33, %cst_17 {dimension_numbers = #tpu.dot_dimension_numbers<[1], [0], [0], [1], [0, 0, 1, 1], [], []>} : vector<128x128xbf16>, vector<128x128xbf16>, vector<128x128xf32> -> vector<128x128xf32>
      %c0_18 = arith.constant 0 : index
      %c0_19 = arith.constant 0 : index
      %35 = vector.load %arg10[%c0_18, %c0_19] : memref<1x128xf32, #tpu.memory_space<vmem>>, vector<1x128xf32>
      %36 = vector.broadcast %35 : vector<1x128xf32> to vector<128x128xf32>
      %37 = arith.addf %34, %36 : vector<128x128xf32>
      %c0_20 = arith.constant 0 : index
      %c0_21 = arith.constant 0 : index
      %38 = vector.load %arg11[%c0_20, %c0_21] : memref<128x128xf32, #tpu.memory_space<vmem>>, vector<128x128xf32>
      tpu.vector_store %arg11[%c0_20, %c0_21], %37 {strides = array<i32>} : memref<128x128xf32, #tpu.memory_space<vmem>>, vector<128x128xf32>,
    } else {
    }
    return
  }
  func.func @transform_0(%arg0: i32, %arg1: i32, %arg2: memref<2xi32, #tpu.memory_space<smem>>) -> (i32, i32) {
    %c0_i32 = arith.constant 0 : i32
    return %arg0, %arg1 : i32, i32
  }
  func.func @transform_1(%arg0: i32, %arg1: i32, %arg2: memref<2xi32, #tpu.memory_space<smem>>) -> (i32, i32) {
    %c0_i32 = arith.constant 0 : i32
    %c0_i32_0 = arith.constant 0 : i32
    return %arg0, %c0_i32 : i32, i32
  }
  func.func @transform_2(%arg0: i32, %arg1: i32, %arg2: memref<2xi32, #tpu.memory_space<smem>>) -> (i32, i32) {
    %c0_i32 = arith.constant 0 : i32
    %c0_i32_0 = arith.constant 0 : i32
    return %arg1, %c0_i32 : i32, i32
  }
  func.func @transform_3(%arg0: i32, %arg1: i32, %arg2: memref<2xi32, #tpu.memory_space<smem>>) -> (i32, i32) {
    %c0_i32 = arith.constant 0 : i32
    %c0_i32_0 = arith.constant 0 : i32
    return %c0_i32, %arg1 : i32, i32
  }
  func.func @transform_4(%arg0: i32, %arg1: i32, %arg2: memref<2xi32, #tpu.memory_space<smem>>) -> (i32, i32) {
    %c0_i32 = arith.constant 0 : i32
    %c0_i32_0 = arith.constant 0 : i32
    return %arg0, %c0_i32 : i32, i32
  }
  func.func @transform_5(%arg0: i32, %arg1: i32, %arg2: memref<2xi32, #tpu.memory_space<smem>>) -> (i32, i32) {
    %c0_i32 = arith.constant 0 : i32
    %c0_i32_0 = arith.constant 0 : i32
    %c0_i32_1 = arith.constant 0 : i32
    return %c0_i32, %c0_i32_0 : i32, i32
  }
  func.func @transform_6(%arg0: i32, %arg1: i32, %arg2: memref<2xi32, #tpu.memory_space<smem>>) -> (i32, i32) {
    %c0_i32 = arith.constant 0 : i32
    %c0_i32_0 = arith.constant 0 : i32
    %c0_i32_1 = arith.constant 0 : i32
    return %c0_i32, %c0_i32_0 : i32, i32
  }
  func.func @transform_7(%arg0: i32, %arg1: i32, %arg2: memref<2xi32, #tpu.memory_space<smem>>) -> (i32, i32) {
    %c0_i32 = arith.constant 0 : i32
    %c0_i32_0 = arith.constant 0 : i32
    %c0_i32_1 = arith.constant 0 : i32
    return %c0_i32, %c0_i32_0 : i32, i32
  }
  func.func @transform_8(%arg0: i32, %arg1: i32, %arg2: memref<2xi32, #tpu.memory_space<smem>>) -> (i32, i32) {
    %c0_i32 = arith.constant 0 : i32
    %c0_i32_0 = arith.constant 0 : i32
    return %arg0, %c0_i32 : i32, i32
  }
}

</mosaic_0001>

<llo_original>
// kernel: supergat_forward.2
$region0: #{supergat_forward.2}
  #allocation0 [shape = 'u32[]', space=smem, size = 0x4, offset = 0x4, fixed_abs, tag = 'smem constant byte address 0x4 - core index']
  #allocation1 [shape = 'u32[72,128]{1,0:T(1,128)}', space=vmem, size = 0x9000, scoped, tag = 'internal scratch']
  %s0 = inlined_call_operand.vmem [shape: bf16[256,128], index: 0, kind: input, shape index: {}]
  %s1 = inlined_call_operand.vmem [shape: bf16[128,128], index: 1, kind: input, shape index: {}]
  %s2 = inlined_call_operand.vmem [shape: bf16[256,128], index: 2, kind: output, shape index: {}]
  %s3 = sld [smem:[#allocation0]]
  $region18: #{supergat_forward.2} parent=0
    _
  %s5 = ssub.s32 1, %s3
  %s6 = scalar_select 0, %s5, %s3
  // Predicated region
  $region2: #{supergat_forward.2} parent=0 // pred_check
    _
  $region3: #{supergat_forward.2} parent=0 // pred_check_branch
    %8 = sbr.rel (0) target = $region5
  $region4: #{supergat_forward.2} parent=0 // pred_region
    _
  $region5: #{supergat_forward.2} parent=0 // pred_fallthru
    _
  // Predicated region
  $region6: #{supergat_forward.2} parent=0 // pred_check
    _
  $region7: #{supergat_forward.2} parent=0 // pred_check_branch
    %10 = sbr.rel (0) target = $region9
  $region8: #{supergat_forward.2} parent=0 // pred_region
    _
  $region9: #{supergat_forward.2} parent=0 // pred_fallthru
    _
  %v11 = vld [vmem:[%s0] sm:$0xf]
  %v12 = vld [vmem:[%s0 + $0x4] sm:$0xf]
  %v13 = vld [vmem:[%s0 + $0x8] sm:$0xf]
  %v14 = vld [vmem:[%s0 + $0xc] sm:$0xf]
  %v15 = vld [vmem:[%s0 + $0x10] sm:$0xf]
  %v16 = vld [vmem:[%s0 + $0x14] sm:$0xf]
  %v17 = vld [vmem:[%s0 + $0x18] sm:$0xf]
  %v18 = vld [vmem:[%s0 + $0x1c] sm:$0xf]
  %v19 = vld [vmem:[%s0 + $0x20] sm:$0xf]
  %v20 = vld [vmem:[%s0 + $0x24] sm:$0xf]
  %v21 = vld [vmem:[%s0 + $0x28] sm:$0xf]
  %v22 = vld [vmem:[%s0 + $0x2c] sm:$0xf]
  %v23 = vld [vmem:[%s0 + $0x30] sm:$0xf]
  %v24 = vld [vmem:[%s0 + $0x34] sm:$0xf]
  %v25 = vld [vmem:[%s0 + $0x38] sm:$0xf]
  %v26 = vld [vmem:[%s0 + $0x3c] sm:$0xf]
  %v27 = vld [vmem:[%s0 + $0x40] sm:$0xf]
  %v28 = vld [vmem:[%s0 + $0x44] sm:$0xf]
  %v29 = vld [vmem:[%s0 + $0x48] sm:$0xf]
  %v30 = vld [vmem:[%s0 + $0x4c] sm:$0xf]
  %v31 = vld [vmem:[%s0 + $0x50] sm:$0xf]
  %v32 = vld [vmem:[%s0 + $0x54] sm:$0xf]
  %v33 = vld [vmem:[%s0 + $0x58] sm:$0xf]
  %v34 = vld [vmem:[%s0 + $0x5c] sm:$0xf]
  %v35 = vld [vmem:[%s0 + $0x60] sm:$0xf]
  %v36 = vld [vmem:[%s0 + $0x64] sm:$0xf]
  %v37 = vld [vmem:[%s0 + $0x68] sm:$0xf]
  %v38 = vld [vmem:[%s0 + $0x6c] sm:$0xf]
  %v39 = vld [vmem:[%s0 + $0x70] sm:$0xf]
  %v40 = vld [vmem:[%s0 + $0x74] sm:$0xf]
  %v41 = vld [vmem:[%s0 + $0x78] sm:$0xf]
  %v42 = vld [vmem:[%s0 + $0x7c] sm:$0xf]
  %v43 = vld [vmem:[%s1] sm:$0xf]
  %v44 = vld [vmem:[%s1 + $0x4] sm:$0xf]
  %v45 = vld [vmem:[%s1 + $0x8] sm:$0xf]
  %v46 = vld [vmem:[%s1 + $0xc] sm:$0xf]
  %v47 = vld [vmem:[%s1 + $0x10] sm:$0xf]
  %v48 = vld [vmem:[%s1 + $0x14] sm:$0xf]
  %v49 = vld [vmem:[%s1 + $0x18] sm:$0xf]
  %v50 = vld [vmem:[%s1 + $0x1c] sm:$0xf]
  %v51 = vld [vmem:[%s1 + $0x20] sm:$0xf]
  %v52 = vld [vmem:[%s1 + $0x24] sm:$0xf]
  %v53 = vld [vmem:[%s1 + $0x28] sm:$0xf]
  %v54 = vld [vmem:[%s1 + $0x2c] sm:$0xf]
  %v55 = vld [vmem:[%s1 + $0x30] sm:$0xf]
  %v56 = vld [vmem:[%s1 + $0x34] sm:$0xf]
  %v57 = vld [vmem:[%s1 + $0x38] sm:$0xf]
  %v58 = vld [vmem:[%s1 + $0x3c] sm:$0xf]
  %v91 = vunpack.c.l.b16 %v11
  %v92 = vunpack.c.l.b16 %v12
  %v93 = vunpack.c.l.b16 %v13
  %v94 = vunpack.c.l.b16 %v14
  %v95 = vunpack.c.l.b16 %v15
  %v96 = vunpack.c.l.b16 %v16
  %v97 = vunpack.c.l.b16 %v17
  %v98 = vunpack.c.l.b16 %v18
  %v99 = vunpack.c.l.b16 %v19
  %v100 = vunpack.c.l.b16 %v20
  %v101 = vunpack.c.l.b16 %v21
  %v102 = vunpack.c.l.b16 %v22
  %v103 = vunpack.c.l.b16 %v23
  %v104 = vunpack.c.l.b16 %v24
  %v105 = vunpack.c.l.b16 %v25
  %v106 = vunpack.c.l.b16 %v26
  %v107 = vunpack.c.l.b16 %v27
  %v108 = vunpack.c.l.b16 %v28
  %v109 = vunpack.c.l.b16 %v29
  %v110 = vunpack.c.l.b16 %v30
  %v111 = vunpack.c.l.b16 %v31
  %v112 = vunpack.c.l.b16 %v32
  %v113 = vunpack.c.l.b16 %v33
  %v114 = vunpack.c.l.b16 %v34
  %v115 = vunpack.c.l.b16 %v35
  %v116 = vunpack.c.l.b16 %v36
  %v117 = vunpack.c.l.b16 %v37
  %v118 = vunpack.c.l.b16 %v38
  %v119 = vunpack.c.l.b16 %v39
  %v120 = vunpack.c.l.b16 %v40
  %v121 = vunpack.c.l.b16 %v41
  %v122 = vunpack.c.l.b16 %v42
  %v123 = vpack.c.b16 %v92, %v91
  %v124 = vpack.c.b16 %v94, %v93
  %v125 = vpack.c.b16 %v96, %v95
  %v126 = vpack.c.b16 %v98, %v97
  %v127 = vpack.c.b16 %v100, %v99
  %v128 = vpack.c.b16 %v102, %v101
  %v129 = vpack.c.b16 %v104, %v103
  %v130 = vpack.c.b16 %v106, %v105
  %v131 = vpack.c.b16 %v108, %v107
  %v132 = vpack.c.b16 %v110, %v109
  %v133 = vpack.c.b16 %v112, %v111
  %v134 = vpack.c.b16 %v114, %v113
  %v135 = vpack.c.b16 %v116, %v115
  %v136 = vpack.c.b16 %v118, %v117
  %v137 = vpack.c.b16 %v120, %v119
  %v138 = vpack.c.b16 %v122, %v121
  %v171 = vunpack.c.l.b16 %v43
  %v172 = vunpack.c.l.b16 %v44
  %v173 = vunpack.c.l.b16 %v45
  %v174 = vunpack.c.l.b16 %v46
  %v175 = vunpack.c.l.b16 %v47
  %v176 = vunpack.c.l.b16 %v48
  %v177 = vunpack.c.l.b16 %v49
  %v178 = vunpack.c.l.b16 %v50
  %v179 = vunpack.c.l.b16 %v51
  %v180 = vunpack.c.l.b16 %v52
  %v181 = vunpack.c.l.b16 %v53
  %v182 = vunpack.c.l.b16 %v54
  %v183 = vunpack.c.l.b16 %v55
  %v184 = vunpack.c.l.b16 %v56
  %v185 = vunpack.c.l.b16 %v57
  %v186 = vunpack.c.l.b16 %v58
  %v187 = vpack.c.b16 %v172, %v171
  %v188 = vpack.c.b16 %v174, %v173
  %v189 = vpack.c.b16 %v176, %v175
  %v190 = vpack.c.b16 %v178, %v177
  %v191 = vpack.c.b16 %v180, %v179
  %v192 = vpack.c.b16 %v182, %v181
  %v193 = vpack.c.b16 %v184, %v183
  %v194 = vpack.c.b16 %v186, %v185
  %203 = vmatpush.bf16.msra.mxu0 %v194
  %204 = vmatpush.bf16.msra.mxu0 %v193
  %205 = vmatpush.bf16.msra.mxu0 %v192
  %206 = vmatpush.bf16.msra.mxu0 %v191
  %207 = vmatpush.bf16.msra.mxu0 %v190
  %208 = vmatpush.bf16.msra.mxu0 %v189
  %209 = vmatpush.bf16.msra.mxu0 %v188
  %210 = vmatpush.bf16.msra.mxu0 %v187
  %211 = vmatmul.bf16.gmra.mxu0 %v123
  %v212 = vpop.f32.mrf.mxu0
  %v213 = vadd.f32 0.0, %v212
  %v214 = vpop.f32.mrf.mxu0
  %v215 = vadd.f32 0.0, %v214
  %216 = vmatmul.bf16.gmra.mxu0 %v124
  %v217 = vpop.f32.mrf.mxu0
  %v218 = vadd.f32 0.0, %v217
  %v219 = vpop.f32.mrf.mxu0
  %v220 = vadd.f32 0.0, %v219
  %221 = vmatmul.bf16.gmra.mxu0 %v125
  %v222 = vpop.f32.mrf.mxu0
  %v223 = vadd.f32 0.0, %v222
  %v224 = vpop.f32.mrf.mxu0
  %v225 = vadd.f32 0.0, %v224
  %226 = vmatmul.bf16.gmra.mxu0 %v126
  %v227 = vpop.f32.mrf.mxu0
  %v228 = vadd.f32 0.0, %v227
  %v229 = vpop.f32.mrf.mxu0
  %v230 = vadd.f32 0.0, %v229
  %231 = vmatmul.bf16.gmra.mxu0 %v127
  %v232 = vpop.f32.mrf.mxu0
  %v233 = vadd.f32 0.0, %v232
  %v234 = vpop.f32.mrf.mxu0
  %v235 = vadd.f32 0.0, %v234
  %236 = vmatmul.bf16.gmra.mxu0 %v128
  %v237 = vpop.f32.mrf.mxu0
  %v238 = vadd.f32 0.0, %v237
  %v239 = vpop.f32.mrf.mxu0
  %v240 = vadd.f32 0.0, %v239
  %241 = vmatmul.bf16.gmra.mxu0 %v129
  %v242 = vpop.f32.mrf.mxu0
  %v243 = vadd.f32 0.0, %v242
  %v244 = vpop.f32.mrf.mxu0
  %v245 = vadd.f32 0.0, %v244
  %246 = vmatmul.bf16.gmra.mxu0 %v130
  %v247 = vpop.f32.mrf.mxu0
  %v248 = vadd.f32 0.0, %v247
  %v249 = vpop.f32.mrf.mxu0
  %v250 = vadd.f32 0.0, %v249
  %251 = vmatmul.bf16.gmra.mxu0 %v131
  %v252 = vpop.f32.mrf.mxu0
  %v253 = vadd.f32 0.0, %v252
  %v254 = vpop.f32.mrf.mxu0
  %v255 = vadd.f32 0.0, %v254
  %256 = vmatmul.bf16.gmra.mxu0 %v132
  %v257 = vpop.f32.mrf.mxu0
  %v258 = vadd.f32 0.0, %v257
  %v259 = vpop.f32.mrf.mxu0
  %v260 = vadd.f32 0.0, %v259
  %261 = vmatmul.bf16.gmra.mxu0 %v133
  %v262 = vpop.f32.mrf.mxu0
  %v263 = vadd.f32 0.0, %v262
  %v264 = vpop.f32.mrf.mxu0
  %v265 = vadd.f32 0.0, %v264
  %266 = vmatmul.bf16.gmra.mxu0 %v134
  %v267 = vpop.f32.mrf.mxu0
  %v268 = vadd.f32 0.0, %v267
  %v269 = vpop.f32.mrf.mxu0
  %v270 = vadd.f32 0.0, %v269
  %271 = vmatmul.bf16.gmra.mxu0 %v135
  %v272 = vpop.f32.mrf.mxu0
  %v273 = vadd.f32 0.0, %v272
  %v274 = vpop.f32.mrf.mxu0
  %v275 = vadd.f32 0.0, %v274
  %276 = vmatmul.bf16.gmra.mxu0 %v136
  %v277 = vpop.f32.mrf.mxu0
  %v278 = vadd.f32 0.0, %v277
  %v279 = vpop.f32.mrf.mxu0
  %v280 = vadd.f32 0.0, %v279
  %281 = vmatmul.bf16.gmra.mxu0 %v137
  %v282 = vpop.f32.mrf.mxu0
  %v283 = vadd.f32 0.0, %v282
  %v284 = vpop.f32.mrf.mxu0
  %v285 = vadd.f32 0.0, %v284
  %286 = vmatmul.bf16.gmra.mxu0 %v138
  %v287 = vpop.f32.mrf.mxu0
  %v288 = vadd.f32 0.0, %v287
  %v289 = vpop.f32.mrf.mxu0
  %v290 = vadd.f32 0.0, %v289
  %291 = vdwg.mxu0
  %v292 = vpack.c.bf16 %v213, %v213
  %v293 = vpack.c.bf16 %v215, %v215
  %v294 = vpack.c.bf16 %v218, %v218
  %v295 = vpack.c.bf16 %v220, %v220
  %v296 = vpack.c.bf16 %v223, %v223
  %v297 = vpack.c.bf16 %v225, %v225
  %v298 = vpack.c.bf16 %v228, %v228
  %v299 = vpack.c.bf16 %v230, %v230
  %v300 = vpack.c.bf16 %v233, %v233
  %v301 = vpack.c.bf16 %v235, %v235
  %v302 = vpack.c.bf16 %v238, %v238
  %v303 = vpack.c.bf16 %v240, %v240
  %v304 = vpack.c.bf16 %v243, %v243
  %v305 = vpack.c.bf16 %v245, %v245
  %v306 = vpack.c.bf16 %v248, %v248
  %v307 = vpack.c.bf16 %v250, %v250
  %v308 = vpack.c.bf16 %v253, %v253
  %v309 = vpack.c.bf16 %v255, %v255
  %v310 = vpack.c.bf16 %v258, %v258
  %v311 = vpack.c.bf16 %v260, %v260
  %v312 = vpack.c.bf16 %v263, %v263
  %v313 = vpack.c.bf16 %v265, %v265
  %v314 = vpack.c.bf16 %v268, %v268
  %v315 = vpack.c.bf16 %v270, %v270
  %v316 = vpack.c.bf16 %v273, %v273
  %v317 = vpack.c.bf16 %v275, %v275
  %v318 = vpack.c.bf16 %v278, %v278
  %v319 = vpack.c.bf16 %v280, %v280
  %v320 = vpack.c.bf16 %v283, %v283
  %v321 = vpack.c.bf16 %v285, %v285
  %v322 = vpack.c.bf16 %v288, %v288
  %v323 = vpack.c.bf16 %v290, %v290
  %324 = vst [vmem:[%s2] sm:$0xf] %v292
  %325 = vst [vmem:[%s2 + $0x4] sm:$0xf] %v293
  %326 = vst [vmem:[%s2 + $0x8] sm:$0xf] %v294
  %327 = vst [vmem:[%s2 + $0xc] sm:$0xf] %v295
  %328 = vst [vmem:[%s2 + $0x10] sm:$0xf] %v296
  %329 = vst [vmem:[%s2 + $0x14] sm:$0xf] %v297
  %330 = vst [vmem:[%s2 + $0x18] sm:$0xf] %v298
  %331 = vst [vmem:[%s2 + $0x1c] sm:$0xf] %v299
  %332 = vst [vmem:[%s2 + $0x20] sm:$0xf] %v300
  %333 = vst [vmem:[%s2 + $0x24] sm:$0xf] %v301
  %334 = vst [vmem:[%s2 + $0x28] sm:$0xf] %v302
  %335 = vst [vmem:[%s2 + $0x2c] sm:$0xf] %v303
  %336 = vst [vmem:[%s2 + $0x30] sm:$0xf] %v304
  %337 = vst [vmem:[%s2 + $0x34] sm:$0xf] %v305
  %338 = vst [vmem:[%s2 + $0x38] sm:$0xf] %v306
  %339 = vst [vmem:[%s2 + $0x3c] sm:$0xf] %v307
  %340 = vst [vmem:[%s2 + $0x40] sm:$0xf] %v308
  %341 = vst [vmem:[%s2 + $0x44] sm:$0xf] %v309
  %342 = vst [vmem:[%s2 + $0x48] sm:$0xf] %v310
  %343 = vst [vmem:[%s2 + $0x4c] sm:$0xf] %v311
  %344 = vst [vmem:[%s2 + $0x50] sm:$0xf] %v312
  %345 = vst [vmem:[%s2 + $0x54] sm:$0xf] %v313
  %346 = vst [vmem:[%s2 + $0x58] sm:$0xf] %v314
  %347 = vst [vmem:[%s2 + $0x5c] sm:$0xf] %v315
  %348 = vst [vmem:[%s2 + $0x60] sm:$0xf] %v316
  %349 = vst [vmem:[%s2 + $0x64] sm:$0xf] %v317
  %350 = vst [vmem:[%s2 + $0x68] sm:$0xf] %v318
  %351 = vst [vmem:[%s2 + $0x6c] sm:$0xf] %v319
  %352 = vst [vmem:[%s2 + $0x70] sm:$0xf] %v320
  %353 = vst [vmem:[%s2 + $0x74] sm:$0xf] %v321
  %354 = vst [vmem:[%s2 + $0x78] sm:$0xf] %v322
  %355 = vst [vmem:[%s2 + $0x7c] sm:$0xf] %v323
  // Predicated region
  $region10: #{supergat_forward.2} parent=0 // pred_check
    _
  $region11: #{supergat_forward.2} parent=0 // pred_check_branch
    %357 = sbr.rel (0) target = $region13
  $region12: #{supergat_forward.2} parent=0 // pred_region
    _
  $region13: #{supergat_forward.2} parent=0 // pred_fallthru
    _
  // Predicated region
  $region14: #{supergat_forward.2} parent=0 // pred_check
    _
  $region15: #{supergat_forward.2} parent=0 // pred_check_branch
    %359 = sbr.rel (0) target = $region17
  $region16: #{supergat_forward.2} parent=0 // pred_region
    _
  $region17: #{supergat_forward.2} parent=0 // pred_fallthru
    _

// kernel: supergat_forward.3
$region0: #{supergat_forward.3}
  #allocation0 [shape = 'u32[]', space=smem, size = 0x4, offset = 0x4, fixed_abs, tag = 'smem constant byte address 0x4 - core index']
  #allocation1 [shape = 'u32[72,128]{1,0:T(1,128)}', space=vmem, size = 0x9000, scoped, tag = 'internal scratch']
  #allocation2 [shape = 'f32[128,1]{1,0:T(8,128)}', space=vmem, size = 0x10000, scoped, tag = 'scratch operand']
  #allocation3 [shape = 'f32[128,1]{1,0:T(8,128)}', space=vmem, size = 0x10000, scoped, tag = 'scratch operand']
  #allocation4 [shape = 'f32[128,128]{1,0:T(8,128)}', space=vmem, size = 0x10000, scoped, tag = 'scratch operand']
  #allocation5 [shape = 's32[1]{0}', space=sflag, size = 0x4, scoped, tag = 'scoped memory for supergat_forward.3']
  #allocation6 [shape = 'u8[512]{0}', space=smem, size = 0x200, scoped, tag = 'prefetched SMEM operand 0']
  %s0 = inlined_call_operand.vmem [shape: s32[2], index: 0, kind: input, shape index: {}]
  %s1 = inlined_call_operand.vmem [shape: s8[256,256], index: 1, kind: input, shape index: {}]
  %s2 = inlined_call_operand.vmem [shape: bf16[256,128], index: 2, kind: input, shape index: {}, may-alias: {2,3}]
  %s3 = inlined_call_operand.vmem [shape: bf16[256,128], index: 3, kind: input, shape index: {}, may-alias: {2,3}]
  %s4 = inlined_call_operand.vmem [shape: f32[1,256], index: 4, kind: input, shape index: {}]
  %s5 = inlined_call_operand.vmem [shape: f32[256,1], index: 5, kind: input, shape index: {}]
  %s6 = inlined_call_operand.vmem [shape: f32[1,128], index: 6, kind: input, shape index: {}]
  %s7 = inlined_call_operand.vmem [shape: bf16[128,128], index: 7, kind: input, shape index: {}]
  %s8 = inlined_call_operand.vmem [shape: f32[1,128], index: 8, kind: input, shape index: {}]
  %s9 = inlined_call_operand.vmem [shape: f32[256,128], index: 9, kind: output, shape index: {}]
  %s10 = sld [smem:[#allocation0]]
  $region77: #{supergat_forward.3} parent=0
    _
  %s12 = ssub.s32 1, %s10
  %s13 = scalar_select 0, %s12, %s10
  %s15 = sshll.u32 %s0, 4
  %s16 = int_to_ptr.vmem [resolvable:$true] %s15
  %18 = dma.vmem_to_smem %s16, 16, [#allocation6], [#allocation5]
  %20 = dma.done [#allocation5], 16
  %21 = sfence
  loop: start=0, step=1, limit=4
  $region2: #{supergat_forward.3} parent=0 // loop_pre_header
    _
  $region3: #{supergat_forward.3} parent=0 // loop_header
    %s23 = sphi 0, %s27
    %p24 = scmp.ge.s32.totalorder %s23, 4
    %s30 = sphi 0, %s42
    %s31 = sphi 0, %s38
    %s32 = sphi 0, %s30
    %s33 = sphi 0, %s31
    %s34 = sphi 0, %s32
    %s35 = sphi 0, %s33
    %s47 = sphi 0, %s49
    %s50 = sphi 0, %s47
    %s51 = sphi 0, %s50
    %s67 = sphi 0, %s51
    %s73 = sphi 0, %s75
    %s76 = sphi 0, %s73
    %s77 = sphi 0, %s76
    %s93 = sphi 0, %s77
    %s99 = sphi 0, %s101
    %s102 = sphi 0, %s99
    %s103 = sphi 0, %s102
    %s119 = sphi 0, %s103
    %s125 = sphi 0, %s127
    %s128 = sphi 0, %s125
    %s129 = sphi 0, %s128
    %s145 = sphi 0, %s129
    %s151 = sphi 0, %s153
    %s154 = sphi 0, %s151
    %s155 = sphi 0, %s154
    %s171 = sphi 0, %s155
    %s175 = sphi 0, %s175
    %s177 = sphi 0, %s175
    %s178 = sphi 0, %s177
    %s192 = sphi 0, %s178
    %s196 = sphi 0, %s196
    %s198 = sphi 0, %s196
    %s199 = sphi 0, %s198
    %s213 = sphi 0, %s199
    %s217 = sphi 0, %s217
    %s219 = sphi 0, %s217
    %s220 = sphi 0, %s219
    %s234 = sphi 0, %s220
    %s240 = sphi 0, %s242
    %s243 = sphi 0, %s240
    %s244 = sphi 0, %s243
    %s260 = sphi 0, %s244
  $region4: #{supergat_forward.3} parent=0 // loop_header_branch
    %26 = sbr.rel (%p24) target = $region8
  $region5: #{supergat_forward.3} parent=0 // loop_body
    %s28 = ssub.s32 %s23, 1
    %s29 = ssub.s32 %s23, 2
    %s36 = sadd.s32 1, %s31
    %p37 = scmp.ge.s32.totalorder %s36, 1
    %s38 = scalar_select %p37, 0, %s36
    %s39 = sadd.s32 1, %s30
    %s40 = scalar_select %p37, %s39, %s30
    %p41 = scmp.ge.s32.totalorder %s40, 2
    %s42 = scalar_select %p41, 0, %s40
    %s43 = ssub.s32 %s30, %s42
    %s44 = ssub.s32 %s31, %s38
    %s45 = sor.u32 %s43, %s44
    %p46 = scmp.eq.s32.totalorder %s45, 0
    %s48 = sadd.s32 %s47, 1
    %s49 = scalar_select %p46, %s47, %s48
    %p52 = pneg %p46
    %p53 = scmp.eq.s32.totalorder %s23, 1
    %p54 = por %p52, %p53
    %p55 = scmp.ne.s32.totalorder %s47, %s50
    %p56 = scmp.eq.s32.totalorder %s23, 0
    %p57 = por %p55, %p56
    %p58 = scmp.ne.s32.totalorder %s47, %s50
    %p59 = scmp.eq.s32.totalorder %s28, 1
    %p60 = por %p58, %p59
    %p61 = scmp.ne.s32.totalorder %s50, %s51
    %p62 = scmp.eq.s32.totalorder %s28, 0
    %p63 = por %p61, %p62
    %p64 = scmp.ne.s32.totalorder %s50, %s51
    %p65 = scmp.eq.s32.totalorder %s29, 1
    %p66 = por %p64, %p65
    %p68 = scmp.ne.s32.totalorder %s51, %s67
    %p69 = scmp.eq.s32.totalorder %s29, 0
    %p70 = por %p68, %p69
    %s71 = ssub.s32 %s30, %s42
    %p72 = scmp.eq.s32.totalorder %s71, 0
    %s74 = sadd.s32 %s73, 1
    %s75 = scalar_select %p72, %s73, %s74
    %p78 = pneg %p72
    %p79 = scmp.eq.s32.totalorder %s23, 1
    %p80 = por %p78, %p79
    %p81 = scmp.ne.s32.totalorder %s73, %s76
    %p82 = scmp.eq.s32.totalorder %s23, 0
    %p83 = por %p81, %p82
    %p84 = scmp.ne.s32.totalorder %s73, %s76
    %p85 = scmp.eq.s32.totalorder %s28, 1
    %p86 = por %p84, %p85
    %p87 = scmp.ne.s32.totalorder %s76, %s77
    %p88 = scmp.eq.s32.totalorder %s28, 0
    %p89 = por %p87, %p88
    %p90 = scmp.ne.s32.totalorder %s76, %s77
    %p91 = scmp.eq.s32.totalorder %s29, 1
    %p92 = por %p90, %p91
    %p94 = scmp.ne.s32.totalorder %s77, %s93
    %p95 = scmp.eq.s32.totalorder %s29, 0
    %p96 = por %p94, %p95
    %s97 = ssub.s32 %s31, %s38
    %p98 = scmp.eq.s32.totalorder %s97, 0
    %s100 = sadd.s32 %s99, 1
    %s101 = scalar_select %p98, %s99, %s100
    %p104 = pneg %p98
    %p105 = scmp.eq.s32.totalorder %s23, 1
    %p106 = por %p104, %p105
    %p107 = scmp.ne.s32.totalorder %s99, %s102
    %p108 = scmp.eq.s32.totalorder %s23, 0
    %p109 = por %p107, %p108
    %p110 = scmp.ne.s32.totalorder %s99, %s102
    %p111 = scmp.eq.s32.totalorder %s28, 1
    %p112 = por %p110, %p111
    %p113 = scmp.ne.s32.totalorder %s102, %s103
    %p114 = scmp.eq.s32.totalorder %s28, 0
    %p115 = por %p113, %p114
    %p116 = scmp.ne.s32.totalorder %s102, %s103
    %p117 = scmp.eq.s32.totalorder %s29, 1
    %p118 = por %p116, %p117
    %p120 = scmp.ne.s32.totalorder %s103, %s119
    %p121 = scmp.eq.s32.totalorder %s29, 0
    %p122 = por %p120, %p121
    %s123 = ssub.s32 %s31, %s38
    %p124 = scmp.eq.s32.totalorder %s123, 0
    %s126 = sadd.s32 %s125, 1
    %s127 = scalar_select %p124, %s125, %s126
    %p130 = pneg %p124
    %p131 = scmp.eq.s32.totalorder %s23, 1
    %p132 = por %p130, %p131
    %p133 = scmp.ne.s32.totalorder %s125, %s128
    %p134 = scmp.eq.s32.totalorder %s23, 0
    %p135 = por %p133, %p134
    %p136 = scmp.ne.s32.totalorder %s125, %s128
    %p137 = scmp.eq.s32.totalorder %s28, 1
    %p138 = por %p136, %p137
    %p139 = scmp.ne.s32.totalorder %s128, %s129
    %p140 = scmp.eq.s32.totalorder %s28, 0
    %p141 = por %p139, %p140
    %p142 = scmp.ne.s32.totalorder %s128, %s129
    %p143 = scmp.eq.s32.totalorder %s29, 1
    %p144 = por %p142, %p143
    %p146 = scmp.ne.s32.totalorder %s129, %s145
    %p147 = scmp.eq.s32.totalorder %s29, 0
    %p148 = por %p146, %p147
    %s149 = ssub.s32 %s30, %s42
    %p150 = scmp.eq.s32.totalorder %s149, 0
    %s152 = sadd.s32 %s151, 1
    %s153 = scalar_select %p150, %s151, %s152
    %p156 = pneg %p150
    %p157 = scmp.eq.s32.totalorder %s23, 1
    %p158 = por %p156, %p157
    %p159 = scmp.ne.s32.totalorder %s151, %s154
    %p160 = scmp.eq.s32.totalorder %s23, 0
    %p161 = por %p159, %p160
    %p162 = scmp.ne.s32.totalorder %s151, %s154
    %p163 = scmp.eq.s32.totalorder %s28, 1
    %p164 = por %p162, %p163
    %p165 = scmp.ne.s32.totalorder %s154, %s155
    %p166 = scmp.eq.s32.totalorder %s28, 0
    %p167 = por %p165, %p166
    %p168 = scmp.ne.s32.totalorder %s154, %s155
    %p169 = scmp.eq.s32.totalorder %s29, 1
    %p170 = por %p168, %p169
    %p172 = scmp.ne.s32.totalorder %s155, %s171
    %p173 = scmp.eq.s32.totalorder %s29, 0
    %p174 = por %p172, %p173
    %s176 = sadd.s32 %s175, 1
    %p179 = scmp.eq.s32.totalorder %s23, 1
    %p180 = scmp.ne.s32.totalorder %s175, %s177
    %p181 = scmp.eq.s32.totalorder %s23, 0
    %p182 = por %p180, %p181
    %p183 = scmp.ne.s32.totalorder %s175, %s177
    %p184 = scmp.eq.s32.totalorder %s28, 1
    %p185 = por %p183, %p184
    %p186 = scmp.ne.s32.totalorder %s177, %s178
    %p187 = scmp.eq.s32.totalorder %s28, 0
    %p188 = por %p186, %p187
    %p189 = scmp.ne.s32.totalorder %s177, %s178
    %p190 = scmp.eq.s32.totalorder %s29, 1
    %p191 = por %p189, %p190
    %p193 = scmp.ne.s32.totalorder %s178, %s192
    %p194 = scmp.eq.s32.totalorder %s29, 0
    %p195 = por %p193, %p194
    %s197 = sadd.s32 %s196, 1
    %p200 = scmp.eq.s32.totalorder %s23, 1
    %p201 = scmp.ne.s32.totalorder %s196, %s198
    %p202 = scmp.eq.s32.totalorder %s23, 0
    %p203 = por %p201, %p202
    %p204 = scmp.ne.s32.totalorder %s196, %s198
    %p205 = scmp.eq.s32.totalorder %s28, 1
    %p206 = por %p204, %p205
    %p207 = scmp.ne.s32.totalorder %s198, %s199
    %p208 = scmp.eq.s32.totalorder %s28, 0
    %p209 = por %p207, %p208
    %p210 = scmp.ne.s32.totalorder %s198, %s199
    %p211 = scmp.eq.s32.totalorder %s29, 1
    %p212 = por %p210, %p211
    %p214 = scmp.ne.s32.totalorder %s199, %s213
    %p215 = scmp.eq.s32.totalorder %s29, 0
    %p216 = por %p214, %p215
    %s218 = sadd.s32 %s217, 1
    %p221 = scmp.eq.s32.totalorder %s23, 1
    %p222 = scmp.ne.s32.totalorder %s217, %s219
    %p223 = scmp.eq.s32.totalorder %s23, 0
    %p224 = por %p222, %p223
    %p225 = scmp.ne.s32.totalorder %s217, %s219
    %p226 = scmp.eq.s32.totalorder %s28, 1
    %p227 = por %p225, %p226
    %p228 = scmp.ne.s32.totalorder %s219, %s220
    %p229 = scmp.eq.s32.totalorder %s28, 0
    %p230 = por %p228, %p229
    %p231 = scmp.ne.s32.totalorder %s219, %s220
    %p232 = scmp.eq.s32.totalorder %s29, 1
    %p233 = por %p231, %p232
    %p235 = scmp.ne.s32.totalorder %s220, %s234
    %p236 = scmp.eq.s32.totalorder %s29, 0
    %p237 = por %p235, %p236
    %s238 = ssub.s32 %s30, %s42
    %p239 = scmp.eq.s32.totalorder %s238, 0
    %s241 = sadd.s32 %s240, 1
    %s242 = scalar_select %p239, %s240, %s241
    %p245 = pneg %p239
    %p246 = scmp.eq.s32.totalorder %s23, 1
    %p247 = por %p245, %p246
    %p248 = scmp.ne.s32.totalorder %s240, %s243
    %p249 = scmp.eq.s32.totalorder %s23, 0
    %p250 = por %p248, %p249
    %p251 = scmp.ne.s32.totalorder %s240, %s243
    %p252 = scmp.eq.s32.totalorder %s28, 1
    %p253 = por %p251, %p252
    %p254 = scmp.ne.s32.totalorder %s243, %s244
    %p255 = scmp.eq.s32.totalorder %s28, 0
    %p256 = por %p254, %p255
    %p257 = scmp.ne.s32.totalorder %s243, %s244
    %p258 = scmp.eq.s32.totalorder %s29, 1
    %p259 = por %p257, %p258
    %p261 = scmp.ne.s32.totalorder %s244, %s260
    %p262 = scmp.eq.s32.totalorder %s29, 0
    %p263 = por %p261, %p262
    %p264 = scmp.le.s32.totalorder 1, %s23
    %p265 = scmp.lt.s32.totalorder %s23, 3
    %p266 = pnand %p264, %p265
    %p267 = pneg %p266
    // Predicated region
    $region9: #{supergat_forward.3} parent=5 // pred_check
      _
    $region10: #{supergat_forward.3} parent=5 // pred_check_branch
      %269 = sbr.rel (%p266) target = $region12
    $region11: #{supergat_forward.3} parent=5 // pred_region
      %s270 = ssub.s32 %s23, 1
      // Predicated region
      $region13: #{supergat_forward.3} parent=11 // pred_check
        %p271 = pneg %p115
      $region14: #{supergat_forward.3} parent=11 // pred_check_branch
        %273 = sbr.rel (%p271) target = $region16
      $region15: #{supergat_forward.3} parent=11 // pred_region
        %s274 = smul.u32 32, %s33
        %p275 = scmp.lt.s32.totalorder %s274, 31
        %s276 = scalar_select %p275, %s274, 31
        %s277 = smul.addr %s276, 4
        %s278 = scalar_lea.vmem %s3, %s277
        %s279 = smul.u32 32, %s33
      $region16: #{supergat_forward.3} parent=11 // pred_fallthru
        _
      // Predicated region
      $region17: #{supergat_forward.3} parent=11 // pred_check
        %p280 = pneg %p141
      $region18: #{supergat_forward.3} parent=11 // pred_check_branch
        %282 = sbr.rel (%p280) target = $region20
      $region19: #{supergat_forward.3} parent=11 // pred_region
        %s283 = smul.u32 2, %s33
        %p284 = scmp.lt.s32.totalorder %s283, 1
        %s285 = scalar_select %p284, %s283, 1
        %s286 = scalar_lea.vmem %s4, %s285
        %s287 = smul.u32 2, %s33
      $region20: #{supergat_forward.3} parent=11 // pred_fallthru
        _
      // Predicated region
      $region21: #{supergat_forward.3} parent=11 // pred_check
        %p288 = pneg %p188
      $region22: #{supergat_forward.3} parent=11 // pred_check_branch
        %290 = sbr.rel (%p288) target = $region24
      $region23: #{supergat_forward.3} parent=11 // pred_region
        _
      $region24: #{supergat_forward.3} parent=11 // pred_fallthru
        _
      // Predicated region
      $region25: #{supergat_forward.3} parent=11 // pred_check
        %p291 = pneg %p209
      $region26: #{supergat_forward.3} parent=11 // pred_check_branch
        %293 = sbr.rel (%p291) target = $region28
      $region27: #{supergat_forward.3} parent=11 // pred_region
        _
      $region28: #{supergat_forward.3} parent=11 // pred_fallthru
        _
      // Predicated region
      $region29: #{supergat_forward.3} parent=11 // pred_check
        %p294 = pneg %p230
      $region30: #{supergat_forward.3} parent=11 // pred_check_branch
        %296 = sbr.rel (%p294) target = $region32
      $region31: #{supergat_forward.3} parent=11 // pred_region
        _
      $region32: #{supergat_forward.3} parent=11 // pred_fallthru
        _
    $region12: #{supergat_forward.3} parent=5 // pred_fallthru
      _
    %p297 = scmp.lt.s32.totalorder %s23, 2
    // Predicated region
    $region33: #{supergat_forward.3} parent=5 // pred_check
      %p298 = pneg %p297
    $region34: #{supergat_forward.3} parent=5 // pred_check_branch
      %300 = sbr.rel (%p298) target = $region36
    $region35: #{supergat_forward.3} parent=5 // pred_region
      // Predicated region
      $region37: #{supergat_forward.3} parent=35 // pred_check
        %p301 = pneg %p57
      $region38: #{supergat_forward.3} parent=35 // pred_check_branch
        %303 = sbr.rel (%p301) target = $region40
      $region39: #{supergat_forward.3} parent=35 // pred_region
        %s304 = smul.u32 4, %s30
        %s305 = smul.u32 2, %s31
        %p306 = scmp.lt.s32.totalorder %s304, 7
        %s307 = scalar_select %p306, %s304, 7
        %p308 = scmp.lt.s32.totalorder %s305, 1
        %s309 = scalar_select %p308, %s305, 1
        %s310 = smul.addr %s307, 2
        %s311 = sadd.s32 %s309, %s310
        %s312 = smul.addr %s311, 8
        %s313 = scalar_lea.vmem %s1, %s312
        %s314 = smul.u32 4, %s30
        %s315 = smul.u32 2, %s31
      $region40: #{supergat_forward.3} parent=35 // pred_fallthru
        _
      // Predicated region
      $region41: #{supergat_forward.3} parent=35 // pred_check
        %p316 = pneg %p83
      $region42: #{supergat_forward.3} parent=35 // pred_check_branch
        %318 = sbr.rel (%p316) target = $region44
      $region43: #{supergat_forward.3} parent=35 // pred_region
        %s319 = smul.u32 16, %s30
        %p320 = scmp.lt.s32.totalorder %s319, 31
        %s321 = scalar_select %p320, %s319, 31
        %s322 = smul.addr %s321, 4
        %s323 = scalar_lea.vmem %s2, %s322
        %s324 = smul.u32 16, %s30
      $region44: #{supergat_forward.3} parent=35 // pred_fallthru
        _
      // Predicated region
      $region45: #{supergat_forward.3} parent=35 // pred_check
        %p325 = pneg %p161
      $region46: #{supergat_forward.3} parent=35 // pred_check_branch
        %327 = sbr.rel (%p325) target = $region48
      $region47: #{supergat_forward.3} parent=35 // pred_region
        %s328 = smul.u32 16, %s30
        %p329 = scmp.lt.s32.totalorder %s328, 31
        %s330 = scalar_select %p329, %s328, 31
        %s331 = smul.addr %s330, 8
        %s332 = scalar_lea.vmem %s5, %s331
        %s333 = smul.u32 16, %s30
      $region48: #{supergat_forward.3} parent=35 // pred_fallthru
        _
    $region36: #{supergat_forward.3} parent=5 // pred_fallthru
      _
    %p334 = scmp.le.s32.totalorder 1, %s23
    %p335 = scmp.lt.s32.totalorder %s23, 3
    %p336 = pnand %p334, %p335
    %p337 = pneg %p336
    // Predicated region
    $region49: #{supergat_forward.3} parent=5 // pred_check
      _
    $region50: #{supergat_forward.3} parent=5 // pred_check_branch
      %339 = sbr.rel (%p336) target = $region52
    $region51: #{supergat_forward.3} parent=5 // pred_region
      %s340 = ssub.s32 %s23, 1
      %s341 = smul.u32 4, %s32
      %s342 = smul.u32 2, %s33
      %p343 = scmp.lt.s32.totalorder %s341, 7
      %s344 = scalar_select %p343, %s341, 7
      %p345 = scmp.lt.s32.totalorder %s342, 1
      %s346 = scalar_select %p345, %s342, 1
      %s347 = smul.addr %s344, 2
      %s348 = sadd.s32 %s346, %s347
      %s349 = smul.addr %s348, 8
      %s350 = scalar_lea.vmem %s1, %s349
      %p351 = pneg %p63
      %p352 = pneg %p60
      %s353 = smul.u32 16, %s32
      %p354 = scmp.lt.s32.totalorder %s353, 31
      %s355 = scalar_select %p354, %s353, 31
      %s356 = smul.addr %s355, 4
      %s357 = scalar_lea.vmem %s2, %s356
      %p358 = pneg %p89
      %p359 = pneg %p86
      %s360 = smul.u32 32, %s33
      %p361 = scmp.lt.s32.totalorder %s360, 31
      %s362 = scalar_select %p361, %s360, 31
      %s363 = smul.addr %s362, 4
      %s364 = scalar_lea.vmem %s3, %s363
      %p365 = pneg %p115
      %p366 = pneg %p112
      %s367 = smul.u32 2, %s33
      %p368 = scmp.lt.s32.totalorder %s367, 1
      %s369 = scalar_select %p368, %s367, 1
      %s370 = scalar_lea.vmem %s4, %s369
      %p371 = pneg %p141
      %p372 = pneg %p138
      %s373 = smul.u32 16, %s32
      %p374 = scmp.lt.s32.totalorder %s373, 31
      %s375 = scalar_select %p374, %s373, 31
      %s376 = smul.addr %s375, 8
      %s377 = scalar_lea.vmem %s5, %s376
      %p378 = pneg %p167
      %p379 = pneg %p164
      %p380 = pneg %p188
      %p381 = pneg %p185
      %p382 = pneg %p209
      %p383 = pneg %p206
      %p384 = pneg %p230
      %p385 = pneg %p227
      %p386 = pneg %p256
      %p387 = pneg %p253
      %s388 = smul.u32 16, %s32
      %p389 = scmp.lt.s32.totalorder %s388, 31
      %s390 = scalar_select %p389, %s388, 31
      %s391 = smul.addr %s390, 8
      %s392 = scalar_lea.vmem %s9, %s391
      %s393 = smul.u32 4, %s32
      %s394 = smul.u32 2, %s33
      %p395 = scmp.lt.s32.totalorder %s393, 7
      %s396 = scalar_select %p395, %s393, 7
      %p397 = scmp.lt.s32.totalorder %s394, 1
      %s398 = scalar_select %p397, %s394, 1
      %s399 = smul.addr %s396, 2
      %s400 = sadd.s32 %s398, %s399
      %s401 = smul.addr %s400, 8
      %s402 = scalar_lea.vmem %s1, %s401
      %s403 = smul.u32 4, %s32
      %s404 = smul.u32 2, %s33
      %s405 = smul.u32 16, %s32
      %p406 = scmp.lt.s32.totalorder %s405, 31
      %s407 = scalar_select %p406, %s405, 31
      %s408 = smul.addr %s407, 4
      %s409 = scalar_lea.vmem %s2, %s408
      %s410 = smul.u32 16, %s32
      %s411 = smul.u32 32, %s33
      %p412 = scmp.lt.s32.totalorder %s411, 31
      %s413 = scalar_select %p412, %s411, 31
      %s414 = smul.addr %s413, 4
      %s415 = scalar_lea.vmem %s3, %s414
      %s416 = smul.u32 32, %s33
      %s417 = smul.u32 2, %s33
      %p418 = scmp.lt.s32.totalorder %s417, 1
      %s419 = scalar_select %p418, %s417, 1
      %s420 = scalar_lea.vmem %s4, %s419
      %s421 = smul.u32 2, %s33
      %s422 = smul.u32 16, %s32
      %p423 = scmp.lt.s32.totalorder %s422, 31
      %s424 = scalar_select %p423, %s422, 31
      %s425 = smul.addr %s424, 8
      %s426 = scalar_lea.vmem %s5, %s425
      %s427 = smul.u32 16, %s32
      %s428 = smul.u32 16, %s32
      %p429 = scmp.lt.s32.totalorder %s428, 31
      %s430 = scalar_select %p429, %s428, 31
      %s431 = smul.addr %s430, 8
      %s432 = scalar_lea.vmem %s9, %s431
      %s433 = smul.u32 16, %s32
      %p434 = scmp.eq.s32.totalorder %s33, 0
      // Predicated region
      $region53: #{supergat_forward.3} parent=51 // pred_check
        %p435 = pneg %p434
      $region54: #{supergat_forward.3} parent=51 // pred_check_branch
        %437 = sbr.rel (%p435) target = $region56
      $region55: #{supergat_forward.3} parent=51 // pred_region
        %vm438 = vcmask 7168
        %439 = vst.msk [vmem:[#allocation2] sm:$0xff] %vm438, -1e+30
        %440 = vst.msk [vmem:[#allocation2 + $0x8] sm:$0xff] %vm438, -1e+30
        %441 = vst.msk [vmem:[#allocation2 + $0x10] sm:$0xff] %vm438, -1e+30
        %442 = vst.msk [vmem:[#allocation2 + $0x18] sm:$0xff] %vm438, -1e+30
        %443 = vst.msk [vmem:[#allocation2 + $0x20] sm:$0xff] %vm438, -1e+30
        %444 = vst.msk [vmem:[#allocation2 + $0x28] sm:$0xff] %vm438, -1e+30
        %445 = vst.msk [vmem:[#allocation2 + $0x30] sm:$0xff] %vm438, -1e+30
        %446 = vst.msk [vmem:[#allocation2 + $0x38] sm:$0xff] %vm438, -1e+30
        %447 = vst.msk [vmem:[#allocation2 + $0x40] sm:$0xff] %vm438, -1e+30
        %448 = vst.msk [vmem:[#allocation2 + $0x48] sm:$0xff] %vm438, -1e+30
        %449 = vst.msk [vmem:[#allocation2 + $0x50] sm:$0xff] %vm438, -1e+30
        %450 = vst.msk [vmem:[#allocation2 + $0x58] sm:$0xff] %vm438, -1e+30
        %451 = vst.msk [vmem:[#allocation2 + $0x60] sm:$0xff] %vm438, -1e+30
        %452 = vst.msk [vmem:[#allocation2 + $0x68] sm:$0xff] %vm438, -1e+30
        %453 = vst.msk [vmem:[#allocation2 + $0x70] sm:$0xff] %vm438, -1e+30
        %454 = vst.msk [vmem:[#allocation2 + $0x78] sm:$0xff] %vm438, -1e+30
        %455 = vst.msk [vmem:[#allocation3] sm:$0xff] %vm438, 0.0
        %456 = vst.msk [vmem:[#allocation3 + $0x8] sm:$0xff] %vm438, 0.0
        %457 = vst.msk [vmem:[#allocation3 + $0x10] sm:$0xff] %vm438, 0.0
        %458 = vst.msk [vmem:[#allocation3 + $0x18] sm:$0xff] %vm438, 0.0
        %459 = vst.msk [vmem:[#allocation3 + $0x20] sm:$0xff] %vm438, 0.0
        %460 = vst.msk [vmem:[#allocation3 + $0x28] sm:$0xff] %vm438, 0.0
        %461 = vst.msk [vmem:[#allocation3 + $0x30] sm:$0xff] %vm438, 0.0
        %462 = vst.msk [vmem:[#allocation3 + $0x38] sm:$0xff] %vm438, 0.0
        %463 = vst.msk [vmem:[#allocation3 + $0x40] sm:$0xff] %vm438, 0.0
        %464 = vst.msk [vmem:[#allocation3 + $0x48] sm:$0xff] %vm438, 0.0
        %465 = vst.msk [vmem:[#allocation3 + $0x50] sm:$0xff] %vm438, 0.0
        %466 = vst.msk [vmem:[#allocation3 + $0x58] sm:$0xff] %vm438, 0.0
        %467 = vst.msk [vmem:[#allocation3 + $0x60] sm:$0xff] %vm438, 0.0
        %468 = vst.msk [vmem:[#allocation3 + $0x68] sm:$0xff] %vm438, 0.0
        %469 = vst.msk [vmem:[#allocation3 + $0x70] sm:$0xff] %vm438, 0.0
        %470 = vst.msk [vmem:[#allocation3 + $0x78] sm:$0xff] %vm438, 0.0
        %471 = vst [vmem:[#allocation4] sm:$0xff] 0.0
        %472 = vst [vmem:[#allocation4 + $0x8] sm:$0xff] 0.0
        %473 = vst [vmem:[#allocation4 + $0x10] sm:$0xff] 0.0
        %474 = vst [vmem:[#allocation4 + $0x18] sm:$0xff] 0.0
        %475 = vst [vmem:[#allocation4 + $0x20] sm:$0xff] 0.0
        %476 = vst [vmem:[#allocation4 + $0x28] sm:$0xff] 0.0
        %477 = vst [vmem:[#allocation4 + $0x30] sm:$0xff] 0.0
        %478 = vst [vmem:[#allocation4 + $0x38] sm:$0xff] 0.0
        %479 = vst [vmem:[#allocation4 + $0x40] sm:$0xff] 0.0
        %480 = vst [vmem:[#allocation4 + $0x48] sm:$0xff] 0.0
        %481 = vst [vmem:[#allocation4 + $0x50] sm:$0xff] 0.0
        %482 = vst [vmem:[#allocation4 + $0x58] sm:$0xff] 0.0
        %483 = vst [vmem:[#allocation4 + $0x60] sm:$0xff] 0.0
        %484 = vst [vmem:[#allocation4 + $0x68] sm:$0xff] 0.0
        %485 = vst [vmem:[#allocation4 + $0x70] sm:$0xff] 0.0
        %486 = vst [vmem:[#allocation4 + $0x78] sm:$0xff] 0.0
      $region56: #{supergat_forward.3} parent=51 // pred_fallthru
        _
      %s487 = sadd.s32 %s32, %s33
      %s488 = sld [smem:[#allocation6 + %s487]]
      %p489 = scmp.ne.s32.totalorder %s488, 0
      // Predicated region
      $region57: #{supergat_forward.3} parent=51 // pred_check
        %p490 = pneg %p489
      $region58: #{supergat_forward.3} parent=51 // pred_check_branch
        %492 = sbr.rel (%p490) target = $region60
      $region59: #{supergat_forward.3} parent=51 // pred_region
        %v493 = vld [vmem:[%s409] sm:$0xf]
        %v494 = vld [vmem:[%s409 + $0x4] sm:$0xf]
        %v495 = vld [vmem:[%s409 + $0x8] sm:$0xf]
        %v496 = vld [vmem:[%s409 + $0xc] sm:$0xf]
        %v497 = vld [vmem:[%s409 + $0x10] sm:$0xf]
        %v498 = vld [vmem:[%s409 + $0x14] sm:$0xf]
        %v499 = vld [vmem:[%s409 + $0x18] sm:$0xf]
        %v500 = vld [vmem:[%s409 + $0x1c] sm:$0xf]
        %v501 = vld [vmem:[%s409 + $0x20] sm:$0xf]
        %v502 = vld [vmem:[%s409 + $0x24] sm:$0xf]
        %v503 = vld [vmem:[%s409 + $0x28] sm:$0xf]
        %v504 = vld [vmem:[%s409 + $0x2c] sm:$0xf]
        %v505 = vld [vmem:[%s409 + $0x30] sm:$0xf]
        %v506 = vld [vmem:[%s409 + $0x34] sm:$0xf]
        %v507 = vld [vmem:[%s409 + $0x38] sm:$0xf]
        %v508 = vld [vmem:[%s409 + $0x3c] sm:$0xf]
        %v509 = vld [vmem:[%s415] sm:$0xf]
        %v510 = vld [vmem:[%s415 + $0x4] sm:$0xf]
        %v511 = vld [vmem:[%s415 + $0x8] sm:$0xf]
        %v512 = vld [vmem:[%s415 + $0xc] sm:$0xf]
        %v513 = vld [vmem:[%s415 + $0x10] sm:$0xf]
        %v514 = vld [vmem:[%s415 + $0x14] sm:$0xf]
        %v515 = vld [vmem:[%s415 + $0x18] sm:$0xf]
        %v516 = vld [vmem:[%s415 + $0x1c] sm:$0xf]
        %v517 = vld [vmem:[%s415 + $0x20] sm:$0xf]
        %v518 = vld [vmem:[%s415 + $0x24] sm:$0xf]
        %v519 = vld [vmem:[%s415 + $0x28] sm:$0xf]
        %v520 = vld [vmem:[%s415 + $0x2c] sm:$0xf]
        %v521 = vld [vmem:[%s415 + $0x30] sm:$0xf]
        %v522 = vld [vmem:[%s415 + $0x34] sm:$0xf]
        %v523 = vld [vmem:[%s415 + $0x38] sm:$0xf]
        %v524 = vld [vmem:[%s415 + $0x3c] sm:$0xf]
        %v525 = vld [vmem:[%s415 + $0x40] sm:$0xf]
        %v526 = vld [vmem:[%s415 + $0x44] sm:$0xf]
        %v527 = vld [vmem:[%s415 + $0x48] sm:$0xf]
        %v528 = vld [vmem:[%s415 + $0x4c] sm:$0xf]
        %v529 = vld [vmem:[%s415 + $0x50] sm:$0xf]
        %v530 = vld [vmem:[%s415 + $0x54] sm:$0xf]
        %v531 = vld [vmem:[%s415 + $0x58] sm:$0xf]
        %v532 = vld [vmem:[%s415 + $0x5c] sm:$0xf]
        %v533 = vld [vmem:[%s415 + $0x60] sm:$0xf]
        %v534 = vld [vmem:[%s415 + $0x64] sm:$0xf]
        %v535 = vld [vmem:[%s415 + $0x68] sm:$0xf]
        %v536 = vld [vmem:[%s415 + $0x6c] sm:$0xf]
        %v537 = vld [vmem:[%s415 + $0x70] sm:$0xf]
        %v538 = vld [vmem:[%s415 + $0x74] sm:$0xf]
        %v539 = vld [vmem:[%s415 + $0x78] sm:$0xf]
        %v540 = vld [vmem:[%s415 + $0x7c] sm:$0xf]
        %v541 = vld [vmem:[%s402] sm:$0xff]
        %v542 = vld [vmem:[%s402 + $0x8] sm:$0xff]
        %v543 = vld [vmem:[%s402 + $0x10] sm:$0xff]
        %v544 = vld [vmem:[%s402 + $0x18] sm:$0xff]
        %v545 = vld [vmem:[%s402 + $0x20] sm:$0xff]
        %v546 = vld [vmem:[%s402 + $0x28] sm:$0xff]
        %v547 = vld [vmem:[%s402 + $0x30] sm:$0xff]
        %v548 = vld [vmem:[%s402 + $0x38] sm:$0xff]
        %v549 = vunpack.c.0.s8 %v541
        %v550 = vunpack.c.0.s8 %v542
        %v551 = vunpack.c.1.s8 %v541
        %v552 = vunpack.c.1.s8 %v542
        %v553 = vunpack.c.2.s8 %v541
        %v554 = vunpack.c.2.s8 %v542
        %v555 = vunpack.c.3.s8 %v541
        %v556 = vunpack.c.3.s8 %v542
        %v557 = vunpack.c.0.s8 %v543
        %v558 = vunpack.c.0.s8 %v544
        %v559 = vunpack.c.1.s8 %v543
        %v560 = vunpack.c.1.s8 %v544
        %v561 = vunpack.c.2.s8 %v543
        %v562 = vunpack.c.2.s8 %v544
        %v563 = vunpack.c.3.s8 %v543
        %v564 = vunpack.c.3.s8 %v544
        %v565 = vunpack.c.0.s8 %v545
        %v566 = vunpack.c.0.s8 %v546
        %v567 = vunpack.c.1.s8 %v545
        %v568 = vunpack.c.1.s8 %v546
        %v569 = vunpack.c.2.s8 %v545
        %v570 = vunpack.c.2.s8 %v546
        %v571 = vunpack.c.3.s8 %v545
        %v572 = vunpack.c.3.s8 %v546
        %v573 = vunpack.c.0.s8 %v547
        %v574 = vunpack.c.0.s8 %v548
        %v575 = vunpack.c.1.s8 %v547
        %v576 = vunpack.c.1.s8 %v548
        %v577 = vunpack.c.2.s8 %v547
        %v578 = vunpack.c.2.s8 %v548
        %v579 = vunpack.c.3.s8 %v547
        %v580 = vunpack.c.3.s8 %v548
        %v581 = vcvt.s32.f32 %v549
        %v582 = vcvt.s32.f32 %v550
        %v583 = vcvt.s32.f32 %v551
        %v584 = vcvt.s32.f32 %v552
        %v585 = vcvt.s32.f32 %v553
        %v586 = vcvt.s32.f32 %v554
        %v587 = vcvt.s32.f32 %v555
        %v588 = vcvt.s32.f32 %v556
        %v589 = vcvt.s32.f32 %v557
        %v590 = vcvt.s32.f32 %v558
        %v591 = vcvt.s32.f32 %v559
        %v592 = vcvt.s32.f32 %v560
        %v593 = vcvt.s32.f32 %v561
        %v594 = vcvt.s32.f32 %v562
        %v595 = vcvt.s32.f32 %v563
        %v596 = vcvt.s32.f32 %v564
        %v597 = vcvt.s32.f32 %v565
        %v598 = vcvt.s32.f32 %v566
        %v599 = vcvt.s32.f32 %v567
        %v600 = vcvt.s32.f32 %v568
        %v601 = vcvt.s32.f32 %v569
        %v602 = vcvt.s32.f32 %v570
        %v603 = vcvt.s32.f32 %v571
        %v604 = vcvt.s32.f32 %v572
        %v605 = vcvt.s32.f32 %v573
        %v606 = vcvt.s32.f32 %v574
        %v607 = vcvt.s32.f32 %v575
        %v608 = vcvt.s32.f32 %v576
        %v609 = vcvt.s32.f32 %v577
        %v610 = vcvt.s32.f32 %v578
        %v611 = vcvt.s32.f32 %v579
        %v612 = vcvt.s32.f32 %v580
        %v629 = vunpack.c.l.b16 %v493
        %v630 = vunpack.c.l.b16 %v494
        %v631 = vunpack.c.l.b16 %v495
        %v632 = vunpack.c.l.b16 %v496
        %v633 = vunpack.c.l.b16 %v497
        %v634 = vunpack.c.l.b16 %v498
        %v635 = vunpack.c.l.b16 %v499
        %v636 = vunpack.c.l.b16 %v500
        %v637 = vunpack.c.l.b16 %v501
        %v638 = vunpack.c.l.b16 %v502
        %v639 = vunpack.c.l.b16 %v503
        %v640 = vunpack.c.l.b16 %v504
        %v641 = vunpack.c.l.b16 %v505
        %v642 = vunpack.c.l.b16 %v506
        %v643 = vunpack.c.l.b16 %v507
        %v644 = vunpack.c.l.b16 %v508
        %v645 = vpack.c.b16 %v630, %v629
        %v646 = vpack.c.b16 %v632, %v631
        %v647 = vpack.c.b16 %v634, %v633
        %v648 = vpack.c.b16 %v636, %v635
        %v649 = vpack.c.b16 %v638, %v637
        %v650 = vpack.c.b16 %v640, %v639
        %v651 = vpack.c.b16 %v642, %v641
        %v652 = vpack.c.b16 %v644, %v643
        %v693 = vunpack.c.l.b16 %v509
        %v694 = vunpack.c.l.b16 %v510
        %v695 = vunpack.c.l.b16 %v511
        %v696 = vunpack.c.l.b16 %v512
        %v697 = vunpack.c.l.b16 %v513
        %v698 = vunpack.c.l.b16 %v514
        %v699 = vunpack.c.l.b16 %v515
        %v700 = vunpack.c.l.b16 %v516
        %v701 = vunpack.c.l.b16 %v517
        %v702 = vunpack.c.l.b16 %v518
        %v703 = vunpack.c.l.b16 %v519
        %v704 = vunpack.c.l.b16 %v520
        %v705 = vunpack.c.l.b16 %v521
        %v706 = vunpack.c.l.b16 %v522
        %v707 = vunpack.c.l.b16 %v523
        %v708 = vunpack.c.l.b16 %v524
        %v709 = vunpack.c.l.b16 %v525
        %v710 = vunpack.c.l.b16 %v526
        %v711 = vunpack.c.l.b16 %v527
        %v712 = vunpack.c.l.b16 %v528
        %v713 = vunpack.c.l.b16 %v529
        %v714 = vunpack.c.l.b16 %v530
        %v715 = vunpack.c.l.b16 %v531
        %v716 = vunpack.c.l.b16 %v532
        %v717 = vunpack.c.l.b16 %v533
        %v718 = vunpack.c.l.b16 %v534
        %v719 = vunpack.c.l.b16 %v535
        %v720 = vunpack.c.l.b16 %v536
        %v721 = vunpack.c.l.b16 %v537
        %v722 = vunpack.c.l.b16 %v538
        %v723 = vunpack.c.l.b16 %v539
        %v724 = vunpack.c.l.b16 %v540
        %v725 = vpack.c.b16 %v694, %v693
        %v726 = vpack.c.b16 %v696, %v695
        %v727 = vpack.c.b16 %v698, %v697
        %v728 = vpack.c.b16 %v700, %v699
        %v729 = vpack.c.b16 %v702, %v701
        %v730 = vpack.c.b16 %v704, %v703
        %v731 = vpack.c.b16 %v706, %v705
        %v732 = vpack.c.b16 %v708, %v707
        %v733 = vpack.c.b16 %v710, %v709
        %v734 = vpack.c.b16 %v712, %v711
        %v735 = vpack.c.b16 %v714, %v713
        %v736 = vpack.c.b16 %v716, %v715
        %v737 = vpack.c.b16 %v718, %v717
        %v738 = vpack.c.b16 %v720, %v719
        %v739 = vpack.c.b16 %v722, %v721
        %v740 = vpack.c.b16 %v724, %v723
        %757 = vmatpush.bf16.xpose.msra.mxu0 %v732
        %758 = vmatpush.bf16.xpose.msra.mxu0 %v731
        %759 = vmatpush.bf16.xpose.msra.mxu0 %v730
        %760 = vmatpush.bf16.xpose.msra.mxu0 %v729
        %761 = vmatpush.bf16.xpose.msra.mxu0 %v728
        %762 = vmatpush.bf16.xpose.msra.mxu0 %v727
        %763 = vmatpush.bf16.xpose.msra.mxu0 %v726
        %764 = vmatpush.bf16.xpose.msra.mxu0 %v725
        %765 = vmatmul.bf16.gmra.mxu0 %v645
        %v766 = vpop.f32.mrf.mxu0
        %v767 = vadd.f32 0.0, %v766
        %v768 = vpop.f32.mrf.mxu0
        %v769 = vadd.f32 0.0, %v768
        %770 = vmatmul.bf16.gmra.mxu0 %v646
        %v771 = vpop.f32.mrf.mxu0
        %v772 = vadd.f32 0.0, %v771
        %v773 = vpop.f32.mrf.mxu0
        %v774 = vadd.f32 0.0, %v773
        %775 = vmatmul.bf16.gmra.mxu0 %v647
        %v776 = vpop.f32.mrf.mxu0
        %v777 = vadd.f32 0.0, %v776
        %v778 = vpop.f32.mrf.mxu0
        %v779 = vadd.f32 0.0, %v778
        %780 = vmatmul.bf16.gmra.mxu0 %v648
        %v781 = vpop.f32.mrf.mxu0
        %v782 = vadd.f32 0.0, %v781
        %v783 = vpop.f32.mrf.mxu0
        %v784 = vadd.f32 0.0, %v783
        %785 = vmatmul.bf16.gmra.mxu0 %v649
        %v786 = vpop.f32.mrf.mxu0
        %v787 = vadd.f32 0.0, %v786
        %v788 = vpop.f32.mrf.mxu0
        %v789 = vadd.f32 0.0, %v788
        %790 = vmatmul.bf16.gmra.mxu0 %v650
        %v791 = vpop.f32.mrf.mxu0
        %v792 = vadd.f32 0.0, %v791
        %v793 = vpop.f32.mrf.mxu0
        %v794 = vadd.f32 0.0, %v793
        %795 = vmatmul.bf16.gmra.mxu0 %v651
        %v796 = vpop.f32.mrf.mxu0
        %v797 = vadd.f32 0.0, %v796
        %v798 = vpop.f32.mrf.mxu0
        %v799 = vadd.f32 0.0, %v798
        %800 = vmatmul.bf16.gmra.mxu0 %v652
        %v801 = vpop.f32.mrf.mxu0
        %v802 = vadd.f32 0.0, %v801
        %v803 = vpop.f32.mrf.mxu0
        %v804 = vadd.f32 0.0, %v803
        %805 = vdwg.mxu0
        %806 = vmatpush.bf16.xpose.msra.mxu0 %v740
        %807 = vmatpush.bf16.xpose.msra.mxu0 %v739
        %808 = vmatpush.bf16.xpose.msra.mxu0 %v738
        %809 = vmatpush.bf16.xpose.msra.mxu0 %v737
        %810 = vmatpush.bf16.xpose.msra.mxu0 %v736
        %811 = vmatpush.bf16.xpose.msra.mxu0 %v735
        %812 = vmatpush.bf16.xpose.msra.mxu0 %v734
        %813 = vmatpush.bf16.xpose.msra.mxu0 %v733
        %814 = vmatmul.bf16.gmra.mxu0 %v645
        %v815 = vpop.f32.mrf.mxu0
        %v816 = vadd.f32 0.0, %v815
        %v817 = vpop.f32.mrf.mxu0
        %v818 = vadd.f32 0.0, %v817
        %819 = vmatmul.bf16.gmra.mxu0 %v646
        %v820 = vpop.f32.mrf.mxu0
        %v821 = vadd.f32 0.0, %v820
        %v822 = vpop.f32.mrf.mxu0
        %v823 = vadd.f32 0.0, %v822
        %824 = vmatmul.bf16.gmra.mxu0 %v647
        %v825 = vpop.f32.mrf.mxu0
        %v826 = vadd.f32 0.0, %v825
        %v827 = vpop.f32.mrf.mxu0
        %v828 = vadd.f32 0.0, %v827
        %829 = vmatmul.bf16.gmra.mxu0 %v648
        %v830 = vpop.f32.mrf.mxu0
        %v831 = vadd.f32 0.0, %v830
        %v832 = vpop.f32.mrf.mxu0
        %v833 = vadd.f32 0.0, %v832
        %834 = vmatmul.bf16.gmra.mxu0 %v649
        %v835 = vpop.f32.mrf.mxu0
        %v836 = vadd.f32 0.0, %v835
        %v837 = vpop.f32.mrf.mxu0
        %v838 = vadd.f32 0.0, %v837
        %839 = vmatmul.bf16.gmra.mxu0 %v650
        %v840 = vpop.f32.mrf.mxu0
        %v841 = vadd.f32 0.0, %v840
        %v842 = vpop.f32.mrf.mxu0
        %v843 = vadd.f32 0.0, %v842
        %844 = vmatmul.bf16.gmra.mxu0 %v651
        %v845 = vpop.f32.mrf.mxu0
        %v846 = vadd.f32 0.0, %v845
        %v847 = vpop.f32.mrf.mxu0
        %v848 = vadd.f32 0.0, %v847
        %849 = vmatmul.bf16.gmra.mxu0 %v652
        %v850 = vpop.f32.mrf.mxu0
        %v851 = vadd.f32 0.0, %v850
        %v852 = vpop.f32.mrf.mxu0
        %v853 = vadd.f32 0.0, %v852
        %854 = vdwg.mxu0
        %v855 = vxor.u32 %v767, 2147483648
        %v856 = vxor.u32 %v816, 2147483648
        %v857 = vxor.u32 %v769, 2147483648
        %v858 = vxor.u32 %v818, 2147483648
        %v859 = vxor.u32 %v772, 2147483648
        %v860 = vxor.u32 %v821, 2147483648
        %v861 = vxor.u32 %v774, 2147483648
        %v862 = vxor.u32 %v823, 2147483648
        %v863 = vxor.u32 %v777, 2147483648
        %v864 = vxor.u32 %v826, 2147483648
        %v865 = vxor.u32 %v779, 2147483648
        %v866 = vxor.u32 %v828, 2147483648
        %v867 = vxor.u32 %v782, 2147483648
        %v868 = vxor.u32 %v831, 2147483648
        %v869 = vxor.u32 %v784, 2147483648
        %v870 = vxor.u32 %v833, 2147483648
        %v871 = vxor.u32 %v787, 2147483648
        %v872 = vxor.u32 %v836, 2147483648
        %v873 = vxor.u32 %v789, 2147483648
        %v874 = vxor.u32 %v838, 2147483648
        %v875 = vxor.u32 %v792, 2147483648
        %v876 = vxor.u32 %v841, 2147483648
        %v877 = vxor.u32 %v794, 2147483648
        %v878 = vxor.u32 %v843, 2147483648
        %v879 = vxor.u32 %v797, 2147483648
        %v880 = vxor.u32 %v846, 2147483648
        %v881 = vxor.u32 %v799, 2147483648
        %v882 = vxor.u32 %v848, 2147483648
        %v883 = vxor.u32 %v802, 2147483648
        %v884 = vxor.u32 %v851, 2147483648
        %v885 = vxor.u32 %v804, 2147483648
        %v886 = vxor.u32 %v853, 2147483648
        %v887 = vmul.f32 %v855, 1.442695
        %v888 = vpow.pop %v887
        %v889 = vmul.f32 %v856, 1.442695
        %v890 = vpow.pop %v889
        %v891 = vmul.f32 %v857, 1.442695
        %v892 = vpow.pop %v891
        %v893 = vmul.f32 %v858, 1.442695
        %v894 = vpow.pop %v893
        %v895 = vmul.f32 %v859, 1.442695
        %v896 = vpow.pop %v895
        %v897 = vmul.f32 %v860, 1.442695
        %v898 = vpow.pop %v897
        %v899 = vmul.f32 %v861, 1.442695
        %v900 = vpow.pop %v899
        %v901 = vmul.f32 %v862, 1.442695
        %v902 = vpow.pop %v901
        %v903 = vmul.f32 %v863, 1.442695
        %v904 = vpow.pop %v903
        %v905 = vmul.f32 %v864, 1.442695
        %v906 = vpow.pop %v905
        %v907 = vmul.f32 %v865, 1.442695
        %v908 = vpow.pop %v907
        %v909 = vmul.f32 %v866, 1.442695
        %v910 = vpow.pop %v909
        %v911 = vmul.f32 %v867, 1.442695
        %v912 = vpow.pop %v911
        %v913 = vmul.f32 %v868, 1.442695
        %v914 = vpow.pop %v913
        %v915 = vmul.f32 %v869, 1.442695
        %v916 = vpow.pop %v915
        %v917 = vmul.f32 %v870, 1.442695
        %v918 = vpow.pop %v917
        %v919 = vmul.f32 %v871, 1.442695
        %v920 = vpow.pop %v919
        %v921 = vmul.f32 %v872, 1.442695
        %v922 = vpow.pop %v921
        %v923 = vmul.f32 %v873, 1.442695
        %v924 = vpow.pop %v923
        %v925 = vmul.f32 %v874, 1.442695
        %v926 = vpow.pop %v925
        %v927 = vmul.f32 %v875, 1.442695
        %v928 = vpow.pop %v927
        %v929 = vmul.f32 %v876, 1.442695
        %v930 = vpow.pop %v929
        %v931 = vmul.f32 %v877, 1.442695
        %v932 = vpow.pop %v931
        %v933 = vmul.f32 %v878, 1.442695
        %v934 = vpow.pop %v933
        %v935 = vmul.f32 %v879, 1.442695
        %v936 = vpow.pop %v935
        %v937 = vmul.f32 %v880, 1.442695
        %v938 = vpow.pop %v937
        %v939 = vmul.f32 %v881, 1.442695
        %v940 = vpow.pop %v939
        %v941 = vmul.f32 %v882, 1.442695
        %v942 = vpow.pop %v941
        %v943 = vmul.f32 %v883, 1.442695
        %v944 = vpow.pop %v943
        %v945 = vmul.f32 %v884, 1.442695
        %v946 = vpow.pop %v945
        %v947 = vmul.f32 %v885, 1.442695
        %v948 = vpow.pop %v947
        %v949 = vmul.f32 %v886, 1.442695
        %v950 = vpow.pop %v949
        %v951 = vadd.f32 %v888, 1.0
        %v952 = vadd.f32 %v890, 1.0
        %v953 = vadd.f32 %v892, 1.0
        %v954 = vadd.f32 %v894, 1.0
        %v955 = vadd.f32 %v896, 1.0
        %v956 = vadd.f32 %v898, 1.0
        %v957 = vadd.f32 %v900, 1.0
        %v958 = vadd.f32 %v902, 1.0
        %v959 = vadd.f32 %v904, 1.0
        %v960 = vadd.f32 %v906, 1.0
        %v961 = vadd.f32 %v908, 1.0
        %v962 = vadd.f32 %v910, 1.0
        %v963 = vadd.f32 %v912, 1.0
        %v964 = vadd.f32 %v914, 1.0
        %v965 = vadd.f32 %v916, 1.0
        %v966 = vadd.f32 %v918, 1.0
        %v967 = vadd.f32 %v920, 1.0
        %v968 = vadd.f32 %v922, 1.0
        %v969 = vadd.f32 %v924, 1.0
        %v970 = vadd.f32 %v926, 1.0
        %v971 = vadd.f32 %v928, 1.0
        %v972 = vadd.f32 %v930, 1.0
        %v973 = vadd.f32 %v932, 1.0
        %v974 = vadd.f32 %v934, 1.0
        %v975 = vadd.f32 %v936, 1.0
        %v976 = vadd.f32 %v938, 1.0
        %v977 = vadd.f32 %v940, 1.0
        %v978 = vadd.f32 %v942, 1.0
        %v979 = vadd.f32 %v944, 1.0
        %v980 = vadd.f32 %v946, 1.0
        %v981 = vadd.f32 %v948, 1.0
        %v982 = vadd.f32 %v950, 1.0
        %v983 = vrcp.pop %v951
        %v984 = vmul.f32 %v951, %v983
        %v985 = vsub.f32 1.0, %v984
        %v986 = vmul.f32 %v983, %v985
        %v987 = vadd.f32 %v983, %v986
        %vm988 = vweird.f32 %v951
        %vm989 = vweird.f32 %v983
        %vm990 = vmor %vm988, %vm989
        %v991 = vsel %vm990, %v983, %v987
        %v992 = vand.u32 2147483647, %v951
        %vm993 = vcmp.eq.f32.partialorder %v992, 8.507059e+37
        %v994 = vand.u32 %v951, 2147483648
        %v995 = vor.u32 1.1754944e-38, %v994
        %v996 = vsel %vm993, %v995, %v991
        %v997 = vmul.f32 1.0, %v996
        %v998 = vrcp.pop %v952
        %v999 = vmul.f32 %v952, %v998
        %v1000 = vsub.f32 1.0, %v999
        %v1001 = vmul.f32 %v998, %v1000
        %v1002 = vadd.f32 %v998, %v1001
        %vm1003 = vweird.f32 %v952
        %vm1004 = vweird.f32 %v998
        %vm1005 = vmor %vm1003, %vm1004
        %v1006 = vsel %vm1005, %v998, %v1002
        %v1007 = vand.u32 2147483647, %v952
        %vm1008 = vcmp.eq.f32.partialorder %v1007, 8.507059e+37
        %v1009 = vand.u32 %v952, 2147483648
        %v1010 = vor.u32 1.1754944e-38, %v1009
        %v1011 = vsel %vm1008, %v1010, %v1006
        %v1012 = vmul.f32 1.0, %v1011
        %v1013 = vrcp.pop %v953
        %v1014 = vmul.f32 %v953, %v1013
        %v1015 = vsub.f32 1.0, %v1014
        %v1016 = vmul.f32 %v1013, %v1015
        %v1017 = vadd.f32 %v1013, %v1016
        %vm1018 = vweird.f32 %v953
        %vm1019 = vweird.f32 %v1013
        %vm1020 = vmor %vm1018, %vm1019
        %v1021 = vsel %vm1020, %v1013, %v1017
        %v1022 = vand.u32 2147483647, %v953
        %vm1023 = vcmp.eq.f32.partialorder %v1022, 8.507059e+37
        %v1024 = vand.u32 %v953, 2147483648
        %v1025 = vor.u32 1.1754944e-38, %v1024
        %v1026 = vsel %vm1023, %v1025, %v1021
        %v1027 = vmul.f32 1.0, %v1026
        %v1028 = vrcp.pop %v954
        %v1029 = vmul.f32 %v954, %v1028
        %v1030 = vsub.f32 1.0, %v1029
        %v1031 = vmul.f32 %v1028, %v1030
        %v1032 = vadd.f32 %v1028, %v1031
        %vm1033 = vweird.f32 %v954
        %vm1034 = vweird.f32 %v1028
        %vm1035 = vmor %vm1033, %vm1034
        %v1036 = vsel %vm1035, %v1028, %v1032
        %v1037 = vand.u32 2147483647, %v954
        %vm1038 = vcmp.eq.f32.partialorder %v1037, 8.507059e+37
        %v1039 = vand.u32 %v954, 2147483648
        %v1040 = vor.u32 1.1754944e-38, %v1039
        %v1041 = vsel %vm1038, %v1040, %v1036
        %v1042 = vmul.f32 1.0, %v1041
        %v1043 = vrcp.pop %v955
        %v1044 = vmul.f32 %v955, %v1043
        %v1045 = vsub.f32 1.0, %v1044
        %v1046 = vmul.f32 %v1043, %v1045
        %v1047 = vadd.f32 %v1043, %v1046
        %vm1048 = vweird.f32 %v955
        %vm1049 = vweird.f32 %v1043
        %vm1050 = vmor %vm1048, %vm1049
        %v1051 = vsel %vm1050, %v1043, %v1047
        %v1052 = vand.u32 2147483647, %v955
        %vm1053 = vcmp.eq.f32.partialorder %v1052, 8.507059e+37
        %v1054 = vand.u32 %v955, 2147483648
        %v1055 = vor.u32 1.1754944e-38, %v1054
        %v1056 = vsel %vm1053, %v1055, %v1051
        %v1057 = vmul.f32 1.0, %v1056
        %v1058 = vrcp.pop %v956
        %v1059 = vmul.f32 %v956, %v1058
        %v1060 = vsub.f32 1.0, %v1059
        %v1061 = vmul.f32 %v1058, %v1060
        %v1062 = vadd.f32 %v1058, %v1061
        %vm1063 = vweird.f32 %v956
        %vm1064 = vweird.f32 %v1058
        %vm1065 = vmor %vm1063, %vm1064
        %v1066 = vsel %vm1065, %v1058, %v1062
        %v1067 = vand.u32 2147483647, %v956
        %vm1068 = vcmp.eq.f32.partialorder %v1067, 8.507059e+37
        %v1069 = vand.u32 %v956, 2147483648
        %v1070 = vor.u32 1.1754944e-38, %v1069
        %v1071 = vsel %vm1068, %v1070, %v1066
        %v1072 = vmul.f32 1.0, %v1071
        %v1073 = vrcp.pop %v957
        %v1074 = vmul.f32 %v957, %v1073
        %v1075 = vsub.f32 1.0, %v1074
        %v1076 = vmul.f32 %v1073, %v1075
        %v1077 = vadd.f32 %v1073, %v1076
        %vm1078 = vweird.f32 %v957
        %vm1079 = vweird.f32 %v1073
        %vm1080 = vmor %vm1078, %vm1079
        %v1081 = vsel %vm1080, %v1073, %v1077
        %v1082 = vand.u32 2147483647, %v957
        %vm1083 = vcmp.eq.f32.partialorder %v1082, 8.507059e+37
        %v1084 = vand.u32 %v957, 2147483648
        %v1085 = vor.u32 1.1754944e-38, %v1084
        %v1086 = vsel %vm1083, %v1085, %v1081
        %v1087 = vmul.f32 1.0, %v1086
        %v1088 = vrcp.pop %v958
        %v1089 = vmul.f32 %v958, %v1088
        %v1090 = vsub.f32 1.0, %v1089
        %v1091 = vmul.f32 %v1088, %v1090
        %v1092 = vadd.f32 %v1088, %v1091
        %vm1093 = vweird.f32 %v958
        %vm1094 = vweird.f32 %v1088
        %vm1095 = vmor %vm1093, %vm1094
        %v1096 = vsel %vm1095, %v1088, %v1092
        %v1097 = vand.u32 2147483647, %v958
        %vm1098 = vcmp.eq.f32.partialorder %v1097, 8.507059e+37
        %v1099 = vand.u32 %v958, 2147483648
        %v1100 = vor.u32 1.1754944e-38, %v1099
        %v1101 = vsel %vm1098, %v1100, %v1096
        %v1102 = vmul.f32 1.0, %v1101
        %v1103 = vrcp.pop %v959
        %v1104 = vmul.f32 %v959, %v1103
        %v1105 = vsub.f32 1.0, %v1104
        %v1106 = vmul.f32 %v1103, %v1105
        %v1107 = vadd.f32 %v1103, %v1106
        %vm1108 = vweird.f32 %v959
        %vm1109 = vweird.f32 %v1103
        %vm1110 = vmor %vm1108, %vm1109
        %v1111 = vsel %vm1110, %v1103, %v1107
        %v1112 = vand.u32 2147483647, %v959
        %vm1113 = vcmp.eq.f32.partialorder %v1112, 8.507059e+37
        %v1114 = vand.u32 %v959, 2147483648
        %v1115 = vor.u32 1.1754944e-38, %v1114
        %v1116 = vsel %vm1113, %v1115, %v1111
        %v1117 = vmul.f32 1.0, %v1116
        %v1118 = vrcp.pop %v960
        %v1119 = vmul.f32 %v960, %v1118
        %v1120 = vsub.f32 1.0, %v1119
        %v1121 = vmul.f32 %v1118, %v1120
        %v1122 = vadd.f32 %v1118, %v1121
        %vm1123 = vweird.f32 %v960
        %vm1124 = vweird.f32 %v1118
        %vm1125 = vmor %vm1123, %vm1124
        %v1126 = vsel %vm1125, %v1118, %v1122
        %v1127 = vand.u32 2147483647, %v960
        %vm1128 = vcmp.eq.f32.partialorder %v1127, 8.507059e+37
        %v1129 = vand.u32 %v960, 2147483648
        %v1130 = vor.u32 1.1754944e-38, %v1129
        %v1131 = vsel %vm1128, %v1130, %v1126
        %v1132 = vmul.f32 1.0, %v1131
        %v1133 = vrcp.pop %v961
        %v1134 = vmul.f32 %v961, %v1133
        %v1135 = vsub.f32 1.0, %v1134
        %v1136 = vmul.f32 %v1133, %v1135
        %v1137 = vadd.f32 %v1133, %v1136
        %vm1138 = vweird.f32 %v961
        %vm1139 = vweird.f32 %v1133
        %vm1140 = vmor %vm1138, %vm1139
        %v1141 = vsel %vm1140, %v1133, %v1137
        %v1142 = vand.u32 2147483647, %v961
        %vm1143 = vcmp.eq.f32.partialorder %v1142, 8.507059e+37
        %v1144 = vand.u32 %v961, 2147483648
        %v1145 = vor.u32 1.1754944e-38, %v1144
        %v1146 = vsel %vm1143, %v1145, %v1141
        %v1147 = vmul.f32 1.0, %v1146
        %v1148 = vrcp.pop %v962
        %v1149 = vmul.f32 %v962, %v1148
        %v1150 = vsub.f32 1.0, %v1149
        %v1151 = vmul.f32 %v1148, %v1150
        %v1152 = vadd.f32 %v1148, %v1151
        %vm1153 = vweird.f32 %v962
        %vm1154 = vweird.f32 %v1148
        %vm1155 = vmor %vm1153, %vm1154
        %v1156 = vsel %vm1155, %v1148, %v1152
        %v1157 = vand.u32 2147483647, %v962
        %vm1158 = vcmp.eq.f32.partialorder %v1157, 8.507059e+37
        %v1159 = vand.u32 %v962, 2147483648
        %v1160 = vor.u32 1.1754944e-38, %v1159
        %v1161 = vsel %vm1158, %v1160, %v1156
        %v1162 = vmul.f32 1.0, %v1161
        %v1163 = vrcp.pop %v963
        %v1164 = vmul.f32 %v963, %v1163
        %v1165 = vsub.f32 1.0, %v1164
        %v1166 = vmul.f32 %v1163, %v1165
        %v1167 = vadd.f32 %v1163, %v1166
        %vm1168 = vweird.f32 %v963
        %vm1169 = vweird.f32 %v1163
        %vm1170 = vmor %vm1168, %vm1169
        %v1171 = vsel %vm1170, %v1163, %v1167
        %v1172 = vand.u32 2147483647, %v963
        %vm1173 = vcmp.eq.f32.partialorder %v1172, 8.507059e+37
        %v1174 = vand.u32 %v963, 2147483648
        %v1175 = vor.u32 1.1754944e-38, %v1174
        %v1176 = vsel %vm1173, %v1175, %v1171
        %v1177 = vmul.f32 1.0, %v1176
        %v1178 = vrcp.pop %v964
        %v1179 = vmul.f32 %v964, %v1178
        %v1180 = vsub.f32 1.0, %v1179
        %v1181 = vmul.f32 %v1178, %v1180
        %v1182 = vadd.f32 %v1178, %v1181
        %vm1183 = vweird.f32 %v964
        %vm1184 = vweird.f32 %v1178
        %vm1185 = vmor %vm1183, %vm1184
        %v1186 = vsel %vm1185, %v1178, %v1182
        %v1187 = vand.u32 2147483647, %v964
        %vm1188 = vcmp.eq.f32.partialorder %v1187, 8.507059e+37
        %v1189 = vand.u32 %v964, 2147483648
        %v1190 = vor.u32 1.1754944e-38, %v1189
        %v1191 = vsel %vm1188, %v1190, %v1186
        %v1192 = vmul.f32 1.0, %v1191
        %v1193 = vrcp.pop %v965
        %v1194 = vmul.f32 %v965, %v1193
        %v1195 = vsub.f32 1.0, %v1194
        %v1196 = vmul.f32 %v1193, %v1195
        %v1197 = vadd.f32 %v1193, %v1196
        %vm1198 = vweird.f32 %v965
        %vm1199 = vweird.f32 %v1193
        %vm1200 = vmor %vm1198, %vm1199
        %v1201 = vsel %vm1200, %v1193, %v1197
        %v1202 = vand.u32 2147483647, %v965
        %vm1203 = vcmp.eq.f32.partialorder %v1202, 8.507059e+37
        %v1204 = vand.u32 %v965, 2147483648
        %v1205 = vor.u32 1.1754944e-38, %v1204
        %v1206 = vsel %vm1203, %v1205, %v1201
        %v1207 = vmul.f32 1.0, %v1206
        %v1208 = vrcp.pop %v966
        %v1209 = vmul.f32 %v966, %v1208
        %v1210 = vsub.f32 1.0, %v1209
        %v1211 = vmul.f32 %v1208, %v1210
        %v1212 = vadd.f32 %v1208, %v1211
        %vm1213 = vweird.f32 %v966
        %vm1214 = vweird.f32 %v1208
        %vm1215 = vmor %vm1213, %vm1214
        %v1216 = vsel %vm1215, %v1208, %v1212
        %v1217 = vand.u32 2147483647, %v966
        %vm1218 = vcmp.eq.f32.partialorder %v1217, 8.507059e+37
        %v1219 = vand.u32 %v966, 2147483648
        %v1220 = vor.u32 1.1754944e-38, %v1219
        %v1221 = vsel %vm1218, %v1220, %v1216
        %v1222 = vmul.f32 1.0, %v1221
        %v1223 = vrcp.pop %v967
        %v1224 = vmul.f32 %v967, %v1223
        %v1225 = vsub.f32 1.0, %v1224
        %v1226 = vmul.f32 %v1223, %v1225
        %v1227 = vadd.f32 %v1223, %v1226
        %vm1228 = vweird.f32 %v967
        %vm1229 = vweird.f32 %v1223
        %vm1230 = vmor %vm1228, %vm1229
        %v1231 = vsel %vm1230, %v1223, %v1227
        %v1232 = vand.u32 2147483647, %v967
        %vm1233 = vcmp.eq.f32.partialorder %v1232, 8.507059e+37
        %v1234 = vand.u32 %v967, 2147483648
        %v1235 = vor.u32 1.1754944e-38, %v1234
        %v1236 = vsel %vm1233, %v1235, %v1231
        %v1237 = vmul.f32 1.0, %v1236
        %v1238 = vrcp.pop %v968
        %v1239 = vmul.f32 %v968, %v1238
        %v1240 = vsub.f32 1.0, %v1239
        %v1241 = vmul.f32 %v1238, %v1240
        %v1242 = vadd.f32 %v1238, %v1241
        %vm1243 = vweird.f32 %v968
        %vm1244 = vweird.f32 %v1238
        %vm1245 = vmor %vm1243, %vm1244
        %v1246 = vsel %vm1245, %v1238, %v1242
        %v1247 = vand.u32 2147483647, %v968
        %vm1248 = vcmp.eq.f32.partialorder %v1247, 8.507059e+37
        %v1249 = vand.u32 %v968, 2147483648
        %v1250 = vor.u32 1.1754944e-38, %v1249
        %v1251 = vsel %vm1248, %v1250, %v1246
        %v1252 = vmul.f32 1.0, %v1251
        %v1253 = vrcp.pop %v969
        %v1254 = vmul.f32 %v969, %v1253
        %v1255 = vsub.f32 1.0, %v1254
        %v1256 = vmul.f32 %v1253, %v1255
        %v1257 = vadd.f32 %v1253, %v1256
        %vm1258 = vweird.f32 %v969
        %vm1259 = vweird.f32 %v1253
        %vm1260 = vmor %vm1258, %vm1259
        %v1261 = vsel %vm1260, %v1253, %v1257
        %v1262 = vand.u32 2147483647, %v969
        %vm1263 = vcmp.eq.f32.partialorder %v1262, 8.507059e+37
        %v1264 = vand.u32 %v969, 2147483648
        %v1265 = vor.u32 1.1754944e-38, %v1264
        %v1266 = vsel %vm1263, %v1265, %v1261
        %v1267 = vmul.f32 1.0, %v1266
        %v1268 = vrcp.pop %v970
        %v1269 = vmul.f32 %v970, %v1268
        %v1270 = vsub.f32 1.0, %v1269
        %v1271 = vmul.f32 %v1268, %v1270
        %v1272 = vadd.f32 %v1268, %v1271
        %vm1273 = vweird.f32 %v970
        %vm1274 = vweird.f32 %v1268
        %vm1275 = vmor %vm1273, %vm1274
        %v1276 = vsel %vm1275, %v1268, %v1272
        %v1277 = vand.u32 2147483647, %v970
        %vm1278 = vcmp.eq.f32.partialorder %v1277, 8.507059e+37
        %v1279 = vand.u32 %v970, 2147483648
        %v1280 = vor.u32 1.1754944e-38, %v1279
        %v1281 = vsel %vm1278, %v1280, %v1276
        %v1282 = vmul.f32 1.0, %v1281
        %v1283 = vrcp.pop %v971
        %v1284 = vmul.f32 %v971, %v1283
        %v1285 = vsub.f32 1.0, %v1284
        %v1286 = vmul.f32 %v1283, %v1285
        %v1287 = vadd.f32 %v1283, %v1286
        %vm1288 = vweird.f32 %v971
        %vm1289 = vweird.f32 %v1283
        %vm1290 = vmor %vm1288, %vm1289
        %v1291 = vsel %vm1290, %v1283, %v1287
        %v1292 = vand.u32 2147483647, %v971
        %vm1293 = vcmp.eq.f32.partialorder %v1292, 8.507059e+37
        %v1294 = vand.u32 %v971, 2147483648
        %v1295 = vor.u32 1.1754944e-38, %v1294
        %v1296 = vsel %vm1293, %v1295, %v1291
        %v1297 = vmul.f32 1.0, %v1296
        %v1298 = vrcp.pop %v972
        %v1299 = vmul.f32 %v972, %v1298
        %v1300 = vsub.f32 1.0, %v1299
        %v1301 = vmul.f32 %v1298, %v1300
        %v1302 = vadd.f32 %v1298, %v1301
        %vm1303 = vweird.f32 %v972
        %vm1304 = vweird.f32 %v1298
        %vm1305 = vmor %vm1303, %vm1304
        %v1306 = vsel %vm1305, %v1298, %v1302
        %v1307 = vand.u32 2147483647, %v972
        %vm1308 = vcmp.eq.f32.partialorder %v1307, 8.507059e+37
        %v1309 = vand.u32 %v972, 2147483648
        %v1310 = vor.u32 1.1754944e-38, %v1309
        %v1311 = vsel %vm1308, %v1310, %v1306
        %v1312 = vmul.f32 1.0, %v1311
        %v1313 = vrcp.pop %v973
        %v1314 = vmul.f32 %v973, %v1313
        %v1315 = vsub.f32 1.0, %v1314
        %v1316 = vmul.f32 %v1313, %v1315
        %v1317 = vadd.f32 %v1313, %v1316
        %vm1318 = vweird.f32 %v973
        %vm1319 = vweird.f32 %v1313
        %vm1320 = vmor %vm1318, %vm1319
        %v1321 = vsel %vm1320, %v1313, %v1317
        %v1322 = vand.u32 2147483647, %v973
        %vm1323 = vcmp.eq.f32.partialorder %v1322, 8.507059e+37
        %v1324 = vand.u32 %v973, 2147483648
        %v1325 = vor.u32 1.1754944e-38, %v1324
        %v1326 = vsel %vm1323, %v1325, %v1321
        %v1327 = vmul.f32 1.0, %v1326
        %v1328 = vrcp.pop %v974
        %v1329 = vmul.f32 %v974, %v1328
        %v1330 = vsub.f32 1.0, %v1329
        %v1331 = vmul.f32 %v1328, %v1330
        %v1332 = vadd.f32 %v1328, %v1331
        %vm1333 = vweird.f32 %v974
        %vm1334 = vweird.f32 %v1328
        %vm1335 = vmor %vm1333, %vm1334
        %v1336 = vsel %vm1335, %v1328, %v1332
        %v1337 = vand.u32 2147483647, %v974
        %vm1338 = vcmp.eq.f32.partialorder %v1337, 8.507059e+37
        %v1339 = vand.u32 %v974, 2147483648
        %v1340 = vor.u32 1.1754944e-38, %v1339
        %v1341 = vsel %vm1338, %v1340, %v1336
        %v1342 = vmul.f32 1.0, %v1341
        %v1343 = vrcp.pop %v975
        %v1344 = vmul.f32 %v975, %v1343
        %v1345 = vsub.f32 1.0, %v1344
        %v1346 = vmul.f32 %v1343, %v1345
        %v1347 = vadd.f32 %v1343, %v1346
        %vm1348 = vweird.f32 %v975
        %vm1349 = vweird.f32 %v1343
        %vm1350 = vmor %vm1348, %vm1349
        %v1351 = vsel %vm1350, %v1343, %v1347
        %v1352 = vand.u32 2147483647, %v975
        %vm1353 = vcmp.eq.f32.partialorder %v1352, 8.507059e+37
        %v1354 = vand.u32 %v975, 2147483648
        %v1355 = vor.u32 1.1754944e-38, %v1354
        %v1356 = vsel %vm1353, %v1355, %v1351
        %v1357 = vmul.f32 1.0, %v1356
        %v1358 = vrcp.pop %v976
        %v1359 = vmul.f32 %v976, %v1358
        %v1360 = vsub.f32 1.0, %v1359
        %v1361 = vmul.f32 %v1358, %v1360
        %v1362 = vadd.f32 %v1358, %v1361
        %vm1363 = vweird.f32 %v976
        %vm1364 = vweird.f32 %v1358
        %vm1365 = vmor %vm1363, %vm1364
        %v1366 = vsel %vm1365, %v1358, %v1362
        %v1367 = vand.u32 2147483647, %v976
        %vm1368 = vcmp.eq.f32.partialorder %v1367, 8.507059e+37
        %v1369 = vand.u32 %v976, 2147483648
        %v1370 = vor.u32 1.1754944e-38, %v1369
        %v1371 = vsel %vm1368, %v1370, %v1366
        %v1372 = vmul.f32 1.0, %v1371
        %v1373 = vrcp.pop %v977
        %v1374 = vmul.f32 %v977, %v1373
        %v1375 = vsub.f32 1.0, %v1374
        %v1376 = vmul.f32 %v1373, %v1375
        %v1377 = vadd.f32 %v1373, %v1376
        %vm1378 = vweird.f32 %v977
        %vm1379 = vweird.f32 %v1373
        %vm1380 = vmor %vm1378, %vm1379
        %v1381 = vsel %vm1380, %v1373, %v1377
        %v1382 = vand.u32 2147483647, %v977
        %vm1383 = vcmp.eq.f32.partialorder %v1382, 8.507059e+37
        %v1384 = vand.u32 %v977, 2147483648
        %v1385 = vor.u32 1.1754944e-38, %v1384
        %v1386 = vsel %vm1383, %v1385, %v1381
        %v1387 = vmul.f32 1.0, %v1386
        %v1388 = vrcp.pop %v978
        %v1389 = vmul.f32 %v978, %v1388
        %v1390 = vsub.f32 1.0, %v1389
        %v1391 = vmul.f32 %v1388, %v1390
        %v1392 = vadd.f32 %v1388, %v1391
        %vm1393 = vweird.f32 %v978
        %vm1394 = vweird.f32 %v1388
        %vm1395 = vmor %vm1393, %vm1394
        %v1396 = vsel %vm1395, %v1388, %v1392
        %v1397 = vand.u32 2147483647, %v978
        %vm1398 = vcmp.eq.f32.partialorder %v1397, 8.507059e+37
        %v1399 = vand.u32 %v978, 2147483648
        %v1400 = vor.u32 1.1754944e-38, %v1399
        %v1401 = vsel %vm1398, %v1400, %v1396
        %v1402 = vmul.f32 1.0, %v1401
        %v1403 = vrcp.pop %v979
        %v1404 = vmul.f32 %v979, %v1403
        %v1405 = vsub.f32 1.0, %v1404
        %v1406 = vmul.f32 %v1403, %v1405
        %v1407 = vadd.f32 %v1403, %v1406
        %vm1408 = vweird.f32 %v979
        %vm1409 = vweird.f32 %v1403
        %vm1410 = vmor %vm1408, %vm1409
        %v1411 = vsel %vm1410, %v1403, %v1407
        %v1412 = vand.u32 2147483647, %v979
        %vm1413 = vcmp.eq.f32.partialorder %v1412, 8.507059e+37
        %v1414 = vand.u32 %v979, 2147483648
        %v1415 = vor.u32 1.1754944e-38, %v1414
        %v1416 = vsel %vm1413, %v1415, %v1411
        %v1417 = vmul.f32 1.0, %v1416
        %v1418 = vrcp.pop %v980
        %v1419 = vmul.f32 %v980, %v1418
        %v1420 = vsub.f32 1.0, %v1419
        %v1421 = vmul.f32 %v1418, %v1420
        %v1422 = vadd.f32 %v1418, %v1421
        %vm1423 = vweird.f32 %v980
        %vm1424 = vweird.f32 %v1418
        %vm1425 = vmor %vm1423, %vm1424
        %v1426 = vsel %vm1425, %v1418, %v1422
        %v1427 = vand.u32 2147483647, %v980
        %vm1428 = vcmp.eq.f32.partialorder %v1427, 8.507059e+37
        %v1429 = vand.u32 %v980, 2147483648
        %v1430 = vor.u32 1.1754944e-38, %v1429
        %v1431 = vsel %vm1428, %v1430, %v1426
        %v1432 = vmul.f32 1.0, %v1431
        %v1433 = vrcp.pop %v981
        %v1434 = vmul.f32 %v981, %v1433
        %v1435 = vsub.f32 1.0, %v1434
        %v1436 = vmul.f32 %v1433, %v1435
        %v1437 = vadd.f32 %v1433, %v1436
        %vm1438 = vweird.f32 %v981
        %vm1439 = vweird.f32 %v1433
        %vm1440 = vmor %vm1438, %vm1439
        %v1441 = vsel %vm1440, %v1433, %v1437
        %v1442 = vand.u32 2147483647, %v981
        %vm1443 = vcmp.eq.f32.partialorder %v1442, 8.507059e+37
        %v1444 = vand.u32 %v981, 2147483648
        %v1445 = vor.u32 1.1754944e-38, %v1444
        %v1446 = vsel %vm1443, %v1445, %v1441
        %v1447 = vmul.f32 1.0, %v1446
        %v1448 = vrcp.pop %v982
        %v1449 = vmul.f32 %v982, %v1448
        %v1450 = vsub.f32 1.0, %v1449
        %v1451 = vmul.f32 %v1448, %v1450
        %v1452 = vadd.f32 %v1448, %v1451
        %vm1453 = vweird.f32 %v982
        %vm1454 = vweird.f32 %v1448
        %vm1455 = vmor %vm1453, %vm1454
        %v1456 = vsel %vm1455, %v1448, %v1452
        %v1457 = vand.u32 2147483647, %v982
        %vm1458 = vcmp.eq.f32.partialorder %v1457, 8.507059e+37
        %v1459 = vand.u32 %v982, 2147483648
        %v1460 = vor.u32 1.1754944e-38, %v1459
        %v1461 = vsel %vm1458, %v1460, %v1456
        %v1462 = vmul.f32 1.0, %v1461
        %v1463 = vld [vmem:[%s426] sm:$0xff]
        %v1464 = vld [vmem:[%s426 + $0x8] sm:$0xff]
        %v1465 = vld [vmem:[%s426 + $0x10] sm:$0xff]
        %v1466 = vld [vmem:[%s426 + $0x18] sm:$0xff]
        %v1467 = vld [vmem:[%s426 + $0x20] sm:$0xff]
        %v1468 = vld [vmem:[%s426 + $0x28] sm:$0xff]
        %v1469 = vld [vmem:[%s426 + $0x30] sm:$0xff]
        %v1470 = vld [vmem:[%s426 + $0x38] sm:$0xff]
        %v1471 = vld [vmem:[%s426 + $0x40] sm:$0xff]
        %v1472 = vld [vmem:[%s426 + $0x48] sm:$0xff]
        %v1473 = vld [vmem:[%s426 + $0x50] sm:$0xff]
        %v1474 = vld [vmem:[%s426 + $0x58] sm:$0xff]
        %v1475 = vld [vmem:[%s426 + $0x60] sm:$0xff]
        %v1476 = vld [vmem:[%s426 + $0x68] sm:$0xff]
        %v1477 = vld [vmem:[%s426 + $0x70] sm:$0xff]
        %v1478 = vld [vmem:[%s426 + $0x78] sm:$0xff]
        %v1479 = vld [vmem:[%s420] sm:$0x3]
        %1481 = vset.pattern.permute.xlu0 0
        %1482 = vperm.xlu0 %1481, %v1463
        %v1483 = vpop.permute.xlu0 %1482
        %1486 = vset.pattern.permute.xlu0 0
        %1487 = vperm.xlu0 %1486, %v1464
        %v1488 = vpop.permute.xlu0 %1487
        %1491 = vset.pattern.permute.xlu0 0
        %1492 = vperm.xlu0 %1491, %v1465
        %v1493 = vpop.permute.xlu0 %1492
        %1496 = vset.pattern.permute.xlu0 0
        %1497 = vperm.xlu0 %1496, %v1466
        %v1498 = vpop.permute.xlu0 %1497
        %1501 = vset.pattern.permute.xlu0 0
        %1502 = vperm.xlu0 %1501, %v1467
        %v1503 = vpop.permute.xlu0 %1502
        %1506 = vset.pattern.permute.xlu0 0
        %1507 = vperm.xlu0 %1506, %v1468
        %v1508 = vpop.permute.xlu0 %1507
        %1511 = vset.pattern.permute.xlu0 0
        %1512 = vperm.xlu0 %1511, %v1469
        %v1513 = vpop.permute.xlu0 %1512
        %1516 = vset.pattern.permute.xlu0 0
        %1517 = vperm.xlu0 %1516, %v1470
        %v1518 = vpop.permute.xlu0 %1517
        %1521 = vset.pattern.permute.xlu0 0
        %1522 = vperm.xlu0 %1521, %v1471
        %v1523 = vpop.permute.xlu0 %1522
        %1526 = vset.pattern.permute.xlu0 0
        %1527 = vperm.xlu0 %1526, %v1472
        %v1528 = vpop.permute.xlu0 %1527
        %1531 = vset.pattern.permute.xlu0 0
        %1532 = vperm.xlu0 %1531, %v1473
        %v1533 = vpop.permute.xlu0 %1532
        %1536 = vset.pattern.permute.xlu0 0
        %1537 = vperm.xlu0 %1536, %v1474
        %v1538 = vpop.permute.xlu0 %1537
        %1541 = vset.pattern.permute.xlu0 0
        %1542 = vperm.xlu0 %1541, %v1475
        %v1543 = vpop.permute.xlu0 %1542
        %1546 = vset.pattern.permute.xlu0 0
        %1547 = vperm.xlu0 %1546, %v1476
        %v1548 = vpop.permute.xlu0 %1547
        %1551 = vset.pattern.permute.xlu0 0
        %1552 = vperm.xlu0 %1551, %v1477
        %v1553 = vpop.permute.xlu0 %1552
        %1556 = vset.pattern.permute.xlu0 0
        %1557 = vperm.xlu0 %1556, %v1478
        %v1558 = vpop.permute.xlu0 %1557
        %v1561 = vperm.slane %v1479, 0
        %v1562 = vperm.slane %v1479, 1
        %v1565 = vadd.f32 %v1483, %v1561
        %v1566 = vadd.f32 %v1483, %v1562
        %v1567 = vadd.f32 %v1488, %v1561
        %v1568 = vadd.f32 %v1488, %v1562
        %v1569 = vadd.f32 %v1493, %v1561
        %v1570 = vadd.f32 %v1493, %v1562
        %v1571 = vadd.f32 %v1498, %v1561
        %v1572 = vadd.f32 %v1498, %v1562
        %v1573 = vadd.f32 %v1503, %v1561
        %v1574 = vadd.f32 %v1503, %v1562
        %v1575 = vadd.f32 %v1508, %v1561
        %v1576 = vadd.f32 %v1508, %v1562
        %v1577 = vadd.f32 %v1513, %v1561
        %v1578 = vadd.f32 %v1513, %v1562
        %v1579 = vadd.f32 %v1518, %v1561
        %v1580 = vadd.f32 %v1518, %v1562
        %v1581 = vadd.f32 %v1523, %v1561
        %v1582 = vadd.f32 %v1523, %v1562
        %v1583 = vadd.f32 %v1528, %v1561
        %v1584 = vadd.f32 %v1528, %v1562
        %v1585 = vadd.f32 %v1533, %v1561
        %v1586 = vadd.f32 %v1533, %v1562
        %v1587 = vadd.f32 %v1538, %v1561
        %v1588 = vadd.f32 %v1538, %v1562
        %v1589 = vadd.f32 %v1543, %v1561
        %v1590 = vadd.f32 %v1543, %v1562
        %v1591 = vadd.f32 %v1548, %v1561
        %v1592 = vadd.f32 %v1548, %v1562
        %v1593 = vadd.f32 %v1553, %v1561
        %v1594 = vadd.f32 %v1553, %v1562
        %v1595 = vadd.f32 %v1558, %v1561
        %v1596 = vadd.f32 %v1558, %v1562
        %v1597 = vmul.f32 %v1565, %v997
        %v1598 = vmul.f32 %v1566, %v1012
        %v1599 = vmul.f32 %v1567, %v1027
        %v1600 = vmul.f32 %v1568, %v1042
        %v1601 = vmul.f32 %v1569, %v1057
        %v1602 = vmul.f32 %v1570, %v1072
        %v1603 = vmul.f32 %v1571, %v1087
        %v1604 = vmul.f32 %v1572, %v1102
        %v1605 = vmul.f32 %v1573, %v1117
        %v1606 = vmul.f32 %v1574, %v1132
        %v1607 = vmul.f32 %v1575, %v1147
        %v1608 = vmul.f32 %v1576, %v1162
        %v1609 = vmul.f32 %v1577, %v1177
        %v1610 = vmul.f32 %v1578, %v1192
        %v1611 = vmul.f32 %v1579, %v1207
        %v1612 = vmul.f32 %v1580, %v1222
        %v1613 = vmul.f32 %v1581, %v1237
        %v1614 = vmul.f32 %v1582, %v1252
        %v1615 = vmul.f32 %v1583, %v1267
        %v1616 = vmul.f32 %v1584, %v1282
        %v1617 = vmul.f32 %v1585, %v1297
        %v1618 = vmul.f32 %v1586, %v1312
        %v1619 = vmul.f32 %v1587, %v1327
        %v1620 = vmul.f32 %v1588, %v1342
        %v1621 = vmul.f32 %v1589, %v1357
        %v1622 = vmul.f32 %v1590, %v1372
        %v1623 = vmul.f32 %v1591, %v1387
        %v1624 = vmul.f32 %v1592, %v1402
        %v1625 = vmul.f32 %v1593, %v1417
        %v1626 = vmul.f32 %v1594, %v1432
        %v1627 = vmul.f32 %v1595, %v1447
        %v1628 = vmul.f32 %v1596, %v1462
        %v1629 = vmul.f32 %v1597, 0.2
        %v1630 = vmul.f32 %v1598, 0.2
        %v1631 = vmul.f32 %v1599, 0.2
        %v1632 = vmul.f32 %v1600, 0.2
        %v1633 = vmul.f32 %v1601, 0.2
        %v1634 = vmul.f32 %v1602, 0.2
        %v1635 = vmul.f32 %v1603, 0.2
        %v1636 = vmul.f32 %v1604, 0.2
        %v1637 = vmul.f32 %v1605, 0.2
        %v1638 = vmul.f32 %v1606, 0.2
        %v1639 = vmul.f32 %v1607, 0.2
        %v1640 = vmul.f32 %v1608, 0.2
        %v1641 = vmul.f32 %v1609, 0.2
        %v1642 = vmul.f32 %v1610, 0.2
        %v1643 = vmul.f32 %v1611, 0.2
        %v1644 = vmul.f32 %v1612, 0.2
        %v1645 = vmul.f32 %v1613, 0.2
        %v1646 = vmul.f32 %v1614, 0.2
        %v1647 = vmul.f32 %v1615, 0.2
        %v1648 = vmul.f32 %v1616, 0.2
        %v1649 = vmul.f32 %v1617, 0.2
        %v1650 = vmul.f32 %v1618, 0.2
        %v1651 = vmul.f32 %v1619, 0.2
        %v1652 = vmul.f32 %v1620, 0.2
        %v1653 = vmul.f32 %v1621, 0.2
        %v1654 = vmul.f32 %v1622, 0.2
        %v1655 = vmul.f32 %v1623, 0.2
        %v1656 = vmul.f32 %v1624, 0.2
        %v1657 = vmul.f32 %v1625, 0.2
        %v1658 = vmul.f32 %v1626, 0.2
        %v1659 = vmul.f32 %v1627, 0.2
        %v1660 = vmul.f32 %v1628, 0.2
        %v1661 = vmax.f32 %v1597, %v1629
        %v1662 = vmax.f32 %v1598, %v1630
        %v1663 = vmax.f32 %v1599, %v1631
        %v1664 = vmax.f32 %v1600, %v1632
        %v1665 = vmax.f32 %v1601, %v1633
        %v1666 = vmax.f32 %v1602, %v1634
        %v1667 = vmax.f32 %v1603, %v1635
        %v1668 = vmax.f32 %v1604, %v1636
        %v1669 = vmax.f32 %v1605, %v1637
        %v1670 = vmax.f32 %v1606, %v1638
        %v1671 = vmax.f32 %v1607, %v1639
        %v1672 = vmax.f32 %v1608, %v1640
        %v1673 = vmax.f32 %v1609, %v1641
        %v1674 = vmax.f32 %v1610, %v1642
        %v1675 = vmax.f32 %v1611, %v1643
        %v1676 = vmax.f32 %v1612, %v1644
        %v1677 = vmax.f32 %v1613, %v1645
        %v1678 = vmax.f32 %v1614, %v1646
        %v1679 = vmax.f32 %v1615, %v1647
        %v1680 = vmax.f32 %v1616, %v1648
        %v1681 = vmax.f32 %v1617, %v1649
        %v1682 = vmax.f32 %v1618, %v1650
        %v1683 = vmax.f32 %v1619, %v1651
        %v1684 = vmax.f32 %v1620, %v1652
        %v1685 = vmax.f32 %v1621, %v1653
        %v1686 = vmax.f32 %v1622, %v1654
        %v1687 = vmax.f32 %v1623, %v1655
        %v1688 = vmax.f32 %v1624, %v1656
        %v1689 = vmax.f32 %v1625, %v1657
        %v1690 = vmax.f32 %v1626, %v1658
        %v1691 = vmax.f32 %v1627, %v1659
        %v1692 = vmax.f32 %v1628, %v1660
        %vm1693 = vcmp.gt.f32.partialorder %v581, 0.0
        %vm1694 = vcmp.gt.f32.partialorder %v582, 0.0
        %vm1695 = vcmp.gt.f32.partialorder %v583, 0.0
        %vm1696 = vcmp.gt.f32.partialorder %v584, 0.0
        %vm1697 = vcmp.gt.f32.partialorder %v585, 0.0
        %vm1698 = vcmp.gt.f32.partialorder %v586, 0.0
        %vm1699 = vcmp.gt.f32.partialorder %v587, 0.0
        %vm1700 = vcmp.gt.f32.partialorder %v588, 0.0
        %vm1701 = vcmp.gt.f32.partialorder %v589, 0.0
        %vm1702 = vcmp.gt.f32.partialorder %v590, 0.0
        %vm1703 = vcmp.gt.f32.partialorder %v591, 0.0
        %vm1704 = vcmp.gt.f32.partialorder %v592, 0.0
        %vm1705 = vcmp.gt.f32.partialorder %v593, 0.0
        %vm1706 = vcmp.gt.f32.partialorder %v594, 0.0
        %vm1707 = vcmp.gt.f32.partialorder %v595, 0.0
        %vm1708 = vcmp.gt.f32.partialorder %v596, 0.0
        %vm1709 = vcmp.gt.f32.partialorder %v597, 0.0
        %vm1710 = vcmp.gt.f32.partialorder %v598, 0.0
        %vm1711 = vcmp.gt.f32.partialorder %v599, 0.0
        %vm1712 = vcmp.gt.f32.partialorder %v600, 0.0
        %vm1713 = vcmp.gt.f32.partialorder %v601, 0.0
        %vm1714 = vcmp.gt.f32.partialorder %v602, 0.0
        %vm1715 = vcmp.gt.f32.partialorder %v603, 0.0
        %vm1716 = vcmp.gt.f32.partialorder %v604, 0.0
        %vm1717 = vcmp.gt.f32.partialorder %v605, 0.0
        %vm1718 = vcmp.gt.f32.partialorder %v606, 0.0
        %vm1719 = vcmp.gt.f32.partialorder %v607, 0.0
        %vm1720 = vcmp.gt.f32.partialorder %v608, 0.0
        %vm1721 = vcmp.gt.f32.partialorder %v609, 0.0
        %vm1722 = vcmp.gt.f32.partialorder %v610, 0.0
        %vm1723 = vcmp.gt.f32.partialorder %v611, 0.0
        %vm1724 = vcmp.gt.f32.partialorder %v612, 0.0
        %v1725 = vsel %vm1693, %v1661, -1e+30
        %v1726 = vsel %vm1694, %v1662, -1e+30
        %v1727 = vsel %vm1695, %v1663, -1e+30
        %v1728 = vsel %vm1696, %v1664, -1e+30
        %v1729 = vsel %vm1697, %v1665, -1e+30
        %v1730 = vsel %vm1698, %v1666, -1e+30
        %v1731 = vsel %vm1699, %v1667, -1e+30
        %v1732 = vsel %vm1700, %v1668, -1e+30
        %v1733 = vsel %vm1701, %v1669, -1e+30
        %v1734 = vsel %vm1702, %v1670, -1e+30
        %v1735 = vsel %vm1703, %v1671, -1e+30
        %v1736 = vsel %vm1704, %v1672, -1e+30
        %v1737 = vsel %vm1705, %v1673, -1e+30
        %v1738 = vsel %vm1706, %v1674, -1e+30
        %v1739 = vsel %vm1707, %v1675, -1e+30
        %v1740 = vsel %vm1708, %v1676, -1e+30
        %v1741 = vsel %vm1709, %v1677, -1e+30
        %v1742 = vsel %vm1710, %v1678, -1e+30
        %v1743 = vsel %vm1711, %v1679, -1e+30
        %v1744 = vsel %vm1712, %v1680, -1e+30
        %v1745 = vsel %vm1713, %v1681, -1e+30
        %v1746 = vsel %vm1714, %v1682, -1e+30
        %v1747 = vsel %vm1715, %v1683, -1e+30
        %v1748 = vsel %vm1716, %v1684, -1e+30
        %v1749 = vsel %vm1717, %v1685, -1e+30
        %v1750 = vsel %vm1718, %v1686, -1e+30
        %v1751 = vsel %vm1719, %v1687, -1e+30
        %v1752 = vsel %vm1720, %v1688, -1e+30
        %v1753 = vsel %vm1721, %v1689, -1e+30
        %v1754 = vsel %vm1722, %v1690, -1e+30
        %v1755 = vsel %vm1723, %v1691, -1e+30
        %v1756 = vsel %vm1724, %v1692, -1e+30
        %v1757 = vld [vmem:[#allocation2] sm:$0xff]
        %v1758 = vld [vmem:[#allocation2 + $0x8] sm:$0xff]
        %v1759 = vld [vmem:[#allocation2 + $0x10] sm:$0xff]
        %v1760 = vld [vmem:[#allocation2 + $0x18] sm:$0xff]
        %v1761 = vld [vmem:[#allocation2 + $0x20] sm:$0xff]
        %v1762 = vld [vmem:[#allocation2 + $0x28] sm:$0xff]
        %v1763 = vld [vmem:[#allocation2 + $0x30] sm:$0xff]
        %v1764 = vld [vmem:[#allocation2 + $0x38] sm:$0xff]
        %v1765 = vld [vmem:[#allocation2 + $0x40] sm:$0xff]
        %v1766 = vld [vmem:[#allocation2 + $0x48] sm:$0xff]
        %v1767 = vld [vmem:[#allocation2 + $0x50] sm:$0xff]
        %v1768 = vld [vmem:[#allocation2 + $0x58] sm:$0xff]
        %v1769 = vld [vmem:[#allocation2 + $0x60] sm:$0xff]
        %v1770 = vld [vmem:[#allocation2 + $0x68] sm:$0xff]
        %v1771 = vld [vmem:[#allocation2 + $0x70] sm:$0xff]
        %v1772 = vld [vmem:[#allocation2 + $0x78] sm:$0xff]
        %v1773 = vmax.f32 %v1725, %v1726
        %1774 = vmax.xlane.f32.xlu0 %v1773
        %v1775 = vpop.xlane.xlu0 %1774
        %v1776 = vmax.f32 %v1727, %v1728
        %1777 = vmax.xlane.f32.xlu0 %v1776
        %v1778 = vpop.xlane.xlu0 %1777
        %v1779 = vmax.f32 %v1729, %v1730
        %1780 = vmax.xlane.f32.xlu0 %v1779
        %v1781 = vpop.xlane.xlu0 %1780
        %v1782 = vmax.f32 %v1731, %v1732
        %1783 = vmax.xlane.f32.xlu0 %v1782
        %v1784 = vpop.xlane.xlu0 %1783
        %v1785 = vmax.f32 %v1733, %v1734
        %1786 = vmax.xlane.f32.xlu0 %v1785
        %v1787 = vpop.xlane.xlu0 %1786
        %v1788 = vmax.f32 %v1735, %v1736
        %1789 = vmax.xlane.f32.xlu0 %v1788
        %v1790 = vpop.xlane.xlu0 %1789
        %v1791 = vmax.f32 %v1737, %v1738
        %1792 = vmax.xlane.f32.xlu0 %v1791
        %v1793 = vpop.xlane.xlu0 %1792
        %v1794 = vmax.f32 %v1739, %v1740
        %1795 = vmax.xlane.f32.xlu0 %v1794
        %v1796 = vpop.xlane.xlu0 %1795
        %v1797 = vmax.f32 %v1741, %v1742
        %1798 = vmax.xlane.f32.xlu0 %v1797
        %v1799 = vpop.xlane.xlu0 %1798
        %v1800 = vmax.f32 %v1743, %v1744
        %1801 = vmax.xlane.f32.xlu0 %v1800
        %v1802 = vpop.xlane.xlu0 %1801
        %v1803 = vmax.f32 %v1745, %v1746
        %1804 = vmax.xlane.f32.xlu0 %v1803
        %v1805 = vpop.xlane.xlu0 %1804
        %v1806 = vmax.f32 %v1747, %v1748
        %1807 = vmax.xlane.f32.xlu0 %v1806
        %v1808 = vpop.xlane.xlu0 %1807
        %v1809 = vmax.f32 %v1749, %v1750
        %1810 = vmax.xlane.f32.xlu0 %v1809
        %v1811 = vpop.xlane.xlu0 %1810
        %v1812 = vmax.f32 %v1751, %v1752
        %1813 = vmax.xlane.f32.xlu0 %v1812
        %v1814 = vpop.xlane.xlu0 %1813
        %v1815 = vmax.f32 %v1753, %v1754
        %1816 = vmax.xlane.f32.xlu0 %v1815
        %v1817 = vpop.xlane.xlu0 %1816
        %v1818 = vmax.f32 %v1755, %v1756
        %1819 = vmax.xlane.f32.xlu0 %v1818
        %v1820 = vpop.xlane.xlu0 %1819
        %v1821 = vmax.f32 %v1757, %v1775
        %v1822 = vmax.f32 %v1758, %v1778
        %v1823 = vmax.f32 %v1759, %v1781
        %v1824 = vmax.f32 %v1760, %v1784
        %v1825 = vmax.f32 %v1761, %v1787
        %v1826 = vmax.f32 %v1762, %v1790
        %v1827 = vmax.f32 %v1763, %v1793
        %v1828 = vmax.f32 %v1764, %v1796
        %v1829 = vmax.f32 %v1765, %v1799
        %v1830 = vmax.f32 %v1766, %v1802
        %v1831 = vmax.f32 %v1767, %v1805
        %v1832 = vmax.f32 %v1768, %v1808
        %v1833 = vmax.f32 %v1769, %v1811
        %v1834 = vmax.f32 %v1770, %v1814
        %v1835 = vmax.f32 %v1771, %v1817
        %v1836 = vmax.f32 %v1772, %v1820
        %v1837 = vsub.f32 %v1757, %v1821
        %v1838 = vsub.f32 %v1758, %v1822
        %v1839 = vsub.f32 %v1759, %v1823
        %v1840 = vsub.f32 %v1760, %v1824
        %v1841 = vsub.f32 %v1761, %v1825
        %v1842 = vsub.f32 %v1762, %v1826
        %v1843 = vsub.f32 %v1763, %v1827
        %v1844 = vsub.f32 %v1764, %v1828
        %v1845 = vsub.f32 %v1765, %v1829
        %v1846 = vsub.f32 %v1766, %v1830
        %v1847 = vsub.f32 %v1767, %v1831
        %v1848 = vsub.f32 %v1768, %v1832
        %v1849 = vsub.f32 %v1769, %v1833
        %v1850 = vsub.f32 %v1770, %v1834
        %v1851 = vsub.f32 %v1771, %v1835
        %v1852 = vsub.f32 %v1772, %v1836
        %v1853 = vmul.f32 %v1837, 1.442695
        %v1854 = vpow.pop %v1853
        %v1855 = vmul.f32 %v1838, 1.442695
        %v1856 = vpow.pop %v1855
        %v1857 = vmul.f32 %v1839, 1.442695
        %v1858 = vpow.pop %v1857
        %v1859 = vmul.f32 %v1840, 1.442695
        %v1860 = vpow.pop %v1859
        %v1861 = vmul.f32 %v1841, 1.442695
        %v1862 = vpow.pop %v1861
        %v1863 = vmul.f32 %v1842, 1.442695
        %v1864 = vpow.pop %v1863
        %v1865 = vmul.f32 %v1843, 1.442695
        %v1866 = vpow.pop %v1865
        %v1867 = vmul.f32 %v1844, 1.442695
        %v1868 = vpow.pop %v1867
        %v1869 = vmul.f32 %v1845, 1.442695
        %v1870 = vpow.pop %v1869
        %v1871 = vmul.f32 %v1846, 1.442695
        %v1872 = vpow.pop %v1871
        %v1873 = vmul.f32 %v1847, 1.442695
        %v1874 = vpow.pop %v1873
        %v1875 = vmul.f32 %v1848, 1.442695
        %v1876 = vpow.pop %v1875
        %v1877 = vmul.f32 %v1849, 1.442695
        %v1878 = vpow.pop %v1877
        %v1879 = vmul.f32 %v1850, 1.442695
        %v1880 = vpow.pop %v1879
        %v1881 = vmul.f32 %v1851, 1.442695
        %v1882 = vpow.pop %v1881
        %v1883 = vmul.f32 %v1852, 1.442695
        %v1884 = vpow.pop %v1883
        %1886 = vset.pattern.permute.xlu0 0
        %1887 = vperm.xlu0 %1886, %v1821
        %v1888 = vpop.permute.xlu0 %1887
        %1891 = vset.pattern.permute.xlu0 0
        %1892 = vperm.xlu0 %1891, %v1822
        %v1893 = vpop.permute.xlu0 %1892
        %1896 = vset.pattern.permute.xlu0 0
        %1897 = vperm.xlu0 %1896, %v1823
        %v1898 = vpop.permute.xlu0 %1897
        %1901 = vset.pattern.permute.xlu0 0
        %1902 = vperm.xlu0 %1901, %v1824
        %v1903 = vpop.permute.xlu0 %1902
        %1906 = vset.pattern.permute.xlu0 0
        %1907 = vperm.xlu0 %1906, %v1825
        %v1908 = vpop.permute.xlu0 %1907
        %1911 = vset.pattern.permute.xlu0 0
        %1912 = vperm.xlu0 %1911, %v1826
        %v1913 = vpop.permute.xlu0 %1912
        %1916 = vset.pattern.permute.xlu0 0
        %1917 = vperm.xlu0 %1916, %v1827
        %v1918 = vpop.permute.xlu0 %1917
        %1921 = vset.pattern.permute.xlu0 0
        %1922 = vperm.xlu0 %1921, %v1828
        %v1923 = vpop.permute.xlu0 %1922
        %1926 = vset.pattern.permute.xlu0 0
        %1927 = vperm.xlu0 %1926, %v1829
        %v1928 = vpop.permute.xlu0 %1927
        %1931 = vset.pattern.permute.xlu0 0
        %1932 = vperm.xlu0 %1931, %v1830
        %v1933 = vpop.permute.xlu0 %1932
        %1936 = vset.pattern.permute.xlu0 0
        %1937 = vperm.xlu0 %1936, %v1831
        %v1938 = vpop.permute.xlu0 %1937
        %1941 = vset.pattern.permute.xlu0 0
        %1942 = vperm.xlu0 %1941, %v1832
        %v1943 = vpop.permute.xlu0 %1942
        %1946 = vset.pattern.permute.xlu0 0
        %1947 = vperm.xlu0 %1946, %v1833
        %v1948 = vpop.permute.xlu0 %1947
        %1951 = vset.pattern.permute.xlu0 0
        %1952 = vperm.xlu0 %1951, %v1834
        %v1953 = vpop.permute.xlu0 %1952
        %1956 = vset.pattern.permute.xlu0 0
        %1957 = vperm.xlu0 %1956, %v1835
        %v1958 = vpop.permute.xlu0 %1957
        %1961 = vset.pattern.permute.xlu0 0
        %1962 = vperm.xlu0 %1961, %v1836
        %v1963 = vpop.permute.xlu0 %1962
        %v1965 = vsub.f32 %v1725, %v1888
        %v1966 = vsub.f32 %v1726, %v1888
        %v1967 = vsub.f32 %v1727, %v1893
        %v1968 = vsub.f32 %v1728, %v1893
        %v1969 = vsub.f32 %v1729, %v1898
        %v1970 = vsub.f32 %v1730, %v1898
        %v1971 = vsub.f32 %v1731, %v1903
        %v1972 = vsub.f32 %v1732, %v1903
        %v1973 = vsub.f32 %v1733, %v1908
        %v1974 = vsub.f32 %v1734, %v1908
        %v1975 = vsub.f32 %v1735, %v1913
        %v1976 = vsub.f32 %v1736, %v1913
        %v1977 = vsub.f32 %v1737, %v1918
        %v1978 = vsub.f32 %v1738, %v1918
        %v1979 = vsub.f32 %v1739, %v1923
        %v1980 = vsub.f32 %v1740, %v1923
        %v1981 = vsub.f32 %v1741, %v1928
        %v1982 = vsub.f32 %v1742, %v1928
        %v1983 = vsub.f32 %v1743, %v1933
        %v1984 = vsub.f32 %v1744, %v1933
        %v1985 = vsub.f32 %v1745, %v1938
        %v1986 = vsub.f32 %v1746, %v1938
        %v1987 = vsub.f32 %v1747, %v1943
        %v1988 = vsub.f32 %v1748, %v1943
        %v1989 = vsub.f32 %v1749, %v1948
        %v1990 = vsub.f32 %v1750, %v1948
        %v1991 = vsub.f32 %v1751, %v1953
        %v1992 = vsub.f32 %v1752, %v1953
        %v1993 = vsub.f32 %v1753, %v1958
        %v1994 = vsub.f32 %v1754, %v1958
        %v1995 = vsub.f32 %v1755, %v1963
        %v1996 = vsub.f32 %v1756, %v1963
        %v1997 = vmul.f32 %v1965, 1.442695
        %v1998 = vpow.pop %v1997
        %v1999 = vmul.f32 %v1966, 1.442695
        %v2000 = vpow.pop %v1999
        %v2001 = vmul.f32 %v1967, 1.442695
        %v2002 = vpow.pop %v2001
        %v2003 = vmul.f32 %v1968, 1.442695
        %v2004 = vpow.pop %v2003
        %v2005 = vmul.f32 %v1969, 1.442695
        %v2006 = vpow.pop %v2005
        %v2007 = vmul.f32 %v1970, 1.442695
        %v2008 = vpow.pop %v2007
        %v2009 = vmul.f32 %v1971, 1.442695
        %v2010 = vpow.pop %v2009
        %v2011 = vmul.f32 %v1972, 1.442695
        %v2012 = vpow.pop %v2011
        %v2013 = vmul.f32 %v1973, 1.442695
        %v2014 = vpow.pop %v2013
        %v2015 = vmul.f32 %v1974, 1.442695
        %v2016 = vpow.pop %v2015
        %v2017 = vmul.f32 %v1975, 1.442695
        %v2018 = vpow.pop %v2017
        %v2019 = vmul.f32 %v1976, 1.442695
        %v2020 = vpow.pop %v2019
        %v2021 = vmul.f32 %v1977, 1.442695
        %v2022 = vpow.pop %v2021
        %v2023 = vmul.f32 %v1978, 1.442695
        %v2024 = vpow.pop %v2023
        %v2025 = vmul.f32 %v1979, 1.442695
        %v2026 = vpow.pop %v2025
        %v2027 = vmul.f32 %v1980, 1.442695
        %v2028 = vpow.pop %v2027
        %v2029 = vmul.f32 %v1981, 1.442695
        %v2030 = vpow.pop %v2029
        %v2031 = vmul.f32 %v1982, 1.442695
        %v2032 = vpow.pop %v2031
        %v2033 = vmul.f32 %v1983, 1.442695
        %v2034 = vpow.pop %v2033
        %v2035 = vmul.f32 %v1984, 1.442695
        %v2036 = vpow.pop %v2035
        %v2037 = vmul.f32 %v1985, 1.442695
        %v2038 = vpow.pop %v2037
        %v2039 = vmul.f32 %v1986, 1.442695
        %v2040 = vpow.pop %v2039
        %v2041 = vmul.f32 %v1987, 1.442695
        %v2042 = vpow.pop %v2041
        %v2043 = vmul.f32 %v1988, 1.442695
        %v2044 = vpow.pop %v2043
        %v2045 = vmul.f32 %v1989, 1.442695
        %v2046 = vpow.pop %v2045
        %v2047 = vmul.f32 %v1990, 1.442695
        %v2048 = vpow.pop %v2047
        %v2049 = vmul.f32 %v1991, 1.442695
        %v2050 = vpow.pop %v2049
        %v2051 = vmul.f32 %v1992, 1.442695
        %v2052 = vpow.pop %v2051
        %v2053 = vmul.f32 %v1993, 1.442695
        %v2054 = vpow.pop %v2053
        %v2055 = vmul.f32 %v1994, 1.442695
        %v2056 = vpow.pop %v2055
        %v2057 = vmul.f32 %v1995, 1.442695
        %v2058 = vpow.pop %v2057
        %v2059 = vmul.f32 %v1996, 1.442695
        %v2060 = vpow.pop %v2059
        %v2061 = vmul.f32 %v1998, %v581
        %v2062 = vmul.f32 %v2000, %v582
        %v2063 = vmul.f32 %v2002, %v583
        %v2064 = vmul.f32 %v2004, %v584
        %v2065 = vmul.f32 %v2006, %v585
        %v2066 = vmul.f32 %v2008, %v586
        %v2067 = vmul.f32 %v2010, %v587
        %v2068 = vmul.f32 %v2012, %v588
        %v2069 = vmul.f32 %v2014, %v589
        %v2070 = vmul.f32 %v2016, %v590
        %v2071 = vmul.f32 %v2018, %v591
        %v2072 = vmul.f32 %v2020, %v592
        %v2073 = vmul.f32 %v2022, %v593
        %v2074 = vmul.f32 %v2024, %v594
        %v2075 = vmul.f32 %v2026, %v595
        %v2076 = vmul.f32 %v2028, %v596
        %v2077 = vmul.f32 %v2030, %v597
        %v2078 = vmul.f32 %v2032, %v598
        %v2079 = vmul.f32 %v2034, %v599
        %v2080 = vmul.f32 %v2036, %v600
        %v2081 = vmul.f32 %v2038, %v601
        %v2082 = vmul.f32 %v2040, %v602
        %v2083 = vmul.f32 %v2042, %v603
        %v2084 = vmul.f32 %v2044, %v604
        %v2085 = vmul.f32 %v2046, %v605
        %v2086 = vmul.f32 %v2048, %v606
        %v2087 = vmul.f32 %v2050, %v607
        %v2088 = vmul.f32 %v2052, %v608
        %v2089 = vmul.f32 %v2054, %v609
        %v2090 = vmul.f32 %v2056, %v610
        %v2091 = vmul.f32 %v2058, %v611
        %v2092 = vmul.f32 %v2060, %v612
        %v2093 = vld [vmem:[#allocation3] sm:$0xff]
        %v2094 = vld [vmem:[#allocation3 + $0x8] sm:$0xff]
        %v2095 = vld [vmem:[#allocation3 + $0x10] sm:$0xff]
        %v2096 = vld [vmem:[#allocation3 + $0x18] sm:$0xff]
        %v2097 = vld [vmem:[#allocation3 + $0x20] sm:$0xff]
        %v2098 = vld [vmem:[#allocation3 + $0x28] sm:$0xff]
        %v2099 = vld [vmem:[#allocation3 + $0x30] sm:$0xff]
        %v2100 = vld [vmem:[#allocation3 + $0x38] sm:$0xff]
        %v2101 = vld [vmem:[#allocation3 + $0x40] sm:$0xff]
        %v2102 = vld [vmem:[#allocation3 + $0x48] sm:$0xff]
        %v2103 = vld [vmem:[#allocation3 + $0x50] sm:$0xff]
        %v2104 = vld [vmem:[#allocation3 + $0x58] sm:$0xff]
        %v2105 = vld [vmem:[#allocation3 + $0x60] sm:$0xff]
        %v2106 = vld [vmem:[#allocation3 + $0x68] sm:$0xff]
        %v2107 = vld [vmem:[#allocation3 + $0x70] sm:$0xff]
        %v2108 = vld [vmem:[#allocation3 + $0x78] sm:$0xff]
        %v2109 = vmul.f32 %v1854, %v2093
        %v2110 = vmul.f32 %v1856, %v2094
        %v2111 = vmul.f32 %v1858, %v2095
        %v2112 = vmul.f32 %v1860, %v2096
        %v2113 = vmul.f32 %v1862, %v2097
        %v2114 = vmul.f32 %v1864, %v2098
        %v2115 = vmul.f32 %v1866, %v2099
        %v2116 = vmul.f32 %v1868, %v2100
        %v2117 = vmul.f32 %v1870, %v2101
        %v2118 = vmul.f32 %v1872, %v2102
        %v2119 = vmul.f32 %v1874, %v2103
        %v2120 = vmul.f32 %v1876, %v2104
        %v2121 = vmul.f32 %v1878, %v2105
        %v2122 = vmul.f32 %v1880, %v2106
        %v2123 = vmul.f32 %v1882, %v2107
        %v2124 = vmul.f32 %v1884, %v2108
        %v2125 = vadd.f32 %v2061, %v2062
        %2126 = vadd.xlane.f32.xlu0 %v2125
        %v2127 = vpop.xlane.xlu0 %2126
        %v2128 = vadd.f32 %v2063, %v2064
        %2129 = vadd.xlane.f32.xlu0 %v2128
        %v2130 = vpop.xlane.xlu0 %2129
        %v2131 = vadd.f32 %v2065, %v2066
        %2132 = vadd.xlane.f32.xlu0 %v2131
        %v2133 = vpop.xlane.xlu0 %2132
        %v2134 = vadd.f32 %v2067, %v2068
        %2135 = vadd.xlane.f32.xlu0 %v2134
        %v2136 = vpop.xlane.xlu0 %2135
        %v2137 = vadd.f32 %v2069, %v2070
        %2138 = vadd.xlane.f32.xlu0 %v2137
        %v2139 = vpop.xlane.xlu0 %2138
        %v2140 = vadd.f32 %v2071, %v2072
        %2141 = vadd.xlane.f32.xlu0 %v2140
        %v2142 = vpop.xlane.xlu0 %2141
        %v2143 = vadd.f32 %v2073, %v2074
        %2144 = vadd.xlane.f32.xlu0 %v2143
        %v2145 = vpop.xlane.xlu0 %2144
        %v2146 = vadd.f32 %v2075, %v2076
        %2147 = vadd.xlane.f32.xlu0 %v2146
        %v2148 = vpop.xlane.xlu0 %2147
        %v2149 = vadd.f32 %v2077, %v2078
        %2150 = vadd.xlane.f32.xlu0 %v2149
        %v2151 = vpop.xlane.xlu0 %2150
        %v2152 = vadd.f32 %v2079, %v2080
        %2153 = vadd.xlane.f32.xlu0 %v2152
        %v2154 = vpop.xlane.xlu0 %2153
        %v2155 = vadd.f32 %v2081, %v2082
        %2156 = vadd.xlane.f32.xlu0 %v2155
        %v2157 = vpop.xlane.xlu0 %2156
        %v2158 = vadd.f32 %v2083, %v2084
        %2159 = vadd.xlane.f32.xlu0 %v2158
        %v2160 = vpop.xlane.xlu0 %2159
        %v2161 = vadd.f32 %v2085, %v2086
        %2162 = vadd.xlane.f32.xlu0 %v2161
        %v2163 = vpop.xlane.xlu0 %2162
        %v2164 = vadd.f32 %v2087, %v2088
        %2165 = vadd.xlane.f32.xlu0 %v2164
        %v2166 = vpop.xlane.xlu0 %2165
        %v2167 = vadd.f32 %v2089, %v2090
        %2168 = vadd.xlane.f32.xlu0 %v2167
        %v2169 = vpop.xlane.xlu0 %2168
        %v2170 = vadd.f32 %v2091, %v2092
        %2171 = vadd.xlane.f32.xlu0 %v2170
        %v2172 = vpop.xlane.xlu0 %2171
        %v2173 = vadd.f32 %v2109, %v2127
        %v2174 = vadd.f32 %v2110, %v2130
        %v2175 = vadd.f32 %v2111, %v2133
        %v2176 = vadd.f32 %v2112, %v2136
        %v2177 = vadd.f32 %v2113, %v2139
        %v2178 = vadd.f32 %v2114, %v2142
        %v2179 = vadd.f32 %v2115, %v2145
        %v2180 = vadd.f32 %v2116, %v2148
        %v2181 = vadd.f32 %v2117, %v2151
        %v2182 = vadd.f32 %v2118, %v2154
        %v2183 = vadd.f32 %v2119, %v2157
        %v2184 = vadd.f32 %v2120, %v2160
        %v2185 = vadd.f32 %v2121, %v2163
        %v2186 = vadd.f32 %v2122, %v2166
        %v2187 = vadd.f32 %v2123, %v2169
        %v2188 = vadd.f32 %v2124, %v2172
        %vm2189 = vcmask 7168
        %2190 = vst.msk [vmem:[#allocation3] sm:$0xff] %vm2189, %v2173
        %2191 = vst.msk [vmem:[#allocation3 + $0x8] sm:$0xff] %vm2189, %v2174
        %2192 = vst.msk [vmem:[#allocation3 + $0x10] sm:$0xff] %vm2189, %v2175
        %2193 = vst.msk [vmem:[#allocation3 + $0x18] sm:$0xff] %vm2189, %v2176
        %2194 = vst.msk [vmem:[#allocation3 + $0x20] sm:$0xff] %vm2189, %v2177
        %2195 = vst.msk [vmem:[#allocation3 + $0x28] sm:$0xff] %vm2189, %v2178
        %2196 = vst.msk [vmem:[#allocation3 + $0x30] sm:$0xff] %vm2189, %v2179
        %2197 = vst.msk [vmem:[#allocation3 + $0x38] sm:$0xff] %vm2189, %v2180
        %2198 = vst.msk [vmem:[#allocation3 + $0x40] sm:$0xff] %vm2189, %v2181
        %2199 = vst.msk [vmem:[#allocation3 + $0x48] sm:$0xff] %vm2189, %v2182
        %2200 = vst.msk [vmem:[#allocation3 + $0x50] sm:$0xff] %vm2189, %v2183
        %2201 = vst.msk [vmem:[#allocation3 + $0x58] sm:$0xff] %vm2189, %v2184
        %2202 = vst.msk [vmem:[#allocation3 + $0x60] sm:$0xff] %vm2189, %v2185
        %2203 = vst.msk [vmem:[#allocation3 + $0x68] sm:$0xff] %vm2189, %v2186
        %2204 = vst.msk [vmem:[#allocation3 + $0x70] sm:$0xff] %vm2189, %v2187
        %2205 = vst.msk [vmem:[#allocation3 + $0x78] sm:$0xff] %vm2189, %v2188
        %v2206 = vld [vmem:[#allocation4] sm:$0xff]
        %v2207 = vld [vmem:[#allocation4 + $0x8] sm:$0xff]
        %v2208 = vld [vmem:[#allocation4 + $0x10] sm:$0xff]
        %v2209 = vld [vmem:[#allocation4 + $0x18] sm:$0xff]
        %v2210 = vld [vmem:[#allocation4 + $0x20] sm:$0xff]
        %v2211 = vld [vmem:[#allocation4 + $0x28] sm:$0xff]
        %v2212 = vld [vmem:[#allocation4 + $0x30] sm:$0xff]
        %v2213 = vld [vmem:[#allocation4 + $0x38] sm:$0xff]
        %v2214 = vld [vmem:[#allocation4 + $0x40] sm:$0xff]
        %v2215 = vld [vmem:[#allocation4 + $0x48] sm:$0xff]
        %v2216 = vld [vmem:[#allocation4 + $0x50] sm:$0xff]
        %v2217 = vld [vmem:[#allocation4 + $0x58] sm:$0xff]
        %v2218 = vld [vmem:[#allocation4 + $0x60] sm:$0xff]
        %v2219 = vld [vmem:[#allocation4 + $0x68] sm:$0xff]
        %v2220 = vld [vmem:[#allocation4 + $0x70] sm:$0xff]
        %v2221 = vld [vmem:[#allocation4 + $0x78] sm:$0xff]
        %2223 = vset.pattern.permute.xlu0 0
        %2224 = vperm.xlu0 %2223, %v1854
        %v2225 = vpop.permute.xlu0 %2224
        %2228 = vset.pattern.permute.xlu0 0
        %2229 = vperm.xlu0 %2228, %v1856
        %v2230 = vpop.permute.xlu0 %2229
        %2233 = vset.pattern.permute.xlu0 0
        %2234 = vperm.xlu0 %2233, %v1858
        %v2235 = vpop.permute.xlu0 %2234
        %2238 = vset.pattern.permute.xlu0 0
        %2239 = vperm.xlu0 %2238, %v1860
        %v2240 = vpop.permute.xlu0 %2239
        %2243 = vset.pattern.permute.xlu0 0
        %2244 = vperm.xlu0 %2243, %v1862
        %v2245 = vpop.permute.xlu0 %2244
        %2248 = vset.pattern.permute.xlu0 0
        %2249 = vperm.xlu0 %2248, %v1864
        %v2250 = vpop.permute.xlu0 %2249
        %2253 = vset.pattern.permute.xlu0 0
        %2254 = vperm.xlu0 %2253, %v1866
        %v2255 = vpop.permute.xlu0 %2254
        %2258 = vset.pattern.permute.xlu0 0
        %2259 = vperm.xlu0 %2258, %v1868
        %v2260 = vpop.permute.xlu0 %2259
        %2263 = vset.pattern.permute.xlu0 0
        %2264 = vperm.xlu0 %2263, %v1870
        %v2265 = vpop.permute.xlu0 %2264
        %2268 = vset.pattern.permute.xlu0 0
        %2269 = vperm.xlu0 %2268, %v1872
        %v2270 = vpop.permute.xlu0 %2269
        %2273 = vset.pattern.permute.xlu0 0
        %2274 = vperm.xlu0 %2273, %v1874
        %v2275 = vpop.permute.xlu0 %2274
        %2278 = vset.pattern.permute.xlu0 0
        %2279 = vperm.xlu0 %2278, %v1876
        %v2280 = vpop.permute.xlu0 %2279
        %2283 = vset.pattern.permute.xlu0 0
        %2284 = vperm.xlu0 %2283, %v1878
        %v2285 = vpop.permute.xlu0 %2284
        %2288 = vset.pattern.permute.xlu0 0
        %2289 = vperm.xlu0 %2288, %v1880
        %v2290 = vpop.permute.xlu0 %2289
        %2293 = vset.pattern.permute.xlu0 0
        %2294 = vperm.xlu0 %2293, %v1882
        %v2295 = vpop.permute.xlu0 %2294
        %2298 = vset.pattern.permute.xlu0 0
        %2299 = vperm.xlu0 %2298, %v1884
        %v2300 = vpop.permute.xlu0 %2299
        %v2302 = vmul.f32 %v2225, %v2206
        %v2303 = vmul.f32 %v2230, %v2207
        %v2304 = vmul.f32 %v2235, %v2208
        %v2305 = vmul.f32 %v2240, %v2209
        %v2306 = vmul.f32 %v2245, %v2210
        %v2307 = vmul.f32 %v2250, %v2211
        %v2308 = vmul.f32 %v2255, %v2212
        %v2309 = vmul.f32 %v2260, %v2213
        %v2310 = vmul.f32 %v2265, %v2214
        %v2311 = vmul.f32 %v2270, %v2215
        %v2312 = vmul.f32 %v2275, %v2216
        %v2313 = vmul.f32 %v2280, %v2217
        %v2314 = vmul.f32 %v2285, %v2218
        %v2315 = vmul.f32 %v2290, %v2219
        %v2316 = vmul.f32 %v2295, %v2220
        %v2317 = vmul.f32 %v2300, %v2221
        %v2318 = vpack.c.bf16 %v2063, %v2061
        %v2319 = vpack.c.bf16 %v2064, %v2062
        %v2320 = vpack.c.bf16 %v2067, %v2065
        %v2321 = vpack.c.bf16 %v2068, %v2066
        %v2322 = vpack.c.bf16 %v2071, %v2069
        %v2323 = vpack.c.bf16 %v2072, %v2070
        %v2324 = vpack.c.bf16 %v2075, %v2073
        %v2325 = vpack.c.bf16 %v2076, %v2074
        %v2326 = vpack.c.bf16 %v2079, %v2077
        %v2327 = vpack.c.bf16 %v2080, %v2078
        %v2328 = vpack.c.bf16 %v2083, %v2081
        %v2329 = vpack.c.bf16 %v2084, %v2082
        %v2330 = vpack.c.bf16 %v2087, %v2085
        %v2331 = vpack.c.bf16 %v2088, %v2086
        %v2332 = vpack.c.bf16 %v2091, %v2089
        %v2333 = vpack.c.bf16 %v2092, %v2090
        %2334 = vmatpush.bf16.msra.mxu0 %v732
        %2335 = vmatpush.bf16.msra.mxu0 %v731
        %2336 = vmatpush.bf16.msra.mxu0 %v730
        %2337 = vmatpush.bf16.msra.mxu0 %v729
        %2338 = vmatpush.bf16.msra.mxu0 %v728
        %2339 = vmatpush.bf16.msra.mxu0 %v727
        %2340 = vmatpush.bf16.msra.mxu0 %v726
        %2341 = vmatpush.bf16.msra.mxu0 %v725
        %2342 = vmatmul.bf16.gmra.mxu0 %v2318
        %v2343 = vpop.f32.mrf.mxu0
        %v2344 = vadd.f32 0.0, %v2343
        %v2345 = vpop.f32.mrf.mxu0
        %v2346 = vadd.f32 0.0, %v2345
        %2347 = vmatmul.bf16.gmra.mxu0 %v2320
        %v2348 = vpop.f32.mrf.mxu0
        %v2349 = vadd.f32 0.0, %v2348
        %v2350 = vpop.f32.mrf.mxu0
        %v2351 = vadd.f32 0.0, %v2350
        %2352 = vmatmul.bf16.gmra.mxu0 %v2322
        %v2353 = vpop.f32.mrf.mxu0
        %v2354 = vadd.f32 0.0, %v2353
        %v2355 = vpop.f32.mrf.mxu0
        %v2356 = vadd.f32 0.0, %v2355
        %2357 = vmatmul.bf16.gmra.mxu0 %v2324
        %v2358 = vpop.f32.mrf.mxu0
        %v2359 = vadd.f32 0.0, %v2358
        %v2360 = vpop.f32.mrf.mxu0
        %v2361 = vadd.f32 0.0, %v2360
        %2362 = vmatmul.bf16.gmra.mxu0 %v2326
        %v2363 = vpop.f32.mrf.mxu0
        %v2364 = vadd.f32 0.0, %v2363
        %v2365 = vpop.f32.mrf.mxu0
        %v2366 = vadd.f32 0.0, %v2365
        %2367 = vmatmul.bf16.gmra.mxu0 %v2328
        %v2368 = vpop.f32.mrf.mxu0
        %v2369 = vadd.f32 0.0, %v2368
        %v2370 = vpop.f32.mrf.mxu0
        %v2371 = vadd.f32 0.0, %v2370
        %2372 = vmatmul.bf16.gmra.mxu0 %v2330
        %v2373 = vpop.f32.mrf.mxu0
        %v2374 = vadd.f32 0.0, %v2373
        %v2375 = vpop.f32.mrf.mxu0
        %v2376 = vadd.f32 0.0, %v2375
        %2377 = vmatmul.bf16.gmra.mxu0 %v2332
        %v2378 = vpop.f32.mrf.mxu0
        %v2379 = vadd.f32 0.0, %v2378
        %v2380 = vpop.f32.mrf.mxu0
        %v2381 = vadd.f32 0.0, %v2380
        %2382 = vdwg.mxu0
        %2383 = vmatpush.bf16.msra.mxu0 %v740
        %2384 = vmatpush.bf16.msra.mxu0 %v739
        %2385 = vmatpush.bf16.msra.mxu0 %v738
        %2386 = vmatpush.bf16.msra.mxu0 %v737
        %2387 = vmatpush.bf16.msra.mxu0 %v736
        %2388 = vmatpush.bf16.msra.mxu0 %v735
        %2389 = vmatpush.bf16.msra.mxu0 %v734
        %2390 = vmatpush.bf16.msra.mxu0 %v733
        %2391 = vmatmul.bf16.gmra.mxu0 %v2319
        %v2392 = vpop.f32.mrf.mxu0
        %v2393 = vadd.f32 %v2344, %v2392
        %v2394 = vpop.f32.mrf.mxu0
        %v2395 = vadd.f32 %v2346, %v2394
        %2396 = vmatmul.bf16.gmra.mxu0 %v2321
        %v2397 = vpop.f32.mrf.mxu0
        %v2398 = vadd.f32 %v2349, %v2397
        %v2399 = vpop.f32.mrf.mxu0
        %v2400 = vadd.f32 %v2351, %v2399
        %2401 = vmatmul.bf16.gmra.mxu0 %v2323
        %v2402 = vpop.f32.mrf.mxu0
        %v2403 = vadd.f32 %v2354, %v2402
        %v2404 = vpop.f32.mrf.mxu0
        %v2405 = vadd.f32 %v2356, %v2404
        %2406 = vmatmul.bf16.gmra.mxu0 %v2325
        %v2407 = vpop.f32.mrf.mxu0
        %v2408 = vadd.f32 %v2359, %v2407
        %v2409 = vpop.f32.mrf.mxu0
        %v2410 = vadd.f32 %v2361, %v2409
        %2411 = vmatmul.bf16.gmra.mxu0 %v2327
        %v2412 = vpop.f32.mrf.mxu0
        %v2413 = vadd.f32 %v2364, %v2412
        %v2414 = vpop.f32.mrf.mxu0
        %v2415 = vadd.f32 %v2366, %v2414
        %2416 = vmatmul.bf16.gmra.mxu0 %v2329
        %v2417 = vpop.f32.mrf.mxu0
        %v2418 = vadd.f32 %v2369, %v2417
        %v2419 = vpop.f32.mrf.mxu0
        %v2420 = vadd.f32 %v2371, %v2419
        %2421 = vmatmul.bf16.gmra.mxu0 %v2331
        %v2422 = vpop.f32.mrf.mxu0
        %v2423 = vadd.f32 %v2374, %v2422
        %v2424 = vpop.f32.mrf.mxu0
        %v2425 = vadd.f32 %v2376, %v2424
        %2426 = vmatmul.bf16.gmra.mxu0 %v2333
        %v2427 = vpop.f32.mrf.mxu0
        %v2428 = vadd.f32 %v2379, %v2427
        %v2429 = vpop.f32.mrf.mxu0
        %v2430 = vadd.f32 %v2381, %v2429
        %2431 = vdwg.mxu0
        %v2432 = vadd.f32 %v2302, %v2393
        %v2433 = vadd.f32 %v2303, %v2395
        %v2434 = vadd.f32 %v2304, %v2398
        %v2435 = vadd.f32 %v2305, %v2400
        %v2436 = vadd.f32 %v2306, %v2403
        %v2437 = vadd.f32 %v2307, %v2405
        %v2438 = vadd.f32 %v2308, %v2408
        %v2439 = vadd.f32 %v2309, %v2410
        %v2440 = vadd.f32 %v2310, %v2413
        %v2441 = vadd.f32 %v2311, %v2415
        %v2442 = vadd.f32 %v2312, %v2418
        %v2443 = vadd.f32 %v2313, %v2420
        %v2444 = vadd.f32 %v2314, %v2423
        %v2445 = vadd.f32 %v2315, %v2425
        %v2446 = vadd.f32 %v2316, %v2428
        %v2447 = vadd.f32 %v2317, %v2430
        %2448 = vst [vmem:[#allocation4] sm:$0xff] %v2432
        %2449 = vst [vmem:[#allocation4 + $0x8] sm:$0xff] %v2433
        %2450 = vst [vmem:[#allocation4 + $0x10] sm:$0xff] %v2434
        %2451 = vst [vmem:[#allocation4 + $0x18] sm:$0xff] %v2435
        %2452 = vst [vmem:[#allocation4 + $0x20] sm:$0xff] %v2436
        %2453 = vst [vmem:[#allocation4 + $0x28] sm:$0xff] %v2437
        %2454 = vst [vmem:[#allocation4 + $0x30] sm:$0xff] %v2438
        %2455 = vst [vmem:[#allocation4 + $0x38] sm:$0xff] %v2439
        %2456 = vst [vmem:[#allocation4 + $0x40] sm:$0xff] %v2440
        %2457 = vst [vmem:[#allocation4 + $0x48] sm:$0xff] %v2441
        %2458 = vst [vmem:[#allocation4 + $0x50] sm:$0xff] %v2442
        %2459 = vst [vmem:[#allocation4 + $0x58] sm:$0xff] %v2443
        %2460 = vst [vmem:[#allocation4 + $0x60] sm:$0xff] %v2444
        %2461 = vst [vmem:[#allocation4 + $0x68] sm:$0xff] %v2445
        %2462 = vst [vmem:[#allocation4 + $0x70] sm:$0xff] %v2446
        %2463 = vst [vmem:[#allocation4 + $0x78] sm:$0xff] %v2447
        %2464 = vst.msk [vmem:[#allocation2] sm:$0xff] %vm2189, %v1821
        %2465 = vst.msk [vmem:[#allocation2 + $0x8] sm:$0xff] %vm2189, %v1822
        %2466 = vst.msk [vmem:[#allocation2 + $0x10] sm:$0xff] %vm2189, %v1823
        %2467 = vst.msk [vmem:[#allocation2 + $0x18] sm:$0xff] %vm2189, %v1824
        %2468 = vst.msk [vmem:[#allocation2 + $0x20] sm:$0xff] %vm2189, %v1825
        %2469 = vst.msk [vmem:[#allocation2 + $0x28] sm:$0xff] %vm2189, %v1826
        %2470 = vst.msk [vmem:[#allocation2 + $0x30] sm:$0xff] %vm2189, %v1827
        %2471 = vst.msk [vmem:[#allocation2 + $0x38] sm:$0xff] %vm2189, %v1828
        %2472 = vst.msk [vmem:[#allocation2 + $0x40] sm:$0xff] %vm2189, %v1829
        %2473 = vst.msk [vmem:[#allocation2 + $0x48] sm:$0xff] %vm2189, %v1830
        %2474 = vst.msk [vmem:[#allocation2 + $0x50] sm:$0xff] %vm2189, %v1831
        %2475 = vst.msk [vmem:[#allocation2 + $0x58] sm:$0xff] %vm2189, %v1832
        %2476 = vst.msk [vmem:[#allocation2 + $0x60] sm:$0xff] %vm2189, %v1833
        %2477 = vst.msk [vmem:[#allocation2 + $0x68] sm:$0xff] %vm2189, %v1834
        %2478 = vst.msk [vmem:[#allocation2 + $0x70] sm:$0xff] %vm2189, %v1835
        %2479 = vst.msk [vmem:[#allocation2 + $0x78] sm:$0xff] %vm2189, %v1836
      $region60: #{supergat_forward.3} parent=51 // pred_fallthru
        _
      // Predicated region
      $region61: #{supergat_forward.3} parent=51 // pred_check
        %p2480 = pneg %p434
      $region62: #{supergat_forward.3} parent=51 // pred_check_branch
        %2482 = sbr.rel (%p2480) target = $region64
      $region63: #{supergat_forward.3} parent=51 // pred_region
        %v2483 = vld [vmem:[#allocation3] sm:$0xff]
        %v2484 = vld [vmem:[#allocation3 + $0x8] sm:$0xff]
        %v2485 = vld [vmem:[#allocation3 + $0x10] sm:$0xff]
        %v2486 = vld [vmem:[#allocation3 + $0x18] sm:$0xff]
        %v2487 = vld [vmem:[#allocation3 + $0x20] sm:$0xff]
        %v2488 = vld [vmem:[#allocation3 + $0x28] sm:$0xff]
        %v2489 = vld [vmem:[#allocation3 + $0x30] sm:$0xff]
        %v2490 = vld [vmem:[#allocation3 + $0x38] sm:$0xff]
        %v2491 = vld [vmem:[#allocation3 + $0x40] sm:$0xff]
        %v2492 = vld [vmem:[#allocation3 + $0x48] sm:$0xff]
        %v2493 = vld [vmem:[#allocation3 + $0x50] sm:$0xff]
        %v2494 = vld [vmem:[#allocation3 + $0x58] sm:$0xff]
        %v2495 = vld [vmem:[#allocation3 + $0x60] sm:$0xff]
        %v2496 = vld [vmem:[#allocation3 + $0x68] sm:$0xff]
        %v2497 = vld [vmem:[#allocation3 + $0x70] sm:$0xff]
        %v2498 = vld [vmem:[#allocation3 + $0x78] sm:$0xff]
        %vm2499 = vcmp.gt.f32.partialorder %v2483, 0.0
        %vm2500 = vcmp.gt.f32.partialorder %v2484, 0.0
        %vm2501 = vcmp.gt.f32.partialorder %v2485, 0.0
        %vm2502 = vcmp.gt.f32.partialorder %v2486, 0.0
        %vm2503 = vcmp.gt.f32.partialorder %v2487, 0.0
        %vm2504 = vcmp.gt.f32.partialorder %v2488, 0.0
        %vm2505 = vcmp.gt.f32.partialorder %v2489, 0.0
        %vm2506 = vcmp.gt.f32.partialorder %v2490, 0.0
        %vm2507 = vcmp.gt.f32.partialorder %v2491, 0.0
        %vm2508 = vcmp.gt.f32.partialorder %v2492, 0.0
        %vm2509 = vcmp.gt.f32.partialorder %v2493, 0.0
        %vm2510 = vcmp.gt.f32.partialorder %v2494, 0.0
        %vm2511 = vcmp.gt.f32.partialorder %v2495, 0.0
        %vm2512 = vcmp.gt.f32.partialorder %v2496, 0.0
        %vm2513 = vcmp.gt.f32.partialorder %v2497, 0.0
        %vm2514 = vcmp.gt.f32.partialorder %v2498, 0.0
        %v2515 = vsel %vm2499, %v2483, 1.0
        %v2516 = vsel %vm2500, %v2484, 1.0
        %v2517 = vsel %vm2501, %v2485, 1.0
        %v2518 = vsel %vm2502, %v2486, 1.0
        %v2519 = vsel %vm2503, %v2487, 1.0
        %v2520 = vsel %vm2504, %v2488, 1.0
        %v2521 = vsel %vm2505, %v2489, 1.0
        %v2522 = vsel %vm2506, %v2490, 1.0
        %v2523 = vsel %vm2507, %v2491, 1.0
        %v2524 = vsel %vm2508, %v2492, 1.0
        %v2525 = vsel %vm2509, %v2493, 1.0
        %v2526 = vsel %vm2510, %v2494, 1.0
        %v2527 = vsel %vm2511, %v2495, 1.0
        %v2528 = vsel %vm2512, %v2496, 1.0
        %v2529 = vsel %vm2513, %v2497, 1.0
        %v2530 = vsel %vm2514, %v2498, 1.0
        %v2531 = vld [vmem:[#allocation4] sm:$0xff]
        %v2532 = vld [vmem:[#allocation4 + $0x8] sm:$0xff]
        %v2533 = vld [vmem:[#allocation4 + $0x10] sm:$0xff]
        %v2534 = vld [vmem:[#allocation4 + $0x18] sm:$0xff]
        %v2535 = vld [vmem:[#allocation4 + $0x20] sm:$0xff]
        %v2536 = vld [vmem:[#allocation4 + $0x28] sm:$0xff]
        %v2537 = vld [vmem:[#allocation4 + $0x30] sm:$0xff]
        %v2538 = vld [vmem:[#allocation4 + $0x38] sm:$0xff]
        %v2539 = vld [vmem:[#allocation4 + $0x40] sm:$0xff]
        %v2540 = vld [vmem:[#allocation4 + $0x48] sm:$0xff]
        %v2541 = vld [vmem:[#allocation4 + $0x50] sm:$0xff]
        %v2542 = vld [vmem:[#allocation4 + $0x58] sm:$0xff]
        %v2543 = vld [vmem:[#allocation4 + $0x60] sm:$0xff]
        %v2544 = vld [vmem:[#allocation4 + $0x68] sm:$0xff]
        %v2545 = vld [vmem:[#allocation4 + $0x70] sm:$0xff]
        %v2546 = vld [vmem:[#allocation4 + $0x78] sm:$0xff]
        %v2547 = vrcp.pop %v2515
        %v2548 = vrcp.pop %v2516
        %v2549 = vrcp.pop %v2517
        %v2550 = vrcp.pop %v2518
        %v2551 = vrcp.pop %v2519
        %v2552 = vrcp.pop %v2520
        %v2553 = vrcp.pop %v2521
        %v2554 = vrcp.pop %v2522
        %v2555 = vrcp.pop %v2523
        %v2556 = vrcp.pop %v2524
        %v2557 = vrcp.pop %v2525
        %v2558 = vrcp.pop %v2526
        %v2559 = vrcp.pop %v2527
        %v2560 = vrcp.pop %v2528
        %v2561 = vrcp.pop %v2529
        %v2562 = vrcp.pop %v2530
        %2564 = vset.pattern.permute.xlu0 0
        %2565 = vperm.xlu0 %2564, %v2547
        %v2566 = vpop.permute.xlu0 %2565
        %2569 = vset.pattern.permute.xlu0 0
        %2570 = vperm.xlu0 %2569, %v2548
        %v2571 = vpop.permute.xlu0 %2570
        %2574 = vset.pattern.permute.xlu0 0
        %2575 = vperm.xlu0 %2574, %v2549
        %v2576 = vpop.permute.xlu0 %2575
        %2579 = vset.pattern.permute.xlu0 0
        %2580 = vperm.xlu0 %2579, %v2550
        %v2581 = vpop.permute.xlu0 %2580
        %2584 = vset.pattern.permute.xlu0 0
        %2585 = vperm.xlu0 %2584, %v2551
        %v2586 = vpop.permute.xlu0 %2585
        %2589 = vset.pattern.permute.xlu0 0
        %2590 = vperm.xlu0 %2589, %v2552
        %v2591 = vpop.permute.xlu0 %2590
        %2594 = vset.pattern.permute.xlu0 0
        %2595 = vperm.xlu0 %2594, %v2553
        %v2596 = vpop.permute.xlu0 %2595
        %2599 = vset.pattern.permute.xlu0 0
        %2600 = vperm.xlu0 %2599, %v2554
        %v2601 = vpop.permute.xlu0 %2600
        %2604 = vset.pattern.permute.xlu0 0
        %2605 = vperm.xlu0 %2604, %v2555
        %v2606 = vpop.permute.xlu0 %2605
        %2609 = vset.pattern.permute.xlu0 0
        %2610 = vperm.xlu0 %2609, %v2556
        %v2611 = vpop.permute.xlu0 %2610
        %2614 = vset.pattern.permute.xlu0 0
        %2615 = vperm.xlu0 %2614, %v2557
        %v2616 = vpop.permute.xlu0 %2615
        %2619 = vset.pattern.permute.xlu0 0
        %2620 = vperm.xlu0 %2619, %v2558
        %v2621 = vpop.permute.xlu0 %2620
        %2624 = vset.pattern.permute.xlu0 0
        %2625 = vperm.xlu0 %2624, %v2559
        %v2626 = vpop.permute.xlu0 %2625
        %2629 = vset.pattern.permute.xlu0 0
        %2630 = vperm.xlu0 %2629, %v2560
        %v2631 = vpop.permute.xlu0 %2630
        %2634 = vset.pattern.permute.xlu0 0
        %2635 = vperm.xlu0 %2634, %v2561
        %v2636 = vpop.permute.xlu0 %2635
        %2639 = vset.pattern.permute.xlu0 0
        %2640 = vperm.xlu0 %2639, %v2562
        %v2641 = vpop.permute.xlu0 %2640
        %v2643 = vmul.f32 %v2531, %v2566
        %v2644 = vmul.f32 %v2532, %v2571
        %v2645 = vmul.f32 %v2533, %v2576
        %v2646 = vmul.f32 %v2534, %v2581
        %v2647 = vmul.f32 %v2535, %v2586
        %v2648 = vmul.f32 %v2536, %v2591
        %v2649 = vmul.f32 %v2537, %v2596
        %v2650 = vmul.f32 %v2538, %v2601
        %v2651 = vmul.f32 %v2539, %v2606
        %v2652 = vmul.f32 %v2540, %v2611
        %v2653 = vmul.f32 %v2541, %v2616
        %v2654 = vmul.f32 %v2542, %v2621
        %v2655 = vmul.f32 %v2543, %v2626
        %v2656 = vmul.f32 %v2544, %v2631
        %v2657 = vmul.f32 %v2545, %v2636
        %v2658 = vmul.f32 %v2546, %v2641
        %v2659 = vld [vmem:[%s6] sm:$0x1]
        %v2661 = vperm.slane %v2659, 0
        %v2663 = vadd.f32 %v2643, %v2661
        %v2664 = vadd.f32 %v2644, %v2661
        %v2665 = vadd.f32 %v2645, %v2661
        %v2666 = vadd.f32 %v2646, %v2661
        %v2667 = vadd.f32 %v2647, %v2661
        %v2668 = vadd.f32 %v2648, %v2661
        %v2669 = vadd.f32 %v2649, %v2661
        %v2670 = vadd.f32 %v2650, %v2661
        %v2671 = vadd.f32 %v2651, %v2661
        %v2672 = vadd.f32 %v2652, %v2661
        %v2673 = vadd.f32 %v2653, %v2661
        %v2674 = vadd.f32 %v2654, %v2661
        %v2675 = vadd.f32 %v2655, %v2661
        %v2676 = vadd.f32 %v2656, %v2661
        %v2677 = vadd.f32 %v2657, %v2661
        %v2678 = vadd.f32 %v2658, %v2661
        %vm2679 = vcmp.gt.f32.partialorder %v2663, 0.0
        %vm2680 = vcmp.gt.f32.partialorder %v2664, 0.0
        %vm2681 = vcmp.gt.f32.partialorder %v2665, 0.0
        %vm2682 = vcmp.gt.f32.partialorder %v2666, 0.0
        %vm2683 = vcmp.gt.f32.partialorder %v2667, 0.0
        %vm2684 = vcmp.gt.f32.partialorder %v2668, 0.0
        %vm2685 = vcmp.gt.f32.partialorder %v2669, 0.0
        %vm2686 = vcmp.gt.f32.partialorder %v2670, 0.0
        %vm2687 = vcmp.gt.f32.partialorder %v2671, 0.0
        %vm2688 = vcmp.gt.f32.partialorder %v2672, 0.0
        %vm2689 = vcmp.gt.f32.partialorder %v2673, 0.0
        %vm2690 = vcmp.gt.f32.partialorder %v2674, 0.0
        %vm2691 = vcmp.gt.f32.partialorder %v2675, 0.0
        %vm2692 = vcmp.gt.f32.partialorder %v2676, 0.0
        %vm2693 = vcmp.gt.f32.partialorder %v2677, 0.0
        %vm2694 = vcmp.gt.f32.partialorder %v2678, 0.0
        %v2695 = vmul.f32 %v2663, 1.442695
        %v2696 = vpow.pop %v2695
        %v2697 = vmul.f32 %v2664, 1.442695
        %v2698 = vpow.pop %v2697
        %v2699 = vmul.f32 %v2665, 1.442695
        %v2700 = vpow.pop %v2699
        %v2701 = vmul.f32 %v2666, 1.442695
        %v2702 = vpow.pop %v2701
        %v2703 = vmul.f32 %v2667, 1.442695
        %v2704 = vpow.pop %v2703
        %v2705 = vmul.f32 %v2668, 1.442695
        %v2706 = vpow.pop %v2705
        %v2707 = vmul.f32 %v2669, 1.442695
        %v2708 = vpow.pop %v2707
        %v2709 = vmul.f32 %v2670, 1.442695
        %v2710 = vpow.pop %v2709
        %v2711 = vmul.f32 %v2671, 1.442695
        %v2712 = vpow.pop %v2711
        %v2713 = vmul.f32 %v2672, 1.442695
        %v2714 = vpow.pop %v2713
        %v2715 = vmul.f32 %v2673, 1.442695
        %v2716 = vpow.pop %v2715
        %v2717 = vmul.f32 %v2674, 1.442695
        %v2718 = vpow.pop %v2717
        %v2719 = vmul.f32 %v2675, 1.442695
        %v2720 = vpow.pop %v2719
        %v2721 = vmul.f32 %v2676, 1.442695
        %v2722 = vpow.pop %v2721
        %v2723 = vmul.f32 %v2677, 1.442695
        %v2724 = vpow.pop %v2723
        %v2725 = vmul.f32 %v2678, 1.442695
        %v2726 = vpow.pop %v2725
        %v2727 = vsub.f32 %v2696, 1.0
        %v2728 = vsub.f32 %v2698, 1.0
        %v2729 = vsub.f32 %v2700, 1.0
        %v2730 = vsub.f32 %v2702, 1.0
        %v2731 = vsub.f32 %v2704, 1.0
        %v2732 = vsub.f32 %v2706, 1.0
        %v2733 = vsub.f32 %v2708, 1.0
        %v2734 = vsub.f32 %v2710, 1.0
        %v2735 = vsub.f32 %v2712, 1.0
        %v2736 = vsub.f32 %v2714, 1.0
        %v2737 = vsub.f32 %v2716, 1.0
        %v2738 = vsub.f32 %v2718, 1.0
        %v2739 = vsub.f32 %v2720, 1.0
        %v2740 = vsub.f32 %v2722, 1.0
        %v2741 = vsub.f32 %v2724, 1.0
        %v2742 = vsub.f32 %v2726, 1.0
        %v2743 = vsel %vm2679, %v2663, %v2727
        %v2744 = vsel %vm2680, %v2664, %v2728
        %v2745 = vsel %vm2681, %v2665, %v2729
        %v2746 = vsel %vm2682, %v2666, %v2730
        %v2747 = vsel %vm2683, %v2667, %v2731
        %v2748 = vsel %vm2684, %v2668, %v2732
        %v2749 = vsel %vm2685, %v2669, %v2733
        %v2750 = vsel %vm2686, %v2670, %v2734
        %v2751 = vsel %vm2687, %v2671, %v2735
        %v2752 = vsel %vm2688, %v2672, %v2736
        %v2753 = vsel %vm2689, %v2673, %v2737
        %v2754 = vsel %vm2690, %v2674, %v2738
        %v2755 = vsel %vm2691, %v2675, %v2739
        %v2756 = vsel %vm2692, %v2676, %v2740
        %v2757 = vsel %vm2693, %v2677, %v2741
        %v2758 = vsel %vm2694, %v2678, %v2742
        %v2759 = vpack.c.bf16 %v2744, %v2743
        %v2760 = vpack.c.bf16 %v2746, %v2745
        %v2761 = vpack.c.bf16 %v2748, %v2747
        %v2762 = vpack.c.bf16 %v2750, %v2749
        %v2763 = vpack.c.bf16 %v2752, %v2751
        %v2764 = vpack.c.bf16 %v2754, %v2753
        %v2765 = vpack.c.bf16 %v2756, %v2755
        %v2766 = vpack.c.bf16 %v2758, %v2757
        %v2767 = vld [vmem:[%s7] sm:$0xf]
        %v2768 = vld [vmem:[%s7 + $0x4] sm:$0xf]
        %v2769 = vld [vmem:[%s7 + $0x8] sm:$0xf]
        %v2770 = vld [vmem:[%s7 + $0xc] sm:$0xf]
        %v2771 = vld [vmem:[%s7 + $0x10] sm:$0xf]
        %v2772 = vld [vmem:[%s7 + $0x14] sm:$0xf]
        %v2773 = vld [vmem:[%s7 + $0x18] sm:$0xf]
        %v2774 = vld [vmem:[%s7 + $0x1c] sm:$0xf]
        %v2775 = vld [vmem:[%s7 + $0x20] sm:$0xf]
        %v2776 = vld [vmem:[%s7 + $0x24] sm:$0xf]
        %v2777 = vld [vmem:[%s7 + $0x28] sm:$0xf]
        %v2778 = vld [vmem:[%s7 + $0x2c] sm:$0xf]
        %v2779 = vld [vmem:[%s7 + $0x30] sm:$0xf]
        %v2780 = vld [vmem:[%s7 + $0x34] sm:$0xf]
        %v2781 = vld [vmem:[%s7 + $0x38] sm:$0xf]
        %v2782 = vld [vmem:[%s7 + $0x3c] sm:$0xf]
        %v2783 = vld [vmem:[%s8] sm:$0x1]
        %v2785 = vperm.slane %v2783, 0
        %v2803 = vunpack.c.l.b16 %v2767
        %v2804 = vunpack.c.l.b16 %v2768
        %v2805 = vunpack.c.l.b16 %v2769
        %v2806 = vunpack.c.l.b16 %v2770
        %v2807 = vunpack.c.l.b16 %v2771
        %v2808 = vunpack.c.l.b16 %v2772
        %v2809 = vunpack.c.l.b16 %v2773
        %v2810 = vunpack.c.l.b16 %v2774
        %v2811 = vunpack.c.l.b16 %v2775
        %v2812 = vunpack.c.l.b16 %v2776
        %v2813 = vunpack.c.l.b16 %v2777
        %v2814 = vunpack.c.l.b16 %v2778
        %v2815 = vunpack.c.l.b16 %v2779
        %v2816 = vunpack.c.l.b16 %v2780
        %v2817 = vunpack.c.l.b16 %v2781
        %v2818 = vunpack.c.l.b16 %v2782
        %v2819 = vpack.c.b16 %v2804, %v2803
        %v2820 = vpack.c.b16 %v2806, %v2805
        %v2821 = vpack.c.b16 %v2808, %v2807
        %v2822 = vpack.c.b16 %v2810, %v2809
        %v2823 = vpack.c.b16 %v2812, %v2811
        %v2824 = vpack.c.b16 %v2814, %v2813
        %v2825 = vpack.c.b16 %v2816, %v2815
        %v2826 = vpack.c.b16 %v2818, %v2817
        %2835 = vmatpush.bf16.msra.mxu0 %v2826
        %2836 = vmatpush.bf16.msra.mxu0 %v2825
        %2837 = vmatpush.bf16.msra.mxu0 %v2824
        %2838 = vmatpush.bf16.msra.mxu0 %v2823
        %2839 = vmatpush.bf16.msra.mxu0 %v2822
        %2840 = vmatpush.bf16.msra.mxu0 %v2821
        %2841 = vmatpush.bf16.msra.mxu0 %v2820
        %2842 = vmatpush.bf16.msra.mxu0 %v2819
        %2843 = vmatmul.bf16.gmra.mxu0 %v2759
        %v2844 = vpop.f32.mrf.mxu0
        %v2845 = vadd.f32 %v2785, %v2844
        %v2846 = vpop.f32.mrf.mxu0
        %v2847 = vadd.f32 %v2785, %v2846
        %2848 = vmatmul.bf16.gmra.mxu0 %v2760
        %v2849 = vpop.f32.mrf.mxu0
        %v2850 = vadd.f32 %v2785, %v2849
        %v2851 = vpop.f32.mrf.mxu0
        %v2852 = vadd.f32 %v2785, %v2851
        %2853 = vmatmul.bf16.gmra.mxu0 %v2761
        %v2854 = vpop.f32.mrf.mxu0
        %v2855 = vadd.f32 %v2785, %v2854
        %v2856 = vpop.f32.mrf.mxu0
        %v2857 = vadd.f32 %v2785, %v2856
        %2858 = vmatmul.bf16.gmra.mxu0 %v2762
        %v2859 = vpop.f32.mrf.mxu0
        %v2860 = vadd.f32 %v2785, %v2859
        %v2861 = vpop.f32.mrf.mxu0
        %v2862 = vadd.f32 %v2785, %v2861
        %2863 = vmatmul.bf16.gmra.mxu0 %v2763
        %v2864 = vpop.f32.mrf.mxu0
        %v2865 = vadd.f32 %v2785, %v2864
        %v2866 = vpop.f32.mrf.mxu0
        %v2867 = vadd.f32 %v2785, %v2866
        %2868 = vmatmul.bf16.gmra.mxu0 %v2764
        %v2869 = vpop.f32.mrf.mxu0
        %v2870 = vadd.f32 %v2785, %v2869
        %v2871 = vpop.f32.mrf.mxu0
        %v2872 = vadd.f32 %v2785, %v2871
        %2873 = vmatmul.bf16.gmra.mxu0 %v2765
        %v2874 = vpop.f32.mrf.mxu0
        %v2875 = vadd.f32 %v2785, %v2874
        %v2876 = vpop.f32.mrf.mxu0
        %v2877 = vadd.f32 %v2785, %v2876
        %2878 = vmatmul.bf16.gmra.mxu0 %v2766
        %v2879 = vpop.f32.mrf.mxu0
        %v2880 = vadd.f32 %v2785, %v2879
        %v2881 = vpop.f32.mrf.mxu0
        %v2882 = vadd.f32 %v2785, %v2881
        %2883 = vdwg.mxu0
        %2884 = vst [vmem:[%s432] sm:$0xff] %v2845
        %2885 = vst [vmem:[%s432 + $0x8] sm:$0xff] %v2847
        %2886 = vst [vmem:[%s432 + $0x10] sm:$0xff] %v2850
        %2887 = vst [vmem:[%s432 + $0x18] sm:$0xff] %v2852
        %2888 = vst [vmem:[%s432 + $0x20] sm:$0xff] %v2855
        %2889 = vst [vmem:[%s432 + $0x28] sm:$0xff] %v2857
        %2890 = vst [vmem:[%s432 + $0x30] sm:$0xff] %v2860
        %2891 = vst [vmem:[%s432 + $0x38] sm:$0xff] %v2862
        %2892 = vst [vmem:[%s432 + $0x40] sm:$0xff] %v2865
        %2893 = vst [vmem:[%s432 + $0x48] sm:$0xff] %v2867
        %2894 = vst [vmem:[%s432 + $0x50] sm:$0xff] %v2870
        %2895 = vst [vmem:[%s432 + $0x58] sm:$0xff] %v2872
        %2896 = vst [vmem:[%s432 + $0x60] sm:$0xff] %v2875
        %2897 = vst [vmem:[%s432 + $0x68] sm:$0xff] %v2877
        %2898 = vst [vmem:[%s432 + $0x70] sm:$0xff] %v2880
        %2899 = vst [vmem:[%s432 + $0x78] sm:$0xff] %v2882
      $region64: #{supergat_forward.3} parent=51 // pred_fallthru
        _
      %s2900 = smul.u32 16, %s32
      %p2901 = scmp.lt.s32.totalorder %s2900, 31
      %s2902 = scalar_select %p2901, %s2900, 31
      %s2903 = smul.addr %s2902, 8
      %s2904 = scalar_lea.vmem %s9, %s2903
      // Predicated region
      $region65: #{supergat_forward.3} parent=51 // pred_check
        %p2905 = pneg %p253
      $region66: #{supergat_forward.3} parent=51 // pred_check_branch
        %2907 = sbr.rel (%p2905) target = $region68
      $region67: #{supergat_forward.3} parent=51 // pred_region
        %s2908 = smul.u32 16, %s32
      $region68: #{supergat_forward.3} parent=51 // pred_fallthru
        _
    $region52: #{supergat_forward.3} parent=5 // pred_fallthru
      _
    %p2909 = scmp.le.s32.totalorder 2, %s23
    // Predicated region
    $region69: #{supergat_forward.3} parent=5 // pred_check
      %p2910 = pneg %p2909
    $region70: #{supergat_forward.3} parent=5 // pred_check_branch
      %2912 = sbr.rel (%p2910) target = $region72
    $region71: #{supergat_forward.3} parent=5 // pred_region
      %s2913 = ssub.s32 %s23, 2
      // Predicated region
      $region73: #{supergat_forward.3} parent=71 // pred_check
        %p2914 = pneg %p259
      $region74: #{supergat_forward.3} parent=71 // pred_check_branch
        %2916 = sbr.rel (%p2914) target = $region76
      $region75: #{supergat_forward.3} parent=71 // pred_region
        %s2917 = smul.u32 16, %s34
        %p2918 = scmp.lt.s32.totalorder %s2917, 31
        %s2919 = scalar_select %p2918, %s2917, 31
        %s2920 = smul.addr %s2919, 8
        %s2921 = scalar_lea.vmem %s9, %s2920
      $region76: #{supergat_forward.3} parent=71 // pred_fallthru
        _
    $region72: #{supergat_forward.3} parent=5 // pred_fallthru
      _
  $region6: #{supergat_forward.3} parent=0 // loop_footer
    %s27 = sadd.s32 1, %s23
  $region7: #{supergat_forward.3} parent=0 // loop_footer_branch
    %22 = sbr.rel target = $region3
  $region8: #{supergat_forward.3} parent=0 // loop_exit
    _

</llo_original>
